<compile_context>
chip_gen: v7x
topology: tpu7x:2x2x1
jax: 0.10.0
libtpu: 0.0.40
codegen_flags: <defaults>
</compile_context>

<pallas_src>
import functools

import jax
import jax.numpy as jnp
from jax import lax
from jax.experimental import pallas as pl
from jax.experimental.pallas import tpu as pltpu

EPS = 1e-5  # nn.BatchNorm2d default eps

# Matmul input dtype.  bf16 gives ~3x MXU throughput on v5e and native rates on
# v6e/v7x (accumulation stays f32 via preferred_element_type), but does not
# reliably meet the 1e-3 parity check against the f32 PyTorch reference, so f32
# stays the default.  Revisit once realistic channel counts make the MXU time
# visible.
MATMUL_DTYPE = jnp.float32

# Above this contraction size (K = 9*Cin) the single-concat im2col is replaced
# by nine accumulating K=Cin matmuls reading the padded scratch directly.
_IM2COL_CONCAT_MAX_K = 128


def _vmem_limit_bytes():
    """~85% of physical VMEM: ~54 MiB on v7x (64 MiB phys), ~109 MiB on
    v5e/v6e (128 MiB phys).  Leaves headroom for compiler-internal scratch."""
    try:
        cap = int(pltpu.get_tpu_info().vmem_capacity_bytes)
    except Exception:
        cap = 64 * 1024 * 1024
    return int(cap * 0.85)


def _row_mask(M, Wp, Wpad):
    """(1, M) f32: 1.0 on real pixels, 0.0 on the two padded-width columns."""
    lane = lax.broadcasted_iota(jnp.int32, (1, M), 1)
    return ((lane % Wpad) < Wp).astype(jnp.float32)


def _col_mask(M, Wp, Wpad):
    """(M, 1) f32 mask (sublane layout) for zeroing padded-width columns."""
    sub = lax.broadcasted_iota(jnp.int32, (M, 1), 0)
    return ((sub % Wpad) < Wp).astype(jnp.float32)


def _conv3x3(act, w_ref, o_ref, sum_ref, ssq_ref, pad_ref, Hp, Wp):
    """Shared conv core for one image tile.

    act : (M, Cin) activations in padded-width pixel-major layout,
          M = Hp*(Wp+2); the two extra columns per row must already be zero.
    Emits the pre-BatchNorm conv output plus masked per-channel
    sum / sum-of-squares partials for the batch-wide BN statistics.
    (No conv bias: it cancels exactly under training-mode BatchNorm.)
    """
    Wpad = Wp + 2
    M = Hp * Wpad
    Cin = act.shape[1]
    head = Wpad + 1                      # top halo row + first left-pad pixel

    # Zero only the halo rows; interior padding columns are already zero in act.
    pad_ref[0:head, :] = jnp.zeros((head, pad_ref.shape[1]), pad_ref.dtype)
    tail = pad_ref.shape[0] - (head + M)
    pad_ref[head + M:, :] = jnp.zeros((tail, pad_ref.shape[1]), pad_ref.dtype)
    pad_ref[head:head + M, :] = act.astype(pad_ref.dtype)

    # im2col: tap (ky, kx) of the output pixel at padded-flat index b lives at
    # padded-flat row b + ky*Wpad + kx, i.e. 9 contiguous sublane-offset slices.
    taps = [(ky, kx) for ky in range(3) for kx in range(3)]
    if 9 * Cin <= _IM2COL_CONCAT_MAX_K:
        # Tiny Cin: pack the taps on lanes, one MXU matmul with K = 9*Cin.
        lhs = jnp.concatenate(
            [pad_ref[pl.ds(ky * Wpad + kx, M), :] for ky, kx in taps], axis=-1)
        acc = jnp.dot(lhs, w_ref[...], preferred_element_type=jnp.float32)
    else:
        # Larger Cin: nine accumulating K=Cin matmuls straight off pad_ref
        # (no 9x-sized LHS temporary; the MRB accumulates in place on v7x).
        acc = None
        for t, (ky, kx) in enumerate(taps):
            part = jnp.dot(pad_ref[pl.ds(ky * Wpad + kx, M), :],
                           w_ref[pl.ds(t * Cin, Cin), :],
                           preferred_element_type=jnp.float32)
            acc = part if acc is None else acc + part

    o_ref[0] = acc.astype(o_ref.dtype)

    # BN partials restricted to valid pixels, computed on the (idle) MXU.
    row_mask = _row_mask(M, Wp, Wpad)
    sum_ref[0] = jnp.dot(row_mask, acc, preferred_element_type=jnp.float32)
    ssq_ref[0] = jnp.dot(row_mask, acc * acc,
                         preferred_element_type=jnp.float32)


def pool_conv1_kernel(xp_ref, w_ref, o_ref, sum_ref, ssq_ref, pad_ref,
                      *, Hp, Wp):
    """MaxPool2d(2) (2x2 window folded onto lanes) + conv1 (pre-BN).

    The wrapper's width zero-padding already makes the pooled activations zero
    in the two padded-width columns, so no mask multiply is needed here."""
    x = xp_ref[0]                                              # (M, 4*Cin)
    c = x.shape[1] // 4
    pooled = jnp.maximum(jnp.maximum(x[:, 0 * c:1 * c], x[:, 1 * c:2 * c]),
                         jnp.maximum(x[:, 2 * c:3 * c], x[:, 3 * c:4 * c]))
    _conv3x3(pooled, w_ref, o_ref, sum_ref, ssq_ref, pad_ref, Hp, Wp)


def bn_relu_conv2_kernel(y_ref, s_ref, t_ref, w_ref,
                         o_ref, sum_ref, ssq_ref, pad_ref, *, Hp, Wp):
    """BN1 (precomputed batch-wide scale/shift) + ReLU + conv2 (pre-BN)."""
    M = y_ref.shape[1]
    col_mask = _col_mask(M, Wp, Wp + 2)
    act = jnp.maximum(y_ref[0] * s_ref[...] + t_ref[...], 0.0) * col_mask
    _conv3x3(act, w_ref, o_ref, sum_ref, ssq_ref, pad_ref, Hp, Wp)


def bn_relu_kernel(y_ref, s_ref, t_ref, o_ref):
    """Final BN2 + ReLU (pointwise)."""
    o_ref[0] = jnp.maximum(y_ref[0] * s_ref[...] + t_ref[...],
                           0.0).astype(o_ref.dtype)


def _bn_scale_shift(sum_parts, ssq_parts, gamma, beta, n_valid):
    """Reduce per-tile partials -> batch-wide BN scale/shift (training-mode).

    One-pass variance (E[x^2] - mean^2) with a clamp; switch to a shifted
    formulation if parity at very large N*Hp*Wp ever matters."""
    mean = jnp.sum(sum_parts, axis=(0, 1)) / n_valid
    var = jnp.maximum(jnp.sum(ssq_parts, axis=(0, 1)) / n_valid - mean * mean,
                      0.0)
    scale = gamma * lax.rsqrt(var + EPS)
    shift = beta - mean * scale
    return scale, shift


def down_forward(x_nchw, params):
    (w1, b1, g1, be1, w2, b2, g2, be2) = params                # conv weights OIHW
    del b1, b2  # conv biases cancel exactly under training-mode BatchNorm
    N, Cin, H, W = x_nchw.shape
    Hp, Wp = H // 2, W // 2
    Wpad = Wp + 2
    M = Hp * Wpad
    Cmid, Cout = w1.shape[0], w2.shape[0]
    n_valid = N * Hp * Wp
    f32 = jnp.float32

    # ---- wrapper-side layout glue (plain XLA) ----
    # NCHW -> (N, Hp, Wp, 2*2*Cin): pool window folded onto the lane axis;
    # zero-pad the width by 2 (these become the conv's left/right zero columns);
    # flatten pixels so each image is a pixel-major 2-D slab.
    xt = jnp.transpose(x_nchw, (0, 2, 3, 1)).reshape(N, Hp, 2, Wp, 2, Cin)
    xp = jnp.transpose(xt, (0, 1, 3, 2, 4, 5)).reshape(N, Hp, Wp, 4 * Cin)
    xp = jnp.pad(xp, ((0, 0), (0, 0), (0, 2), (0, 0))).reshape(N, M, 4 * Cin)
    xp = xp.astype(f32)

    # OIHW -> (9*Cin, Cout) im2col weights, row index = (ky, kx, ci).
    w1f = jnp.transpose(w1, (2, 3, 1, 0)).reshape(9 * Cin, Cmid).astype(MATMUL_DTYPE)
    w2f = jnp.transpose(w2, (2, 3, 1, 0)).reshape(9 * Cmid, Cout).astype(MATMUL_DTYPE)

    row = lambda v: v.reshape(1, -1).astype(f32)

    def tile_spec(c):
        return pl.BlockSpec((1, M, c), lambda i: (i, 0, 0))

    def stat_spec(c):
        return pl.BlockSpec((1, 1, c), lambda i: (i, 0, 0))

    def resident_spec(shape):
        # Constant-index residents (weights, scale/shift) are tiny at these
        # channel counts; pl.Buffered(1) on them (a v7x VMEM saver for large
        # weights) is intentionally left off here.
        zeros = (0,) * len(shape)
        return pl.BlockSpec(shape, lambda i: zeros)

    cparams = pltpu.CompilerParams(
        dimension_semantics=("parallel",),        # batch tiles -> both TCs on v7x
        vmem_limit_bytes=_vmem_limit_bytes())

    pad_rows = M + 2 * (Wpad + 1)

    # ---- pass 1: maxpool + conv1 -> pre-BN output + BN1 stat partials ----
    y1_pre, s1, q1 = pl.pallas_call(
        functools.partial(pool_conv1_kernel, Hp=Hp, Wp=Wp),
        grid=(N,),
        in_specs=[tile_spec(4 * Cin), resident_spec((9 * Cin, Cmid))],
        out_specs=[tile_spec(Cmid), stat_spec(Cmid), stat_spec(Cmid)],
        out_shape=[jax.ShapeDtypeStruct((N, M, Cmid), f32),
                   jax.ShapeDtypeStruct((N, 1, Cmid), f32),
                   jax.ShapeDtypeStruct((N, 1, Cmid), f32)],
        scratch_shapes=[pltpu.VMEM((pad_rows, Cin), MATMUL_DTYPE)],
        compiler_params=cparams,
    )(xp, w1f)

    scale1, shift1 = _bn_scale_shift(s1, q1, g1, be1, n_valid)

    # ---- pass 2: BN1 + ReLU + conv2 -> pre-BN output + BN2 stat partials ----
    y2_pre, s2, q2 = pl.pallas_call(
        functools.partial(bn_relu_conv2_kernel, Hp=Hp, Wp=Wp),
        grid=(N,),
        in_specs=[tile_spec(Cmid), resident_spec((1, Cmid)),
                  resident_spec((1, Cmid)), resident_spec((9 * Cmid, Cout))],
        out_specs=[tile_spec(Cout), stat_spec(Cout), stat_spec(Cout)],
        out_shape=[jax.ShapeDtypeStruct((N, M, Cout), f32),
                   jax.ShapeDtypeStruct((N, 1, Cout), f32),
                   jax.ShapeDtypeStruct((N, 1, Cout), f32)],
        scratch_shapes=[pltpu.VMEM((pad_rows, Cmid), MATMUL_DTYPE)],
        compiler_params=cparams,
    )(y1_pre, row(scale1), row(shift1), w2f)

    scale2, shift2 = _bn_scale_shift(s2, q2, g2, be2, n_valid)

    # ---- pass 3: BN2 + ReLU ----
    y2 = pl.pallas_call(
        bn_relu_kernel,
        grid=(N,),
        in_specs=[tile_spec(Cout), resident_spec((1, Cout)),
                  resident_spec((1, Cout))],
        out_specs=tile_spec(Cout),
        out_shape=jax.ShapeDtypeStruct((N, M, Cout), f32),
        compiler_params=cparams,
    )(y2_pre, row(scale2), row(shift2))

    # drop the padded-width columns, NHWC -> NCHW
    out = y2.reshape(N, Hp, Wpad, Cout)[:, :, :Wp, :]
    return jnp.transpose(out, (0, 3, 1, 2))


def down_reference(x, params):
    """Pure-JAX reference mirroring PyTorch Down.forward (training-mode BN)."""
    (w1, b1, g1, be1, w2, b2, g2, be2) = params
    p = lax.reduce_window(x, -jnp.inf, lax.max,
                          (1, 1, 2, 2), (1, 1, 2, 2), 'VALID')

    def conv_bn_relu(x, w, b, g, be):
        y = lax.conv_general_dilated(x, w, (1, 1), ((1, 1), (1, 1)),
                                     dimension_numbers=('NCHW', 'OIHW', 'NCHW'))
        y = y + b[None, :, None, None]
        mean = jnp.mean(y, axis=(0, 2, 3), keepdims=True)
        var = jnp.mean((y - mean) ** 2, axis=(0, 2, 3), keepdims=True)
        y = (y - mean) * lax.rsqrt(var + EPS)
        y = y * g[None, :, None, None] + be[None, :, None, None]
        return jnp.maximum(y, 0.0)

    return conv_bn_relu(conv_bn_relu(p, w1, b1, g1, be1), w2, b2, g2, be2)


if __name__ == "__main__":
    N, Cin, H, W = 2, 4, 16, 16
    Cout = 8
    Cmid = Cout  # DoubleConv: mid_channels defaults to out_channels

    keys = jax.random.split(jax.random.PRNGKey(0), 9)
    x = jax.random.normal(keys[0], (N, Cin, H, W), dtype=jnp.float32)

    params = (
        0.2 * jax.random.normal(keys[1], (Cmid, Cin, 3, 3), dtype=jnp.float32),
        0.1 * jax.random.normal(keys[2], (Cmid,), dtype=jnp.float32),
        1.0 + 0.1 * jax.random.normal(keys[3], (Cmid,), dtype=jnp.float32),
        0.1 * jax.random.normal(keys[4], (Cmid,), dtype=jnp.float32),
        0.2 * jax.random.normal(keys[5], (Cout, Cmid, 3, 3), dtype=jnp.float32),
        0.1 * jax.random.normal(keys[6], (Cout,), dtype=jnp.float32),
        1.0 + 0.1 * jax.random.normal(keys[7], (Cout,), dtype=jnp.float32),
        0.1 * jax.random.normal(keys[8], (Cout,), dtype=jnp.float32),
    )

    out = jax.block_until_ready(jax.jit(down_forward)(x, params))
    ref = jax.block_until_ready(down_reference(x, params))

    assert out.shape == (N, Cout, H // 2, W // 2), out.shape
    assert jnp.allclose(out, ref, rtol=1e-3, atol=1e-3), (
        float(jnp.max(jnp.abs(out - ref))))

    print("KERNEL_OK")
</pallas_src>

<mosaic_0001>
module attributes {stable_mosaic.version = 11 : i64} {
  func.func @pool_conv1_kernel(%arg0: i32, %arg1: memref<1x80x16xf32, #tpu.memory_space<vmem>>, %arg2: memref<36x8xf32, #tpu.memory_space<vmem>>, %arg3: memref<1x80x8xf32, #tpu.memory_space<vmem>>, %arg4: memref<1x1x8xf32, #tpu.memory_space<vmem>>, %arg5: memref<1x1x8xf32, #tpu.memory_space<vmem>>, %arg6: memref<102x4xf32, #tpu.memory_space<vmem>>) attributes {dimension_semantics = [#tpu.dimension_semantics<parallel>], iteration_bounds = array<i64: 2>, scalar_prefetch = 0 : i64, scratch_operands = 1 : i64, tpu.core_type = #tpu.core_type<tc>, window_params = [{transform_indices = @transform_0, window_bounds = array<i64: 1, 80, 16>}, {pipeline_mode = #tpu.pipeline_mode<synchronous>, transform_indices = @transform_1, window_bounds = array<i64: 36, 8>}, {transform_indices = @transform_2, window_bounds = array<i64: 1, 80, 8>}, {transform_indices = @transform_3, window_bounds = array<i64: 1, 1, 8>}, {transform_indices = @transform_4, window_bounds = array<i64: 1, 1, 8>}]} {
    %c0 = arith.constant 0 : index
    %c0_0 = arith.constant 0 : index
    %c0_1 = arith.constant 0 : index
    %0 = vector.load %arg1[%c0, %c0_0, %c0_1] : memref<1x80x16xf32, #tpu.memory_space<vmem>>, vector<1x80x16xf32>
    %1 = vector.shape_cast %0 : vector<1x80x16xf32> to vector<80x16xf32>
    %2 = vector.extract_strided_slice %1 {offsets = [0, 0], sizes = [80, 4], strides = [1, 1]} : vector<80x16xf32> to vector<80x4xf32>
    %3 = vector.extract_strided_slice %1 {offsets = [0, 4], sizes = [80, 4], strides = [1, 1]} : vector<80x16xf32> to vector<80x4xf32>
    %4 = arith.maximumf %2, %3 : vector<80x4xf32>
    %5 = vector.extract_strided_slice %1 {offsets = [0, 8], sizes = [80, 4], strides = [1, 1]} : vector<80x16xf32> to vector<80x4xf32>
    %6 = vector.extract_strided_slice %1 {offsets = [0, 12], sizes = [80, 4], strides = [1, 1]} : vector<80x16xf32> to vector<80x4xf32>
    %7 = arith.maximumf %5, %6 : vector<80x4xf32>
    %8 = arith.maximumf %4, %7 : vector<80x4xf32>
    %cst = arith.constant 0.000000e+00 : f32
    %9 = vector.broadcast %cst : f32 to vector<11x4xf32>
    %c0_2 = arith.constant 0 : index
    %c0_3 = arith.constant 0 : index
    %10 = vector.load %arg6[%c0_2, %c0_3] : memref<102x4xf32, #tpu.memory_space<vmem>>, vector<11x4xf32>
    tpu.vector_store %arg6[%c0_2, %c0_3], %9 {strides = array<i32>} : memref<102x4xf32, #tpu.memory_space<vmem>>, vector<11x4xf32>,
    %cst_4 = arith.constant 0.000000e+00 : f32
    %11 = vector.broadcast %cst_4 : f32 to vector<11x4xf32>
    %c91 = arith.constant 91 : index
    %c0_5 = arith.constant 0 : index
    %12 = vector.load %arg6[%c91, %c0_5] : memref<102x4xf32, #tpu.memory_space<vmem>>, vector<11x4xf32>
    tpu.vector_store %arg6[%c91, %c0_5], %11 {strides = array<i32>} : memref<102x4xf32, #tpu.memory_space<vmem>>, vector<11x4xf32>,
    %c11 = arith.constant 11 : index
    %c0_6 = arith.constant 0 : index
    %13 = vector.load %arg6[%c11, %c0_6] : memref<102x4xf32, #tpu.memory_space<vmem>>, vector<80x4xf32>
    tpu.vector_store %arg6[%c11, %c0_6], %8 {strides = array<i32>} : memref<102x4xf32, #tpu.memory_space<vmem>>, vector<80x4xf32>,
    %c0_7 = arith.constant 0 : index
    %c0_8 = arith.constant 0 : index
    %14 = vector.load %arg6[%c0_7, %c0_8] : memref<102x4xf32, #tpu.memory_space<vmem>>, vector<80x4xf32>
    %c1 = arith.constant 1 : index
    %c0_9 = arith.constant 0 : index
    %15 = vector.load %arg6[%c1, %c0_9] : memref<102x4xf32, #tpu.memory_space<vmem>>, vector<80x4xf32>
    %c2 = arith.constant 2 : index
    %c0_10 = arith.constant 0 : index
    %16 = vector.load %arg6[%c2, %c0_10] : memref<102x4xf32, #tpu.memory_space<vmem>>, vector<80x4xf32>
    %c10 = arith.constant 10 : index
    %c0_11 = arith.constant 0 : index
    %17 = vector.load %arg6[%c10, %c0_11] : memref<102x4xf32, #tpu.memory_space<vmem>>, vector<80x4xf32>
    %c11_12 = arith.constant 11 : index
    %c0_13 = arith.constant 0 : index
    %18 = vector.load %arg6[%c11_12, %c0_13] : memref<102x4xf32, #tpu.memory_space<vmem>>, vector<80x4xf32>
    %c12 = arith.constant 12 : index
    %c0_14 = arith.constant 0 : index
    %19 = vector.load %arg6[%c12, %c0_14] : memref<102x4xf32, #tpu.memory_space<vmem>>, vector<80x4xf32>
    %c20 = arith.constant 20 : index
    %c0_15 = arith.constant 0 : index
    %20 = vector.load %arg6[%c20, %c0_15] : memref<102x4xf32, #tpu.memory_space<vmem>>, vector<80x4xf32>
    %c21 = arith.constant 21 : index
    %c0_16 = arith.constant 0 : index
    %21 = vector.load %arg6[%c21, %c0_16] : memref<102x4xf32, #tpu.memory_space<vmem>>, vector<80x4xf32>
    %c22 = arith.constant 22 : index
    %c0_17 = arith.constant 0 : index
    %22 = vector.load %arg6[%c22, %c0_17] : memref<102x4xf32, #tpu.memory_space<vmem>>, vector<80x4xf32>
    %23 = tpu.concatenate %14, %15, %16, %17, %18, %19, %20, %21, %22 in 1 : vector<80x4xf32>, vector<80x4xf32>, vector<80x4xf32>, vector<80x4xf32>, vector<80x4xf32>, vector<80x4xf32>, vector<80x4xf32>, vector<80x4xf32>, vector<80x4xf32> -> vector<80x36xf32>
    %c0_18 = arith.constant 0 : index
    %c0_19 = arith.constant 0 : index
    %24 = vector.load %arg2[%c0_18, %c0_19] : memref<36x8xf32, #tpu.memory_space<vmem>>, vector<36x8xf32>
    %cst_20 = arith.constant dense<0.000000e+00> : vector<80x8xf32>
    %25 = tpu.matmul %23, %24, %cst_20 {dimension_numbers = #tpu.dot_dimension_numbers<[1], [0], [0], [1], [0, 0, 1, 1], [], []>} : vector<80x36xf32>, vector<36x8xf32>, vector<80x8xf32> -> vector<80x8xf32>
    %c0_21 = arith.constant 0 : index
    %c0_22 = arith.constant 0 : index
    %c0_23 = arith.constant 0 : index
    %26 = vector.load %arg3[%c0_21, %c0_22, %c0_23] : memref<1x80x8xf32, #tpu.memory_space<vmem>>, vector<1x80x8xf32>
    %27 = vector.shape_cast %26 : vector<1x80x8xf32> to vector<80x8xf32>
    %28 = vector.shape_cast %25 : vector<80x8xf32> to vector<1x80x8xf32>
    tpu.vector_store %arg3[%c0_21, %c0_22, %c0_23], %28 {strides = array<i32>} : memref<1x80x8xf32, #tpu.memory_space<vmem>>, vector<1x80x8xf32>,
    %29 = tpu.iota {dimensions = array<i32: 1>} : vector<1x80xi32>
    %c10_i32 = arith.constant 10 : i32
    %c0_i32 = arith.constant 0 : i32
    %30 = arith.cmpi eq, %c10_i32, %c0_i32 : i32
    %c1_i32 = arith.constant 1 : i32
    %31 = arith.select %30, %c1_i32, %c10_i32 : i32
    %32 = vector.broadcast %31 : i32 to vector<1x80xi32>
    %33 = arith.remsi %29, %32 : vector<1x80xi32>
    %c0_i32_24 = arith.constant 0 : i32
    %34 = vector.broadcast %c0_i32_24 : i32 to vector<1x80xi32>
    %35 = arith.cmpi ne, %33, %34 : vector<1x80xi32>
    %c0_i32_25 = arith.constant 0 : i32
    %36 = vector.broadcast %c0_i32_25 : i32 to vector<1x80xi32>
    %37 = arith.cmpi slt, %33, %36 : vector<1x80xi32>
    %c0_i32_26 = arith.constant 0 : i32
    %38 = arith.cmpi slt, %31, %c0_i32_26 : i32
    %39 = vector.broadcast %38 : i1 to vector<1x80xi1>
    %40 = vector.broadcast %39 : vector<1x80xi1> to vector<1x80xi1>
    %41 = arith.xori %37, %40 : vector<1x80xi1>
    %42 = arith.andi %41, %35 : vector<1x80xi1>
    %43 = vector.broadcast %31 : i32 to vector<1x80xi32>
    %44 = arith.addi %33, %43 : vector<1x80xi32>
    %45 = arith.select %42, %44, %33 : vector<1x80xi1>, vector<1x80xi32>
    %c8_i32 = arith.constant 8 : i32
    %46 = vector.broadcast %c8_i32 : i32 to vector<1x80xi32>
    %47 = arith.cmpi slt, %45, %46 : vector<1x80xi32>
    %48 = arith.extui %47 : vector<1x80xi1> to vector<1x80xi32>
    %49 = arith.sitofp %48 : vector<1x80xi32> to vector<1x80xf32>
    %cst_27 = arith.constant dense<0.000000e+00> : vector<1x8xf32>
    %50 = tpu.matmul %49, %25, %cst_27 {dimension_numbers = #tpu.dot_dimension_numbers<[1], [0], [0], [1], [0, 0, 1, 1], [], []>} : vector<1x80xf32>, vector<80x8xf32>, vector<1x8xf32> -> vector<1x8xf32>
    %c0_28 = arith.constant 0 : index
    %c0_29 = arith.constant 0 : index
    %c0_30 = arith.constant 0 : index
    %51 = vector.load %arg4[%c0_28, %c0_29, %c0_30] : memref<1x1x8xf32, #tpu.memory_space<vmem>>, vector<1x1x8xf32>
    %52 = vector.shape_cast %51 : vector<1x1x8xf32> to vector<1x8xf32>
    %53 = vector.shape_cast %50 : vector<1x8xf32> to vector<1x1x8xf32>
    tpu.vector_store %arg4[%c0_28, %c0_29, %c0_30], %53 {strides = array<i32>} : memref<1x1x8xf32, #tpu.memory_space<vmem>>, vector<1x1x8xf32>,
    %54 = arith.mulf %25, %25 : vector<80x8xf32>
    %cst_31 = arith.constant dense<0.000000e+00> : vector<1x8xf32>
    %55 = tpu.matmul %49, %54, %cst_31 {dimension_numbers = #tpu.dot_dimension_numbers<[1], [0], [0], [1], [0, 0, 1, 1], [], []>} : vector<1x80xf32>, vector<80x8xf32>, vector<1x8xf32> -> vector<1x8xf32>
    %c0_32 = arith.constant 0 : index
    %c0_33 = arith.constant 0 : index
    %c0_34 = arith.constant 0 : index
    %56 = vector.load %arg5[%c0_32, %c0_33, %c0_34] : memref<1x1x8xf32, #tpu.memory_space<vmem>>, vector<1x1x8xf32>
    %57 = vector.shape_cast %56 : vector<1x1x8xf32> to vector<1x8xf32>
    %58 = vector.shape_cast %55 : vector<1x8xf32> to vector<1x1x8xf32>
    tpu.vector_store %arg5[%c0_32, %c0_33, %c0_34], %58 {strides = array<i32>} : memref<1x1x8xf32, #tpu.memory_space<vmem>>, vector<1x1x8xf32>,
    return
  }
  func.func @transform_0(%arg0: i32) -> (i32, i32, i32) {
    %c0_i32 = arith.constant 0 : i32
    %c0_i32_0 = arith.constant 0 : i32
    %c0_i32_1 = arith.constant 0 : i32
    return %arg0, %c0_i32, %c0_i32_0 : i32, i32, i32
  }
  func.func @transform_1(%arg0: i32) -> (i32, i32) {
    %c0_i32 = arith.constant 0 : i32
    %c0_i32_0 = arith.constant 0 : i32
    %c0_i32_1 = arith.constant 0 : i32
    return %c0_i32, %c0_i32_0 : i32, i32
  }
  func.func @transform_2(%arg0: i32) -> (i32, i32, i32) {
    %c0_i32 = arith.constant 0 : i32
    %c0_i32_0 = arith.constant 0 : i32
    %c0_i32_1 = arith.constant 0 : i32
    return %arg0, %c0_i32, %c0_i32_0 : i32, i32, i32
  }
  func.func @transform_3(%arg0: i32) -> (i32, i32, i32) {
    %c0_i32 = arith.constant 0 : i32
    %c0_i32_0 = arith.constant 0 : i32
    %c0_i32_1 = arith.constant 0 : i32
    return %arg0, %c0_i32, %c0_i32_0 : i32, i32, i32
  }
  func.func @transform_4(%arg0: i32) -> (i32, i32, i32) {
    %c0_i32 = arith.constant 0 : i32
    %c0_i32_0 = arith.constant 0 : i32
    %c0_i32_1 = arith.constant 0 : i32
    return %arg0, %c0_i32, %c0_i32_0 : i32, i32, i32
  }
}

module attributes {stable_mosaic.version = 11 : i64} {
  func.func @bn_relu_kernel(%arg0: i32, %arg1: memref<1x80x8xf32, #tpu.memory_space<vmem>>, %arg2: memref<1x8xf32, #tpu.memory_space<vmem>>, %arg3: memref<1x8xf32, #tpu.memory_space<vmem>>, %arg4: memref<1x80x8xf32, #tpu.memory_space<vmem>>) attributes {dimension_semantics = [#tpu.dimension_semantics<parallel>], iteration_bounds = array<i64: 2>, scalar_prefetch = 0 : i64, scratch_operands = 0 : i64, tpu.core_type = #tpu.core_type<tc>, window_params = [{transform_indices = @transform_0, window_bounds = array<i64: 1, 80, 8>}, {pipeline_mode = #tpu.pipeline_mode<synchronous>, transform_indices = @transform_1, window_bounds = array<i64: 1, 8>}, {pipeline_mode = #tpu.pipeline_mode<synchronous>, transform_indices = @transform_2, window_bounds = array<i64: 1, 8>}, {transform_indices = @transform_3, window_bounds = array<i64: 1, 80, 8>}]} {
    %c0 = arith.constant 0 : index
    %c0_0 = arith.constant 0 : index
    %c0_1 = arith.constant 0 : index
    %0 = vector.load %arg1[%c0, %c0_0, %c0_1] : memref<1x80x8xf32, #tpu.memory_space<vmem>>, vector<1x80x8xf32>
    %1 = vector.shape_cast %0 : vector<1x80x8xf32> to vector<80x8xf32>
    %c0_2 = arith.constant 0 : index
    %c0_3 = arith.constant 0 : index
    %2 = vector.load %arg2[%c0_2, %c0_3] : memref<1x8xf32, #tpu.memory_space<vmem>>, vector<1x8xf32>
    %3 = vector.broadcast %2 : vector<1x8xf32> to vector<80x8xf32>
    %4 = arith.mulf %1, %3 : vector<80x8xf32>
    %c0_4 = arith.constant 0 : index
    %c0_5 = arith.constant 0 : index
    %5 = vector.load %arg3[%c0_4, %c0_5] : memref<1x8xf32, #tpu.memory_space<vmem>>, vector<1x8xf32>
    %6 = vector.broadcast %5 : vector<1x8xf32> to vector<80x8xf32>
    %7 = arith.addf %4, %6 : vector<80x8xf32>
    %cst = arith.constant 0.000000e+00 : f32
    %8 = vector.broadcast %cst : f32 to vector<80x8xf32>
    %9 = arith.maximumf %7, %8 : vector<80x8xf32>
    %c0_6 = arith.constant 0 : index
    %c0_7 = arith.constant 0 : index
    %c0_8 = arith.constant 0 : index
    %10 = vector.load %arg4[%c0_6, %c0_7, %c0_8] : memref<1x80x8xf32, #tpu.memory_space<vmem>>, vector<1x80x8xf32>
    %11 = vector.shape_cast %10 : vector<1x80x8xf32> to vector<80x8xf32>
    %12 = vector.shape_cast %9 : vector<80x8xf32> to vector<1x80x8xf32>
    tpu.vector_store %arg4[%c0_6, %c0_7, %c0_8], %12 {strides = array<i32>} : memref<1x80x8xf32, #tpu.memory_space<vmem>>, vector<1x80x8xf32>,
    return
  }
  func.func @transform_0(%arg0: i32) -> (i32, i32, i32) {
    %c0_i32 = arith.constant 0 : i32
    %c0_i32_0 = arith.constant 0 : i32
    %c0_i32_1 = arith.constant 0 : i32
    return %arg0, %c0_i32, %c0_i32_0 : i32, i32, i32
  }
  func.func @transform_1(%arg0: i32) -> (i32, i32) {
    %c0_i32 = arith.constant 0 : i32
    %c0_i32_0 = arith.constant 0 : i32
    %c0_i32_1 = arith.constant 0 : i32
    return %c0_i32, %c0_i32_0 : i32, i32
  }
  func.func @transform_2(%arg0: i32) -> (i32, i32) {
    %c0_i32 = arith.constant 0 : i32
    %c0_i32_0 = arith.constant 0 : i32
    %c0_i32_1 = arith.constant 0 : i32
    return %c0_i32, %c0_i32_0 : i32, i32
  }
  func.func @transform_3(%arg0: i32) -> (i32, i32, i32) {
    %c0_i32 = arith.constant 0 : i32
    %c0_i32_0 = arith.constant 0 : i32
    %c0_i32_1 = arith.constant 0 : i32
    return %arg0, %c0_i32, %c0_i32_0 : i32, i32, i32
  }
}

module attributes {stable_mosaic.version = 11 : i64} {
  func.func @bn_relu_conv2_kernel(%arg0: i32, %arg1: memref<1x80x8xf32, #tpu.memory_space<vmem>>, %arg2: memref<1x8xf32, #tpu.memory_space<vmem>>, %arg3: memref<1x8xf32, #tpu.memory_space<vmem>>, %arg4: memref<72x8xf32, #tpu.memory_space<vmem>>, %arg5: memref<1x80x8xf32, #tpu.memory_space<vmem>>, %arg6: memref<1x1x8xf32, #tpu.memory_space<vmem>>, %arg7: memref<1x1x8xf32, #tpu.memory_space<vmem>>, %arg8: memref<102x8xf32, #tpu.memory_space<vmem>>) attributes {dimension_semantics = [#tpu.dimension_semantics<parallel>], iteration_bounds = array<i64: 2>, scalar_prefetch = 0 : i64, scratch_operands = 1 : i64, tpu.core_type = #tpu.core_type<tc>, window_params = [{transform_indices = @transform_0, window_bounds = array<i64: 1, 80, 8>}, {pipeline_mode = #tpu.pipeline_mode<synchronous>, transform_indices = @transform_1, window_bounds = array<i64: 1, 8>}, {pipeline_mode = #tpu.pipeline_mode<synchronous>, transform_indices = @transform_2, window_bounds = array<i64: 1, 8>}, {pipeline_mode = #tpu.pipeline_mode<synchronous>, transform_indices = @transform_3, window_bounds = array<i64: 72, 8>}, {transform_indices = @transform_4, window_bounds = array<i64: 1, 80, 8>}, {transform_indices = @transform_5, window_bounds = array<i64: 1, 1, 8>}, {transform_indices = @transform_6, window_bounds = array<i64: 1, 1, 8>}]} {
    %0 = tpu.iota {dimensions = array<i32: 0>} : vector<80x1xi32>
    %c10_i32 = arith.constant 10 : i32
    %c0_i32 = arith.constant 0 : i32
    %1 = arith.cmpi eq, %c10_i32, %c0_i32 : i32
    %c1_i32 = arith.constant 1 : i32
    %2 = arith.select %1, %c1_i32, %c10_i32 : i32
    %3 = vector.broadcast %2 : i32 to vector<80x1xi32>
    %4 = arith.remsi %0, %3 : vector<80x1xi32>
    %c0_i32_0 = arith.constant 0 : i32
    %5 = vector.broadcast %c0_i32_0 : i32 to vector<80x1xi32>
    %6 = arith.cmpi ne, %4, %5 : vector<80x1xi32>
    %c0_i32_1 = arith.constant 0 : i32
    %7 = vector.broadcast %c0_i32_1 : i32 to vector<80x1xi32>
    %8 = arith.cmpi slt, %4, %7 : vector<80x1xi32>
    %c0_i32_2 = arith.constant 0 : i32
    %9 = arith.cmpi slt, %2, %c0_i32_2 : i32
    %10 = vector.broadcast %9 : i1 to vector<80x1xi1>
    %11 = vector.broadcast %10 : vector<80x1xi1> to vector<80x1xi1>
    %12 = arith.xori %8, %11 : vector<80x1xi1>
    %13 = arith.andi %12, %6 : vector<80x1xi1>
    %14 = vector.broadcast %2 : i32 to vector<80x1xi32>
    %15 = arith.addi %4, %14 : vector<80x1xi32>
    %16 = arith.select %13, %15, %4 : vector<80x1xi1>, vector<80x1xi32>
    %c8_i32 = arith.constant 8 : i32
    %17 = vector.broadcast %c8_i32 : i32 to vector<80x1xi32>
    %18 = arith.cmpi slt, %16, %17 : vector<80x1xi32>
    %19 = arith.extui %18 : vector<80x1xi1> to vector<80x1xi32>
    %20 = arith.sitofp %19 : vector<80x1xi32> to vector<80x1xf32>
    %c0 = arith.constant 0 : index
    %c0_3 = arith.constant 0 : index
    %c0_4 = arith.constant 0 : index
    %21 = vector.load %arg1[%c0, %c0_3, %c0_4] : memref<1x80x8xf32, #tpu.memory_space<vmem>>, vector<1x80x8xf32>
    %22 = vector.shape_cast %21 : vector<1x80x8xf32> to vector<80x8xf32>
    %c0_5 = arith.constant 0 : index
    %c0_6 = arith.constant 0 : index
    %23 = vector.load %arg2[%c0_5, %c0_6] : memref<1x8xf32, #tpu.memory_space<vmem>>, vector<1x8xf32>
    %24 = vector.broadcast %23 : vector<1x8xf32> to vector<80x8xf32>
    %25 = arith.mulf %22, %24 : vector<80x8xf32>
    %c0_7 = arith.constant 0 : index
    %c0_8 = arith.constant 0 : index
    %26 = vector.load %arg3[%c0_7, %c0_8] : memref<1x8xf32, #tpu.memory_space<vmem>>, vector<1x8xf32>
    %27 = vector.broadcast %26 : vector<1x8xf32> to vector<80x8xf32>
    %28 = arith.addf %25, %27 : vector<80x8xf32>
    %cst = arith.constant 0.000000e+00 : f32
    %29 = vector.broadcast %cst : f32 to vector<80x8xf32>
    %30 = arith.maximumf %28, %29 : vector<80x8xf32>
    %31 = vector.broadcast %20 : vector<80x1xf32> to vector<80x8xf32>
    %32 = arith.mulf %30, %31 : vector<80x8xf32>
    %cst_9 = arith.constant 0.000000e+00 : f32
    %33 = vector.broadcast %cst_9 : f32 to vector<11x8xf32>
    %c0_10 = arith.constant 0 : index
    %c0_11 = arith.constant 0 : index
    %34 = vector.load %arg8[%c0_10, %c0_11] : memref<102x8xf32, #tpu.memory_space<vmem>>, vector<11x8xf32>
    tpu.vector_store %arg8[%c0_10, %c0_11], %33 {strides = array<i32>} : memref<102x8xf32, #tpu.memory_space<vmem>>, vector<11x8xf32>,
    %cst_12 = arith.constant 0.000000e+00 : f32
    %35 = vector.broadcast %cst_12 : f32 to vector<11x8xf32>
    %c91 = arith.constant 91 : index
    %c0_13 = arith.constant 0 : index
    %36 = vector.load %arg8[%c91, %c0_13] : memref<102x8xf32, #tpu.memory_space<vmem>>, vector<11x8xf32>
    tpu.vector_store %arg8[%c91, %c0_13], %35 {strides = array<i32>} : memref<102x8xf32, #tpu.memory_space<vmem>>, vector<11x8xf32>,
    %c11 = arith.constant 11 : index
    %c0_14 = arith.constant 0 : index
    %37 = vector.load %arg8[%c11, %c0_14] : memref<102x8xf32, #tpu.memory_space<vmem>>, vector<80x8xf32>
    tpu.vector_store %arg8[%c11, %c0_14], %32 {strides = array<i32>} : memref<102x8xf32, #tpu.memory_space<vmem>>, vector<80x8xf32>,
    %c0_15 = arith.constant 0 : index
    %c0_16 = arith.constant 0 : index
    %38 = vector.load %arg8[%c0_15, %c0_16] : memref<102x8xf32, #tpu.memory_space<vmem>>, vector<80x8xf32>
    %c1 = arith.constant 1 : index
    %c0_17 = arith.constant 0 : index
    %39 = vector.load %arg8[%c1, %c0_17] : memref<102x8xf32, #tpu.memory_space<vmem>>, vector<80x8xf32>
    %c2 = arith.constant 2 : index
    %c0_18 = arith.constant 0 : index
    %40 = vector.load %arg8[%c2, %c0_18] : memref<102x8xf32, #tpu.memory_space<vmem>>, vector<80x8xf32>
    %c10 = arith.constant 10 : index
    %c0_19 = arith.constant 0 : index
    %41 = vector.load %arg8[%c10, %c0_19] : memref<102x8xf32, #tpu.memory_space<vmem>>, vector<80x8xf32>
    %c11_20 = arith.constant 11 : index
    %c0_21 = arith.constant 0 : index
    %42 = vector.load %arg8[%c11_20, %c0_21] : memref<102x8xf32, #tpu.memory_space<vmem>>, vector<80x8xf32>
    %c12 = arith.constant 12 : index
    %c0_22 = arith.constant 0 : index
    %43 = vector.load %arg8[%c12, %c0_22] : memref<102x8xf32, #tpu.memory_space<vmem>>, vector<80x8xf32>
    %c20 = arith.constant 20 : index
    %c0_23 = arith.constant 0 : index
    %44 = vector.load %arg8[%c20, %c0_23] : memref<102x8xf32, #tpu.memory_space<vmem>>, vector<80x8xf32>
    %c21 = arith.constant 21 : index
    %c0_24 = arith.constant 0 : index
    %45 = vector.load %arg8[%c21, %c0_24] : memref<102x8xf32, #tpu.memory_space<vmem>>, vector<80x8xf32>
    %c22 = arith.constant 22 : index
    %c0_25 = arith.constant 0 : index
    %46 = vector.load %arg8[%c22, %c0_25] : memref<102x8xf32, #tpu.memory_space<vmem>>, vector<80x8xf32>
    %47 = tpu.concatenate %38, %39, %40, %41, %42, %43, %44, %45, %46 in 1 : vector<80x8xf32>, vector<80x8xf32>, vector<80x8xf32>, vector<80x8xf32>, vector<80x8xf32>, vector<80x8xf32>, vector<80x8xf32>, vector<80x8xf32>, vector<80x8xf32> -> vector<80x72xf32>
    %c0_26 = arith.constant 0 : index
    %c0_27 = arith.constant 0 : index
    %48 = vector.load %arg4[%c0_26, %c0_27] : memref<72x8xf32, #tpu.memory_space<vmem>>, vector<72x8xf32>
    %cst_28 = arith.constant dense<0.000000e+00> : vector<80x8xf32>
    %49 = tpu.matmul %47, %48, %cst_28 {dimension_numbers = #tpu.dot_dimension_numbers<[1], [0], [0], [1], [0, 0, 1, 1], [], []>} : vector<80x72xf32>, vector<72x8xf32>, vector<80x8xf32> -> vector<80x8xf32>
    %c0_29 = arith.constant 0 : index
    %c0_30 = arith.constant 0 : index
    %c0_31 = arith.constant 0 : index
    %50 = vector.load %arg5[%c0_29, %c0_30, %c0_31] : memref<1x80x8xf32, #tpu.memory_space<vmem>>, vector<1x80x8xf32>
    %51 = vector.shape_cast %50 : vector<1x80x8xf32> to vector<80x8xf32>
    %52 = vector.shape_cast %49 : vector<80x8xf32> to vector<1x80x8xf32>
    tpu.vector_store %arg5[%c0_29, %c0_30, %c0_31], %52 {strides = array<i32>} : memref<1x80x8xf32, #tpu.memory_space<vmem>>, vector<1x80x8xf32>,
    %53 = tpu.iota {dimensions = array<i32: 1>} : vector<1x80xi32>
    %c10_i32_32 = arith.constant 10 : i32
    %c0_i32_33 = arith.constant 0 : i32
    %54 = arith.cmpi eq, %c10_i32_32, %c0_i32_33 : i32
    %c1_i32_34 = arith.constant 1 : i32
    %55 = arith.select %54, %c1_i32_34, %c10_i32_32 : i32
    %56 = vector.broadcast %55 : i32 to vector<1x80xi32>
    %57 = arith.remsi %53, %56 : vector<1x80xi32>
    %c0_i32_35 = arith.constant 0 : i32
    %58 = vector.broadcast %c0_i32_35 : i32 to vector<1x80xi32>
    %59 = arith.cmpi ne, %57, %58 : vector<1x80xi32>
    %c0_i32_36 = arith.constant 0 : i32
    %60 = vector.broadcast %c0_i32_36 : i32 to vector<1x80xi32>
    %61 = arith.cmpi slt, %57, %60 : vector<1x80xi32>
    %c0_i32_37 = arith.constant 0 : i32
    %62 = arith.cmpi slt, %55, %c0_i32_37 : i32
    %63 = vector.broadcast %62 : i1 to vector<1x80xi1>
    %64 = vector.broadcast %63 : vector<1x80xi1> to vector<1x80xi1>
    %65 = arith.xori %61, %64 : vector<1x80xi1>
    %66 = arith.andi %65, %59 : vector<1x80xi1>
    %67 = vector.broadcast %55 : i32 to vector<1x80xi32>
    %68 = arith.addi %57, %67 : vector<1x80xi32>
    %69 = arith.select %66, %68, %57 : vector<1x80xi1>, vector<1x80xi32>
    %c8_i32_38 = arith.constant 8 : i32
    %70 = vector.broadcast %c8_i32_38 : i32 to vector<1x80xi32>
    %71 = arith.cmpi slt, %69, %70 : vector<1x80xi32>
    %72 = arith.extui %71 : vector<1x80xi1> to vector<1x80xi32>
    %73 = arith.sitofp %72 : vector<1x80xi32> to vector<1x80xf32>
    %cst_39 = arith.constant dense<0.000000e+00> : vector<1x8xf32>
    %74 = tpu.matmul %73, %49, %cst_39 {dimension_numbers = #tpu.dot_dimension_numbers<[1], [0], [0], [1], [0, 0, 1, 1], [], []>} : vector<1x80xf32>, vector<80x8xf32>, vector<1x8xf32> -> vector<1x8xf32>
    %c0_40 = arith.constant 0 : index
    %c0_41 = arith.constant 0 : index
    %c0_42 = arith.constant 0 : index
    %75 = vector.load %arg6[%c0_40, %c0_41, %c0_42] : memref<1x1x8xf32, #tpu.memory_space<vmem>>, vector<1x1x8xf32>
    %76 = vector.shape_cast %75 : vector<1x1x8xf32> to vector<1x8xf32>
    %77 = vector.shape_cast %74 : vector<1x8xf32> to vector<1x1x8xf32>
    tpu.vector_store %arg6[%c0_40, %c0_41, %c0_42], %77 {strides = array<i32>} : memref<1x1x8xf32, #tpu.memory_space<vmem>>, vector<1x1x8xf32>,
    %78 = arith.mulf %49, %49 : vector<80x8xf32>
    %cst_43 = arith.constant dense<0.000000e+00> : vector<1x8xf32>
    %79 = tpu.matmul %73, %78, %cst_43 {dimension_numbers = #tpu.dot_dimension_numbers<[1], [0], [0], [1], [0, 0, 1, 1], [], []>} : vector<1x80xf32>, vector<80x8xf32>, vector<1x8xf32> -> vector<1x8xf32>
    %c0_44 = arith.constant 0 : index
    %c0_45 = arith.constant 0 : index
    %c0_46 = arith.constant 0 : index
    %80 = vector.load %arg7[%c0_44, %c0_45, %c0_46] : memref<1x1x8xf32, #tpu.memory_space<vmem>>, vector<1x1x8xf32>
    %81 = vector.shape_cast %80 : vector<1x1x8xf32> to vector<1x8xf32>
    %82 = vector.shape_cast %79 : vector<1x8xf32> to vector<1x1x8xf32>
    tpu.vector_store %arg7[%c0_44, %c0_45, %c0_46], %82 {strides = array<i32>} : memref<1x1x8xf32, #tpu.memory_space<vmem>>, vector<1x1x8xf32>,
    return
  }
  func.func @transform_0(%arg0: i32) -> (i32, i32, i32) {
    %c0_i32 = arith.constant 0 : i32
    %c0_i32_0 = arith.constant 0 : i32
    %c0_i32_1 = arith.constant 0 : i32
    return %arg0, %c0_i32, %c0_i32_0 : i32, i32, i32
  }
  func.func @transform_1(%arg0: i32) -> (i32, i32) {
    %c0_i32 = arith.constant 0 : i32
    %c0_i32_0 = arith.constant 0 : i32
    %c0_i32_1 = arith.constant 0 : i32
    return %c0_i32, %c0_i32_0 : i32, i32
  }
  func.func @transform_2(%arg0: i32) -> (i32, i32) {
    %c0_i32 = arith.constant 0 : i32
    %c0_i32_0 = arith.constant 0 : i32
    %c0_i32_1 = arith.constant 0 : i32
    return %c0_i32, %c0_i32_0 : i32, i32
  }
  func.func @transform_3(%arg0: i32) -> (i32, i32) {
    %c0_i32 = arith.constant 0 : i32
    %c0_i32_0 = arith.constant 0 : i32
    %c0_i32_1 = arith.constant 0 : i32
    return %c0_i32, %c0_i32_0 : i32, i32
  }
  func.func @transform_4(%arg0: i32) -> (i32, i32, i32) {
    %c0_i32 = arith.constant 0 : i32
    %c0_i32_0 = arith.constant 0 : i32
    %c0_i32_1 = arith.constant 0 : i32
    return %arg0, %c0_i32, %c0_i32_0 : i32, i32, i32
  }
  func.func @transform_5(%arg0: i32) -> (i32, i32, i32) {
    %c0_i32 = arith.constant 0 : i32
    %c0_i32_0 = arith.constant 0 : i32
    %c0_i32_1 = arith.constant 0 : i32
    return %arg0, %c0_i32, %c0_i32_0 : i32, i32, i32
  }
  func.func @transform_6(%arg0: i32) -> (i32, i32, i32) {
    %c0_i32 = arith.constant 0 : i32
    %c0_i32_0 = arith.constant 0 : i32
    %c0_i32_1 = arith.constant 0 : i32
    return %arg0, %c0_i32, %c0_i32_0 : i32, i32, i32
  }
}

</mosaic_0001>

<llo_original>
// kernel: down_forward.5
$region0: #{down_forward.5}
  #allocation0 [shape = 'u32[]', space=smem, size = 0x4, offset = 0x4, fixed_abs, tag = 'smem constant byte address 0x4 - core index']
  #allocation1 [shape = 'u32[144,128]{1,0:T(1,128)}', space=vmem, size = 0x12000, scoped, tag = 'internal scratch']
  %s0 = inlined_call_operand.vmem [shape: f32[2,80,8], index: 0, kind: input, shape index: {}]
  %s1 = inlined_call_operand.vmem [shape: f32[1,8], index: 1, kind: input, shape index: {}]
  %s2 = inlined_call_operand.vmem [shape: f32[1,8], index: 2, kind: input, shape index: {}]
  %s3 = inlined_call_operand.vmem [shape: f32[2,80,8], index: 3, kind: output, shape index: {}]
  %s4 = sld [smem:[#allocation0]]
  $region45: #{down_forward.5} parent=0
    _
  %s6 = ssub.s32 1, %s4
  %s7 = scalar_select 0, %s6, %s4
  loop: start=0, step=1, limit=4
  $region2: #{down_forward.5} parent=0 // loop_pre_header
    _
  $region3: #{down_forward.5} parent=0 // loop_header
    %s9 = sphi 0, %s13
    %p10 = scmp.ge.s32.totalorder %s9, 4
    %s19 = sphi 0, %s21
    %s22 = sphi 0, %s19
    %s23 = sphi 0, %s22
    %s39 = sphi 0, %s23
    %s43 = sphi 0, %s43
    %s45 = sphi 0, %s43
    %s46 = sphi 0, %s45
    %s60 = sphi 0, %s46
    %s64 = sphi 0, %s64
    %s66 = sphi 0, %s64
    %s67 = sphi 0, %s66
    %s81 = sphi 0, %s67
    %s87 = sphi 0, %s89
    %s90 = sphi 0, %s87
    %s91 = sphi 0, %s90
    %s107 = sphi 0, %s91
  $region4: #{down_forward.5} parent=0 // loop_header_branch
    %12 = sbr.rel (%p10) target = $region8
  $region5: #{down_forward.5} parent=0 // loop_body
    %s14 = ssub.s32 %s9, 1
    %s15 = ssub.s32 %s9, 2
    %s16 = sadd.s32 %s9, 1
    %s17 = ssub.s32 %s9, %s16
    %p18 = scmp.eq.s32.totalorder %s17, 0
    %s20 = sadd.s32 %s19, 1
    %s21 = scalar_select %p18, %s19, %s20
    %p24 = pneg %p18
    %p25 = scmp.eq.s32.totalorder %s9, 1
    %p26 = por %p24, %p25
    %p27 = scmp.ne.s32.totalorder %s19, %s22
    %p28 = scmp.eq.s32.totalorder %s9, 0
    %p29 = por %p27, %p28
    %p30 = scmp.ne.s32.totalorder %s19, %s22
    %p31 = scmp.eq.s32.totalorder %s14, 1
    %p32 = por %p30, %p31
    %p33 = scmp.ne.s32.totalorder %s22, %s23
    %p34 = scmp.eq.s32.totalorder %s14, 0
    %p35 = por %p33, %p34
    %p36 = scmp.ne.s32.totalorder %s22, %s23
    %p37 = scmp.eq.s32.totalorder %s15, 1
    %p38 = por %p36, %p37
    %p40 = scmp.ne.s32.totalorder %s23, %s39
    %p41 = scmp.eq.s32.totalorder %s15, 0
    %p42 = por %p40, %p41
    %s44 = sadd.s32 %s43, 1
    %p47 = scmp.eq.s32.totalorder %s9, 1
    %p48 = scmp.ne.s32.totalorder %s43, %s45
    %p49 = scmp.eq.s32.totalorder %s9, 0
    %p50 = por %p48, %p49
    %p51 = scmp.ne.s32.totalorder %s43, %s45
    %p52 = scmp.eq.s32.totalorder %s14, 1
    %p53 = por %p51, %p52
    %p54 = scmp.ne.s32.totalorder %s45, %s46
    %p55 = scmp.eq.s32.totalorder %s14, 0
    %p56 = por %p54, %p55
    %p57 = scmp.ne.s32.totalorder %s45, %s46
    %p58 = scmp.eq.s32.totalorder %s15, 1
    %p59 = por %p57, %p58
    %p61 = scmp.ne.s32.totalorder %s46, %s60
    %p62 = scmp.eq.s32.totalorder %s15, 0
    %p63 = por %p61, %p62
    %s65 = sadd.s32 %s64, 1
    %p68 = scmp.eq.s32.totalorder %s9, 1
    %p69 = scmp.ne.s32.totalorder %s64, %s66
    %p70 = scmp.eq.s32.totalorder %s9, 0
    %p71 = por %p69, %p70
    %p72 = scmp.ne.s32.totalorder %s64, %s66
    %p73 = scmp.eq.s32.totalorder %s14, 1
    %p74 = por %p72, %p73
    %p75 = scmp.ne.s32.totalorder %s66, %s67
    %p76 = scmp.eq.s32.totalorder %s14, 0
    %p77 = por %p75, %p76
    %p78 = scmp.ne.s32.totalorder %s66, %s67
    %p79 = scmp.eq.s32.totalorder %s15, 1
    %p80 = por %p78, %p79
    %p82 = scmp.ne.s32.totalorder %s67, %s81
    %p83 = scmp.eq.s32.totalorder %s15, 0
    %p84 = por %p82, %p83
    %s85 = ssub.s32 %s9, %s16
    %p86 = scmp.eq.s32.totalorder %s85, 0
    %s88 = sadd.s32 %s87, 1
    %s89 = scalar_select %p86, %s87, %s88
    %p92 = pneg %p86
    %p93 = scmp.eq.s32.totalorder %s9, 1
    %p94 = por %p92, %p93
    %p95 = scmp.ne.s32.totalorder %s87, %s90
    %p96 = scmp.eq.s32.totalorder %s9, 0
    %p97 = por %p95, %p96
    %p98 = scmp.ne.s32.totalorder %s87, %s90
    %p99 = scmp.eq.s32.totalorder %s14, 1
    %p100 = por %p98, %p99
    %p101 = scmp.ne.s32.totalorder %s90, %s91
    %p102 = scmp.eq.s32.totalorder %s14, 0
    %p103 = por %p101, %p102
    %p104 = scmp.ne.s32.totalorder %s90, %s91
    %p105 = scmp.eq.s32.totalorder %s15, 1
    %p106 = por %p104, %p105
    %p108 = scmp.ne.s32.totalorder %s91, %s107
    %p109 = scmp.eq.s32.totalorder %s15, 0
    %p110 = por %p108, %p109
    %p111 = scmp.le.s32.totalorder 1, %s9
    %p112 = scmp.lt.s32.totalorder %s9, 3
    %p113 = pnand %p111, %p112
    %p114 = pneg %p113
    // Predicated region
    $region9: #{down_forward.5} parent=5 // pred_check
      _
    $region10: #{down_forward.5} parent=5 // pred_check_branch
      %116 = sbr.rel (%p113) target = $region12
    $region11: #{down_forward.5} parent=5 // pred_region
      %s117 = ssub.s32 %s9, 1
      // Predicated region
      $region13: #{down_forward.5} parent=11 // pred_check
        %p118 = pneg %p56
      $region14: #{down_forward.5} parent=11 // pred_check_branch
        %120 = sbr.rel (%p118) target = $region16
      $region15: #{down_forward.5} parent=11 // pred_region
        _
      $region16: #{down_forward.5} parent=11 // pred_fallthru
        _
      // Predicated region
      $region17: #{down_forward.5} parent=11 // pred_check
        %p121 = pneg %p77
      $region18: #{down_forward.5} parent=11 // pred_check_branch
        %123 = sbr.rel (%p121) target = $region20
      $region19: #{down_forward.5} parent=11 // pred_region
        _
      $region20: #{down_forward.5} parent=11 // pred_fallthru
        _
    $region12: #{down_forward.5} parent=5 // pred_fallthru
      _
    %p124 = scmp.lt.s32.totalorder %s9, 2
    // Predicated region
    $region21: #{down_forward.5} parent=5 // pred_check
      %p125 = pneg %p124
    $region22: #{down_forward.5} parent=5 // pred_check_branch
      %127 = sbr.rel (%p125) target = $region24
    $region23: #{down_forward.5} parent=5 // pred_region
      // Predicated region
      $region25: #{down_forward.5} parent=23 // pred_check
        %p128 = pneg %p29
      $region26: #{down_forward.5} parent=23 // pred_check_branch
        %130 = sbr.rel (%p128) target = $region28
      $region27: #{down_forward.5} parent=23 // pred_region
        %p131 = scmp.lt.s32.totalorder %s9, 1
        %s132 = scalar_select %p131, %s9, 1
        %s133 = smul.addr %s132, 10
        %s134 = smul.addr %s133, 8
        %s135 = scalar_lea.vmem %s0, %s134
      $region28: #{down_forward.5} parent=23 // pred_fallthru
        _
    $region24: #{down_forward.5} parent=5 // pred_fallthru
      _
    %p136 = scmp.le.s32.totalorder 1, %s9
    %p137 = scmp.lt.s32.totalorder %s9, 3
    %p138 = pnand %p136, %p137
    %p139 = pneg %p138
    // Predicated region
    $region29: #{down_forward.5} parent=5 // pred_check
      _
    $region30: #{down_forward.5} parent=5 // pred_check_branch
      %141 = sbr.rel (%p138) target = $region32
    $region31: #{down_forward.5} parent=5 // pred_region
      %s142 = ssub.s32 %s9, 1
      %p143 = scmp.lt.s32.totalorder %s14, 1
      %s144 = scalar_select %p143, %s14, 1
      %s145 = smul.addr %s144, 10
      %s146 = smul.addr %s145, 8
      %s147 = scalar_lea.vmem %s0, %s146
      %p148 = pneg %p35
      %p149 = pneg %p32
      %p150 = pneg %p56
      %p151 = pneg %p53
      %p152 = pneg %p77
      %p153 = pneg %p74
      %p154 = pneg %p103
      %p155 = pneg %p100
      %p156 = scmp.lt.s32.totalorder %s14, 1
      %s157 = scalar_select %p156, %s14, 1
      %s158 = smul.addr %s157, 10
      %s159 = smul.addr %s158, 8
      %s160 = scalar_lea.vmem %s3, %s159
      %p161 = scmp.lt.s32.totalorder %s14, 1
      %s162 = scalar_select %p161, %s14, 1
      %s163 = smul.addr %s162, 10
      %s164 = smul.addr %s163, 8
      %s165 = scalar_lea.vmem %s0, %s164
      %p166 = scmp.lt.s32.totalorder %s14, 1
      %s167 = scalar_select %p166, %s14, 1
      %s168 = smul.addr %s167, 10
      %s169 = smul.addr %s168, 8
      %s170 = scalar_lea.vmem %s3, %s169
      %v171 = vld [vmem:[%s165] sm:$0xff]
      %v172 = vld [vmem:[%s165 + $0x8] sm:$0xff]
      %v173 = vld [vmem:[%s165 + $0x10] sm:$0xff]
      %v174 = vld [vmem:[%s165 + $0x18] sm:$0xff]
      %v175 = vld [vmem:[%s165 + $0x20] sm:$0xff]
      %v176 = vld [vmem:[%s165 + $0x28] sm:$0xff]
      %v177 = vld [vmem:[%s165 + $0x30] sm:$0xff]
      %v178 = vld [vmem:[%s165 + $0x38] sm:$0xff]
      %v179 = vld [vmem:[%s165 + $0x40] sm:$0xff]
      %v180 = vld [vmem:[%s165 + $0x48] sm:$0xff]
      %v181 = vld [vmem:[%s1] sm:$0x1]
      %v183 = vlaneseq
      %v184 = vshrl.u32 %v183, 7
      %v185 = vsub.s32 0, %v184
      %v186 = vrot.slane %v181, %v185
      %v188 = vmul.f32 %v171, %v186
      %v189 = vmul.f32 %v172, %v186
      %v190 = vmul.f32 %v173, %v186
      %v191 = vmul.f32 %v174, %v186
      %v192 = vmul.f32 %v175, %v186
      %v193 = vmul.f32 %v176, %v186
      %v194 = vmul.f32 %v177, %v186
      %v195 = vmul.f32 %v178, %v186
      %v196 = vmul.f32 %v179, %v186
      %v197 = vmul.f32 %v180, %v186
      %v198 = vld [vmem:[%s2] sm:$0x1]
      %v200 = vlaneseq
      %v201 = vshrl.u32 %v200, 7
      %v202 = vsub.s32 0, %v201
      %v203 = vrot.slane %v198, %v202
      %v205 = vadd.f32 %v188, %v203
      %v206 = vadd.f32 %v189, %v203
      %v207 = vadd.f32 %v190, %v203
      %v208 = vadd.f32 %v191, %v203
      %v209 = vadd.f32 %v192, %v203
      %v210 = vadd.f32 %v193, %v203
      %v211 = vadd.f32 %v194, %v203
      %v212 = vadd.f32 %v195, %v203
      %v213 = vadd.f32 %v196, %v203
      %v214 = vadd.f32 %v197, %v203
      %v215 = vmax.f32 %v205, 0.0
      %v216 = vmax.f32 %v206, 0.0
      %v217 = vmax.f32 %v207, 0.0
      %v218 = vmax.f32 %v208, 0.0
      %v219 = vmax.f32 %v209, 0.0
      %v220 = vmax.f32 %v210, 0.0
      %v221 = vmax.f32 %v211, 0.0
      %v222 = vmax.f32 %v212, 0.0
      %v223 = vmax.f32 %v213, 0.0
      %v224 = vmax.f32 %v214, 0.0
      %vm225 = vcmask 64512
      %226 = vst.msk [vmem:[%s170] sm:$0xff] %vm225, %v215
      %227 = vst.msk [vmem:[%s170 + $0x8] sm:$0xff] %vm225, %v216
      %228 = vst.msk [vmem:[%s170 + $0x10] sm:$0xff] %vm225, %v217
      %229 = vst.msk [vmem:[%s170 + $0x18] sm:$0xff] %vm225, %v218
      %230 = vst.msk [vmem:[%s170 + $0x20] sm:$0xff] %vm225, %v219
      %231 = vst.msk [vmem:[%s170 + $0x28] sm:$0xff] %vm225, %v220
      %232 = vst.msk [vmem:[%s170 + $0x30] sm:$0xff] %vm225, %v221
      %233 = vst.msk [vmem:[%s170 + $0x38] sm:$0xff] %vm225, %v222
      %234 = vst.msk [vmem:[%s170 + $0x40] sm:$0xff] %vm225, %v223
      %235 = vst.msk [vmem:[%s170 + $0x48] sm:$0xff] %vm225, %v224
      %p236 = scmp.lt.s32.totalorder %s14, 1
      %s237 = scalar_select %p236, %s14, 1
      %s238 = smul.addr %s237, 10
      %s239 = smul.addr %s238, 8
      %s240 = scalar_lea.vmem %s3, %s239
      // Predicated region
      $region33: #{down_forward.5} parent=31 // pred_check
        %p241 = pneg %p100
      $region34: #{down_forward.5} parent=31 // pred_check_branch
        %243 = sbr.rel (%p241) target = $region36
      $region35: #{down_forward.5} parent=31 // pred_region
        _
      $region36: #{down_forward.5} parent=31 // pred_fallthru
        _
    $region32: #{down_forward.5} parent=5 // pred_fallthru
      _
    %p244 = scmp.le.s32.totalorder 2, %s9
    // Predicated region
    $region37: #{down_forward.5} parent=5 // pred_check
      %p245 = pneg %p244
    $region38: #{down_forward.5} parent=5 // pred_check_branch
      %247 = sbr.rel (%p245) target = $region40
    $region39: #{down_forward.5} parent=5 // pred_region
      %s248 = ssub.s32 %s9, 2
      // Predicated region
      $region41: #{down_forward.5} parent=39 // pred_check
        %p249 = pneg %p106
      $region42: #{down_forward.5} parent=39 // pred_check_branch
        %251 = sbr.rel (%p249) target = $region44
      $region43: #{down_forward.5} parent=39 // pred_region
        %p252 = scmp.lt.s32.totalorder %s15, 1
        %s253 = scalar_select %p252, %s15, 1
        %s254 = smul.addr %s253, 10
        %s255 = smul.addr %s254, 8
        %s256 = scalar_lea.vmem %s3, %s255
      $region44: #{down_forward.5} parent=39 // pred_fallthru
        _
    $region40: #{down_forward.5} parent=5 // pred_fallthru
      _
  $region6: #{down_forward.5} parent=0 // loop_footer
    %s13 = sadd.s32 1, %s9
  $region7: #{down_forward.5} parent=0 // loop_footer_branch
    %8 = sbr.rel target = $region3
  $region8: #{down_forward.5} parent=0 // loop_exit
    _

// kernel: down_forward.4
$region0: #{down_forward.4}
  #allocation0 [shape = 'u32[]', space=smem, size = 0x4, offset = 0x4, fixed_abs, tag = 'smem constant byte address 0x4 - core index']
  #allocation1 [shape = 'u32[144,128]{1,0:T(1,128)}', space=vmem, size = 0x12000, scoped, tag = 'internal scratch']
  #allocation2 [shape = 'f32[102,8]{1,0:T(8,128)}', space=vmem, size = 0xd000, scoped, tag = 'scratch operand']
  %s0 = inlined_call_operand.vmem [shape: f32[2,80,8], index: 0, kind: input, shape index: {}]
  %s1 = inlined_call_operand.vmem [shape: f32[1,8], index: 1, kind: input, shape index: {}]
  %s2 = inlined_call_operand.vmem [shape: f32[1,8], index: 2, kind: input, shape index: {}]
  %s3 = inlined_call_operand.vmem [shape: f32[72,8], index: 3, kind: input, shape index: {}]
  %s4 = inlined_call_operand.vmem [shape: f32[2,80,8], index: 4, kind: output, shape index: {0}]
  %s5 = inlined_call_operand.vmem [shape: f32[2,1,8], index: 5, kind: output, shape index: {1}]
  %s6 = inlined_call_operand.vmem [shape: f32[2,1,8], index: 6, kind: output, shape index: {2}]
  %7 = xla_tuple %s4, %s5, %s6
  %s8 = sld [smem:[#allocation0]]
  $region65: #{down_forward.4} parent=0
    _
  %s10 = ssub.s32 1, %s8
  %s11 = scalar_select 0, %s10, %s8
  loop: start=0, step=1, limit=4
  $region2: #{down_forward.4} parent=0 // loop_pre_header
    _
  $region3: #{down_forward.4} parent=0 // loop_header
    %s13 = sphi 0, %s17
    %p14 = scmp.ge.s32.totalorder %s13, 4
    %s23 = sphi 0, %s25
    %s26 = sphi 0, %s23
    %s27 = sphi 0, %s26
    %s43 = sphi 0, %s27
    %s47 = sphi 0, %s47
    %s49 = sphi 0, %s47
    %s50 = sphi 0, %s49
    %s64 = sphi 0, %s50
    %s68 = sphi 0, %s68
    %s70 = sphi 0, %s68
    %s71 = sphi 0, %s70
    %s85 = sphi 0, %s71
    %s89 = sphi 0, %s89
    %s91 = sphi 0, %s89
    %s92 = sphi 0, %s91
    %s106 = sphi 0, %s92
    %s112 = sphi 0, %s114
    %s115 = sphi 0, %s112
    %s116 = sphi 0, %s115
    %s132 = sphi 0, %s116
    %s138 = sphi 0, %s140
    %s141 = sphi 0, %s138
    %s142 = sphi 0, %s141
    %s158 = sphi 0, %s142
    %s164 = sphi 0, %s166
    %s167 = sphi 0, %s164
    %s168 = sphi 0, %s167
    %s184 = sphi 0, %s168
  $region4: #{down_forward.4} parent=0 // loop_header_branch
    %16 = sbr.rel (%p14) target = $region8
  $region5: #{down_forward.4} parent=0 // loop_body
    %s18 = ssub.s32 %s13, 1
    %s19 = ssub.s32 %s13, 2
    %s20 = sadd.s32 %s13, 1
    %s21 = ssub.s32 %s13, %s20
    %p22 = scmp.eq.s32.totalorder %s21, 0
    %s24 = sadd.s32 %s23, 1
    %s25 = scalar_select %p22, %s23, %s24
    %p28 = pneg %p22
    %p29 = scmp.eq.s32.totalorder %s13, 1
    %p30 = por %p28, %p29
    %p31 = scmp.ne.s32.totalorder %s23, %s26
    %p32 = scmp.eq.s32.totalorder %s13, 0
    %p33 = por %p31, %p32
    %p34 = scmp.ne.s32.totalorder %s23, %s26
    %p35 = scmp.eq.s32.totalorder %s18, 1
    %p36 = por %p34, %p35
    %p37 = scmp.ne.s32.totalorder %s26, %s27
    %p38 = scmp.eq.s32.totalorder %s18, 0
    %p39 = por %p37, %p38
    %p40 = scmp.ne.s32.totalorder %s26, %s27
    %p41 = scmp.eq.s32.totalorder %s19, 1
    %p42 = por %p40, %p41
    %p44 = scmp.ne.s32.totalorder %s27, %s43
    %p45 = scmp.eq.s32.totalorder %s19, 0
    %p46 = por %p44, %p45
    %s48 = sadd.s32 %s47, 1
    %p51 = scmp.eq.s32.totalorder %s13, 1
    %p52 = scmp.ne.s32.totalorder %s47, %s49
    %p53 = scmp.eq.s32.totalorder %s13, 0
    %p54 = por %p52, %p53
    %p55 = scmp.ne.s32.totalorder %s47, %s49
    %p56 = scmp.eq.s32.totalorder %s18, 1
    %p57 = por %p55, %p56
    %p58 = scmp.ne.s32.totalorder %s49, %s50
    %p59 = scmp.eq.s32.totalorder %s18, 0
    %p60 = por %p58, %p59
    %p61 = scmp.ne.s32.totalorder %s49, %s50
    %p62 = scmp.eq.s32.totalorder %s19, 1
    %p63 = por %p61, %p62
    %p65 = scmp.ne.s32.totalorder %s50, %s64
    %p66 = scmp.eq.s32.totalorder %s19, 0
    %p67 = por %p65, %p66
    %s69 = sadd.s32 %s68, 1
    %p72 = scmp.eq.s32.totalorder %s13, 1
    %p73 = scmp.ne.s32.totalorder %s68, %s70
    %p74 = scmp.eq.s32.totalorder %s13, 0
    %p75 = por %p73, %p74
    %p76 = scmp.ne.s32.totalorder %s68, %s70
    %p77 = scmp.eq.s32.totalorder %s18, 1
    %p78 = por %p76, %p77
    %p79 = scmp.ne.s32.totalorder %s70, %s71
    %p80 = scmp.eq.s32.totalorder %s18, 0
    %p81 = por %p79, %p80
    %p82 = scmp.ne.s32.totalorder %s70, %s71
    %p83 = scmp.eq.s32.totalorder %s19, 1
    %p84 = por %p82, %p83
    %p86 = scmp.ne.s32.totalorder %s71, %s85
    %p87 = scmp.eq.s32.totalorder %s19, 0
    %p88 = por %p86, %p87
    %s90 = sadd.s32 %s89, 1
    %p93 = scmp.eq.s32.totalorder %s13, 1
    %p94 = scmp.ne.s32.totalorder %s89, %s91
    %p95 = scmp.eq.s32.totalorder %s13, 0
    %p96 = por %p94, %p95
    %p97 = scmp.ne.s32.totalorder %s89, %s91
    %p98 = scmp.eq.s32.totalorder %s18, 1
    %p99 = por %p97, %p98
    %p100 = scmp.ne.s32.totalorder %s91, %s92
    %p101 = scmp.eq.s32.totalorder %s18, 0
    %p102 = por %p100, %p101
    %p103 = scmp.ne.s32.totalorder %s91, %s92
    %p104 = scmp.eq.s32.totalorder %s19, 1
    %p105 = por %p103, %p104
    %p107 = scmp.ne.s32.totalorder %s92, %s106
    %p108 = scmp.eq.s32.totalorder %s19, 0
    %p109 = por %p107, %p108
    %s110 = ssub.s32 %s13, %s20
    %p111 = scmp.eq.s32.totalorder %s110, 0
    %s113 = sadd.s32 %s112, 1
    %s114 = scalar_select %p111, %s112, %s113
    %p117 = pneg %p111
    %p118 = scmp.eq.s32.totalorder %s13, 1
    %p119 = por %p117, %p118
    %p120 = scmp.ne.s32.totalorder %s112, %s115
    %p121 = scmp.eq.s32.totalorder %s13, 0
    %p122 = por %p120, %p121
    %p123 = scmp.ne.s32.totalorder %s112, %s115
    %p124 = scmp.eq.s32.totalorder %s18, 1
    %p125 = por %p123, %p124
    %p126 = scmp.ne.s32.totalorder %s115, %s116
    %p127 = scmp.eq.s32.totalorder %s18, 0
    %p128 = por %p126, %p127
    %p129 = scmp.ne.s32.totalorder %s115, %s116
    %p130 = scmp.eq.s32.totalorder %s19, 1
    %p131 = por %p129, %p130
    %p133 = scmp.ne.s32.totalorder %s116, %s132
    %p134 = scmp.eq.s32.totalorder %s19, 0
    %p135 = por %p133, %p134
    %s136 = ssub.s32 %s13, %s20
    %p137 = scmp.eq.s32.totalorder %s136, 0
    %s139 = sadd.s32 %s138, 1
    %s140 = scalar_select %p137, %s138, %s139
    %p143 = pneg %p137
    %p144 = scmp.eq.s32.totalorder %s13, 1
    %p145 = por %p143, %p144
    %p146 = scmp.ne.s32.totalorder %s138, %s141
    %p147 = scmp.eq.s32.totalorder %s13, 0
    %p148 = por %p146, %p147
    %p149 = scmp.ne.s32.totalorder %s138, %s141
    %p150 = scmp.eq.s32.totalorder %s18, 1
    %p151 = por %p149, %p150
    %p152 = scmp.ne.s32.totalorder %s141, %s142
    %p153 = scmp.eq.s32.totalorder %s18, 0
    %p154 = por %p152, %p153
    %p155 = scmp.ne.s32.totalorder %s141, %s142
    %p156 = scmp.eq.s32.totalorder %s19, 1
    %p157 = por %p155, %p156
    %p159 = scmp.ne.s32.totalorder %s142, %s158
    %p160 = scmp.eq.s32.totalorder %s19, 0
    %p161 = por %p159, %p160
    %s162 = ssub.s32 %s13, %s20
    %p163 = scmp.eq.s32.totalorder %s162, 0
    %s165 = sadd.s32 %s164, 1
    %s166 = scalar_select %p163, %s164, %s165
    %p169 = pneg %p163
    %p170 = scmp.eq.s32.totalorder %s13, 1
    %p171 = por %p169, %p170
    %p172 = scmp.ne.s32.totalorder %s164, %s167
    %p173 = scmp.eq.s32.totalorder %s13, 0
    %p174 = por %p172, %p173
    %p175 = scmp.ne.s32.totalorder %s164, %s167
    %p176 = scmp.eq.s32.totalorder %s18, 1
    %p177 = por %p175, %p176
    %p178 = scmp.ne.s32.totalorder %s167, %s168
    %p179 = scmp.eq.s32.totalorder %s18, 0
    %p180 = por %p178, %p179
    %p181 = scmp.ne.s32.totalorder %s167, %s168
    %p182 = scmp.eq.s32.totalorder %s19, 1
    %p183 = por %p181, %p182
    %p185 = scmp.ne.s32.totalorder %s168, %s184
    %p186 = scmp.eq.s32.totalorder %s19, 0
    %p187 = por %p185, %p186
    %p188 = scmp.le.s32.totalorder 1, %s13
    %p189 = scmp.lt.s32.totalorder %s13, 3
    %p190 = pnand %p188, %p189
    %p191 = pneg %p190
    // Predicated region
    $region9: #{down_forward.4} parent=5 // pred_check
      _
    $region10: #{down_forward.4} parent=5 // pred_check_branch
      %193 = sbr.rel (%p190) target = $region12
    $region11: #{down_forward.4} parent=5 // pred_region
      %s194 = ssub.s32 %s13, 1
      // Predicated region
      $region13: #{down_forward.4} parent=11 // pred_check
        %p195 = pneg %p60
      $region14: #{down_forward.4} parent=11 // pred_check_branch
        %197 = sbr.rel (%p195) target = $region16
      $region15: #{down_forward.4} parent=11 // pred_region
        _
      $region16: #{down_forward.4} parent=11 // pred_fallthru
        _
      // Predicated region
      $region17: #{down_forward.4} parent=11 // pred_check
        %p198 = pneg %p81
      $region18: #{down_forward.4} parent=11 // pred_check_branch
        %200 = sbr.rel (%p198) target = $region20
      $region19: #{down_forward.4} parent=11 // pred_region
        _
      $region20: #{down_forward.4} parent=11 // pred_fallthru
        _
      // Predicated region
      $region21: #{down_forward.4} parent=11 // pred_check
        %p201 = pneg %p102
      $region22: #{down_forward.4} parent=11 // pred_check_branch
        %203 = sbr.rel (%p201) target = $region24
      $region23: #{down_forward.4} parent=11 // pred_region
        _
      $region24: #{down_forward.4} parent=11 // pred_fallthru
        _
    $region12: #{down_forward.4} parent=5 // pred_fallthru
      _
    %p204 = scmp.lt.s32.totalorder %s13, 2
    // Predicated region
    $region25: #{down_forward.4} parent=5 // pred_check
      %p205 = pneg %p204
    $region26: #{down_forward.4} parent=5 // pred_check_branch
      %207 = sbr.rel (%p205) target = $region28
    $region27: #{down_forward.4} parent=5 // pred_region
      // Predicated region
      $region29: #{down_forward.4} parent=27 // pred_check
        %p208 = pneg %p33
      $region30: #{down_forward.4} parent=27 // pred_check_branch
        %210 = sbr.rel (%p208) target = $region32
      $region31: #{down_forward.4} parent=27 // pred_region
        %p211 = scmp.lt.s32.totalorder %s13, 1
        %s212 = scalar_select %p211, %s13, 1
        %s213 = smul.addr %s212, 10
        %s214 = smul.addr %s213, 8
        %s215 = scalar_lea.vmem %s0, %s214
      $region32: #{down_forward.4} parent=27 // pred_fallthru
        _
    $region28: #{down_forward.4} parent=5 // pred_fallthru
      _
    %p216 = scmp.le.s32.totalorder 1, %s13
    %p217 = scmp.lt.s32.totalorder %s13, 3
    %p218 = pnand %p216, %p217
    %p219 = pneg %p218
    // Predicated region
    $region33: #{down_forward.4} parent=5 // pred_check
      _
    $region34: #{down_forward.4} parent=5 // pred_check_branch
      %221 = sbr.rel (%p218) target = $region36
    $region35: #{down_forward.4} parent=5 // pred_region
      %s222 = ssub.s32 %s13, 1
      %p223 = scmp.lt.s32.totalorder %s18, 1
      %s224 = scalar_select %p223, %s18, 1
      %s225 = smul.addr %s224, 10
      %s226 = smul.addr %s225, 8
      %s227 = scalar_lea.vmem %s0, %s226
      %p228 = pneg %p39
      %p229 = pneg %p36
      %p230 = pneg %p60
      %p231 = pneg %p57
      %p232 = pneg %p81
      %p233 = pneg %p78
      %p234 = pneg %p102
      %p235 = pneg %p99
      %p236 = pneg %p128
      %p237 = pneg %p125
      %p238 = scmp.lt.s32.totalorder %s18, 1
      %s239 = scalar_select %p238, %s18, 1
      %s240 = smul.addr %s239, 10
      %s241 = smul.addr %s240, 8
      %s242 = scalar_lea.vmem %s4, %s241
      %p243 = pneg %p154
      %p244 = pneg %p151
      %p245 = scmp.lt.s32.totalorder %s18, 1
      %s246 = scalar_select %p245, %s18, 1
      %s247 = scalar_lea.vmem %s5, %s246
      %p248 = pneg %p180
      %p249 = pneg %p177
      %p250 = scmp.lt.s32.totalorder %s18, 1
      %s251 = scalar_select %p250, %s18, 1
      %s252 = scalar_lea.vmem %s6, %s251
      %p253 = scmp.lt.s32.totalorder %s18, 1
      %s254 = scalar_select %p253, %s18, 1
      %s255 = smul.addr %s254, 10
      %s256 = smul.addr %s255, 8
      %s257 = scalar_lea.vmem %s0, %s256
      %p258 = scmp.lt.s32.totalorder %s18, 1
      %s259 = scalar_select %p258, %s18, 1
      %s260 = smul.addr %s259, 10
      %s261 = smul.addr %s260, 8
      %s262 = scalar_lea.vmem %s4, %s261
      %p263 = scmp.lt.s32.totalorder %s18, 1
      %s264 = scalar_select %p263, %s18, 1
      %s265 = scalar_lea.vmem %s5, %s264
      %p266 = scmp.lt.s32.totalorder %s18, 1
      %s267 = scalar_select %p266, %s18, 1
      %s268 = scalar_lea.vmem %s6, %s267
      %v269 = vlaneseq
      %v270 = vshrl.u32 %v269, 7
      %v271 = vadd.s32 %v270, 8
      %v272 = vadd.s32 %v270, 16
      %v273 = vadd.s32 %v270, 24
      %v274 = vadd.s32 %v270, 32
      %v275 = vadd.s32 %v270, 40
      %v276 = vadd.s32 %v270, 48
      %v277 = vadd.s32 %v270, 56
      %v278 = vadd.s32 %v270, 64
      %v279 = vadd.s32 %v270, 72
      %vm280 = vcmp.lt.s32.totalorder %v270, 0
      %v281 = vsub.s32 0, %v270
      %v282 = vsel %vm280, %v281, %v270
      %v283 = vmul.u32.u64.compose %v282, 3435973837
      %v284 = vextract.low.u32 %v283
      %v285 = vextract.high.u32 %v283
      %v286 = vshrl.u32 %v285, 3
      %v287 = vmul.u32 %v286, 10
      %v288 = vsub.s32 %v282, %v287
      %v289 = vsub.s32 0, %v288
      %v290 = vsel %vm280, %v289, %v288
      %vm291 = vcmp.lt.s32.totalorder %v271, 0
      %v292 = vsub.s32 0, %v271
      %v293 = vsel %vm291, %v292, %v271
      %v294 = vmul.u32.u64.compose %v293, 3435973837
      %v295 = vextract.low.u32 %v294
      %v296 = vextract.high.u32 %v294
      %v297 = vshrl.u32 %v296, 3
      %v298 = vmul.u32 %v297, 10
      %v299 = vsub.s32 %v293, %v298
      %v300 = vsub.s32 0, %v299
      %v301 = vsel %vm291, %v300, %v299
      %vm302 = vcmp.lt.s32.totalorder %v272, 0
      %v303 = vsub.s32 0, %v272
      %v304 = vsel %vm302, %v303, %v272
      %v305 = vmul.u32.u64.compose %v304, 3435973837
      %v306 = vextract.low.u32 %v305
      %v307 = vextract.high.u32 %v305
      %v308 = vshrl.u32 %v307, 3
      %v309 = vmul.u32 %v308, 10
      %v310 = vsub.s32 %v304, %v309
      %v311 = vsub.s32 0, %v310
      %v312 = vsel %vm302, %v311, %v310
      %vm313 = vcmp.lt.s32.totalorder %v273, 0
      %v314 = vsub.s32 0, %v273
      %v315 = vsel %vm313, %v314, %v273
      %v316 = vmul.u32.u64.compose %v315, 3435973837
      %v317 = vextract.low.u32 %v316
      %v318 = vextract.high.u32 %v316
      %v319 = vshrl.u32 %v318, 3
      %v320 = vmul.u32 %v319, 10
      %v321 = vsub.s32 %v315, %v320
      %v322 = vsub.s32 0, %v321
      %v323 = vsel %vm313, %v322, %v321
      %vm324 = vcmp.lt.s32.totalorder %v274, 0
      %v325 = vsub.s32 0, %v274
      %v326 = vsel %vm324, %v325, %v274
      %v327 = vmul.u32.u64.compose %v326, 3435973837
      %v328 = vextract.low.u32 %v327
      %v329 = vextract.high.u32 %v327
      %v330 = vshrl.u32 %v329, 3
      %v331 = vmul.u32 %v330, 10
      %v332 = vsub.s32 %v326, %v331
      %v333 = vsub.s32 0, %v332
      %v334 = vsel %vm324, %v333, %v332
      %vm335 = vcmp.lt.s32.totalorder %v275, 0
      %v336 = vsub.s32 0, %v275
      %v337 = vsel %vm335, %v336, %v275
      %v338 = vmul.u32.u64.compose %v337, 3435973837
      %v339 = vextract.low.u32 %v338
      %v340 = vextract.high.u32 %v338
      %v341 = vshrl.u32 %v340, 3
      %v342 = vmul.u32 %v341, 10
      %v343 = vsub.s32 %v337, %v342
      %v344 = vsub.s32 0, %v343
      %v345 = vsel %vm335, %v344, %v343
      %vm346 = vcmp.lt.s32.totalorder %v276, 0
      %v347 = vsub.s32 0, %v276
      %v348 = vsel %vm346, %v347, %v276
      %v349 = vmul.u32.u64.compose %v348, 3435973837
      %v350 = vextract.low.u32 %v349
      %v351 = vextract.high.u32 %v349
      %v352 = vshrl.u32 %v351, 3
      %v353 = vmul.u32 %v352, 10
      %v354 = vsub.s32 %v348, %v353
      %v355 = vsub.s32 0, %v354
      %v356 = vsel %vm346, %v355, %v354
      %vm357 = vcmp.lt.s32.totalorder %v277, 0
      %v358 = vsub.s32 0, %v277
      %v359 = vsel %vm357, %v358, %v277
      %v360 = vmul.u32.u64.compose %v359, 3435973837
      %v361 = vextract.low.u32 %v360
      %v362 = vextract.high.u32 %v360
      %v363 = vshrl.u32 %v362, 3
      %v364 = vmul.u32 %v363, 10
      %v365 = vsub.s32 %v359, %v364
      %v366 = vsub.s32 0, %v365
      %v367 = vsel %vm357, %v366, %v365
      %vm368 = vcmp.lt.s32.totalorder %v278, 0
      %v369 = vsub.s32 0, %v278
      %v370 = vsel %vm368, %v369, %v278
      %v371 = vmul.u32.u64.compose %v370, 3435973837
      %v372 = vextract.low.u32 %v371
      %v373 = vextract.high.u32 %v371
      %v374 = vshrl.u32 %v373, 3
      %v375 = vmul.u32 %v374, 10
      %v376 = vsub.s32 %v370, %v375
      %v377 = vsub.s32 0, %v376
      %v378 = vsel %vm368, %v377, %v376
      %vm379 = vcmp.lt.s32.totalorder %v279, 0
      %v380 = vsub.s32 0, %v279
      %v381 = vsel %vm379, %v380, %v279
      %v382 = vmul.u32.u64.compose %v381, 3435973837
      %v383 = vextract.low.u32 %v382
      %v384 = vextract.high.u32 %v382
      %v385 = vshrl.u32 %v384, 3
      %v386 = vmul.u32 %v385, 10
      %v387 = vsub.s32 %v381, %v386
      %v388 = vsub.s32 0, %v387
      %v389 = vsel %vm379, %v388, %v387
      %vm390 = vcmp.ne.s32.totalorder %v290, 0
      %vm391 = vcmp.ne.s32.totalorder %v301, 0
      %vm392 = vcmp.ne.s32.totalorder %v312, 0
      %vm393 = vcmp.ne.s32.totalorder %v323, 0
      %vm394 = vcmp.ne.s32.totalorder %v334, 0
      %vm395 = vcmp.ne.s32.totalorder %v345, 0
      %vm396 = vcmp.ne.s32.totalorder %v356, 0
      %vm397 = vcmp.ne.s32.totalorder %v367, 0
      %vm398 = vcmp.ne.s32.totalorder %v378, 0
      %vm399 = vcmp.ne.s32.totalorder %v389, 0
      %vm400 = vcmp.lt.s32.totalorder %v290, 0
      %vm401 = vcmp.lt.s32.totalorder %v301, 0
      %vm402 = vcmp.lt.s32.totalorder %v312, 0
      %vm403 = vcmp.lt.s32.totalorder %v323, 0
      %vm404 = vcmp.lt.s32.totalorder %v334, 0
      %vm405 = vcmp.lt.s32.totalorder %v345, 0
      %vm406 = vcmp.lt.s32.totalorder %v356, 0
      %vm407 = vcmp.lt.s32.totalorder %v367, 0
      %vm408 = vcmp.lt.s32.totalorder %v378, 0
      %vm409 = vcmp.lt.s32.totalorder %v389, 0
      %vm410 = vmand %vm400, %vm390
      %vm411 = vmand %vm401, %vm391
      %vm412 = vmand %vm402, %vm392
      %vm413 = vmand %vm403, %vm393
      %vm414 = vmand %vm404, %vm394
      %vm415 = vmand %vm405, %vm395
      %vm416 = vmand %vm406, %vm396
      %vm417 = vmand %vm407, %vm397
      %vm418 = vmand %vm408, %vm398
      %vm419 = vmand %vm409, %vm399
      %v420 = vadd.s32 %v290, 10
      %v421 = vadd.s32 %v301, 10
      %v422 = vadd.s32 %v312, 10
      %v423 = vadd.s32 %v323, 10
      %v424 = vadd.s32 %v334, 10
      %v425 = vadd.s32 %v345, 10
      %v426 = vadd.s32 %v356, 10
      %v427 = vadd.s32 %v367, 10
      %v428 = vadd.s32 %v378, 10
      %v429 = vadd.s32 %v389, 10
      %v430 = vsel %vm410, %v420, %v290
      %v431 = vsel %vm411, %v421, %v301
      %v432 = vsel %vm412, %v422, %v312
      %v433 = vsel %vm413, %v423, %v323
      %v434 = vsel %vm414, %v424, %v334
      %v435 = vsel %vm415, %v425, %v345
      %v436 = vsel %vm416, %v426, %v356
      %v437 = vsel %vm417, %v427, %v367
      %v438 = vsel %vm418, %v428, %v378
      %v439 = vsel %vm419, %v429, %v389
      %vm440 = vcmp.lt.s32.totalorder %v430, 8
      %vm441 = vcmp.lt.s32.totalorder %v431, 8
      %vm442 = vcmp.lt.s32.totalorder %v432, 8
      %vm443 = vcmp.lt.s32.totalorder %v433, 8
      %vm444 = vcmp.lt.s32.totalorder %v434, 8
      %vm445 = vcmp.lt.s32.totalorder %v435, 8
      %vm446 = vcmp.lt.s32.totalorder %v436, 8
      %vm447 = vcmp.lt.s32.totalorder %v437, 8
      %vm448 = vcmp.lt.s32.totalorder %v438, 8
      %vm449 = vcmp.lt.s32.totalorder %v439, 8
      %v450 = vsel %vm440, 1, 0
      %v451 = vsel %vm441, 1, 0
      %v452 = vsel %vm442, 1, 0
      %v453 = vsel %vm443, 1, 0
      %v454 = vsel %vm444, 1, 0
      %v455 = vsel %vm445, 1, 0
      %v456 = vsel %vm446, 1, 0
      %v457 = vsel %vm447, 1, 0
      %v458 = vsel %vm448, 1, 0
      %v459 = vsel %vm449, 1, 0
      %v460 = vcvt.s32.f32 %v450
      %v461 = vcvt.s32.f32 %v451
      %v462 = vcvt.s32.f32 %v452
      %v463 = vcvt.s32.f32 %v453
      %v464 = vcvt.s32.f32 %v454
      %v465 = vcvt.s32.f32 %v455
      %v466 = vcvt.s32.f32 %v456
      %v467 = vcvt.s32.f32 %v457
      %v468 = vcvt.s32.f32 %v458
      %v469 = vcvt.s32.f32 %v459
      %v470 = vld [vmem:[%s257] sm:$0xff]
      %v471 = vld [vmem:[%s257 + $0x8] sm:$0xff]
      %v472 = vld [vmem:[%s257 + $0x10] sm:$0xff]
      %v473 = vld [vmem:[%s257 + $0x18] sm:$0xff]
      %v474 = vld [vmem:[%s257 + $0x20] sm:$0xff]
      %v475 = vld [vmem:[%s257 + $0x28] sm:$0xff]
      %v476 = vld [vmem:[%s257 + $0x30] sm:$0xff]
      %v477 = vld [vmem:[%s257 + $0x38] sm:$0xff]
      %v478 = vld [vmem:[%s257 + $0x40] sm:$0xff]
      %v479 = vld [vmem:[%s257 + $0x48] sm:$0xff]
      %v480 = vld [vmem:[%s1] sm:$0x1]
      %v482 = vlaneseq
      %v483 = vshrl.u32 %v482, 7
      %v484 = vsub.s32 0, %v483
      %v485 = vrot.slane %v480, %v484
      %v487 = vmul.f32 %v470, %v485
      %v488 = vmul.f32 %v471, %v485
      %v489 = vmul.f32 %v472, %v485
      %v490 = vmul.f32 %v473, %v485
      %v491 = vmul.f32 %v474, %v485
      %v492 = vmul.f32 %v475, %v485
      %v493 = vmul.f32 %v476, %v485
      %v494 = vmul.f32 %v477, %v485
      %v495 = vmul.f32 %v478, %v485
      %v496 = vmul.f32 %v479, %v485
      %v497 = vld [vmem:[%s2] sm:$0x1]
      %v499 = vlaneseq
      %v500 = vshrl.u32 %v499, 7
      %v501 = vsub.s32 0, %v500
      %v502 = vrot.slane %v497, %v501
      %v504 = vadd.f32 %v487, %v502
      %v505 = vadd.f32 %v488, %v502
      %v506 = vadd.f32 %v489, %v502
      %v507 = vadd.f32 %v490, %v502
      %v508 = vadd.f32 %v491, %v502
      %v509 = vadd.f32 %v492, %v502
      %v510 = vadd.f32 %v493, %v502
      %v511 = vadd.f32 %v494, %v502
      %v512 = vadd.f32 %v495, %v502
      %v513 = vadd.f32 %v496, %v502
      %v514 = vmax.f32 %v504, 0.0
      %v515 = vmax.f32 %v505, 0.0
      %v516 = vmax.f32 %v506, 0.0
      %v517 = vmax.f32 %v507, 0.0
      %v518 = vmax.f32 %v508, 0.0
      %v519 = vmax.f32 %v509, 0.0
      %v520 = vmax.f32 %v510, 0.0
      %v521 = vmax.f32 %v511, 0.0
      %v522 = vmax.f32 %v512, 0.0
      %v523 = vmax.f32 %v513, 0.0
      %v524 = vmul.f32 %v514, %v460
      %v525 = vmul.f32 %v515, %v461
      %v526 = vmul.f32 %v516, %v462
      %v527 = vmul.f32 %v517, %v463
      %v528 = vmul.f32 %v518, %v464
      %v529 = vmul.f32 %v519, %v465
      %v530 = vmul.f32 %v520, %v466
      %v531 = vmul.f32 %v521, %v467
      %v532 = vmul.f32 %v522, %v468
      %v533 = vmul.f32 %v523, %v469
      %vm534 = vcmask 64512
      %535 = vst.msk [vmem:[#allocation2] sm:$0xff] %vm534, 0.0
      %vm536 = vcmask 59392
      %537 = vst.msk [vmem:[#allocation2 + $0x8] sm:$0x7] %vm536, 0.0
      %538 = vst.msk [vmem:[#allocation2 + $0x5b] sm:$0xff] %vm534, 0.0
      %539 = vst.msk [vmem:[#allocation2 + $0x63] sm:$0x7] %vm536, 0.0
      %540 = vst.msk [vmem:[#allocation2 + $0xb] sm:$0xff] %vm534, %v524
      %541 = vst.msk [vmem:[#allocation2 + $0x13] sm:$0xff] %vm534, %v525
      %542 = vst.msk [vmem:[#allocation2 + $0x1b] sm:$0xff] %vm534, %v526
      %543 = vst.msk [vmem:[#allocation2 + $0x23] sm:$0xff] %vm534, %v527
      %544 = vst.msk [vmem:[#allocation2 + $0x2b] sm:$0xff] %vm534, %v528
      %545 = vst.msk [vmem:[#allocation2 + $0x33] sm:$0xff] %vm534, %v529
      %546 = vst.msk [vmem:[#allocation2 + $0x3b] sm:$0xff] %vm534, %v530
      %547 = vst.msk [vmem:[#allocation2 + $0x43] sm:$0xff] %vm534, %v531
      %548 = vst.msk [vmem:[#allocation2 + $0x4b] sm:$0xff] %vm534, %v532
      %549 = vst.msk [vmem:[#allocation2 + $0x53] sm:$0xff] %vm534, %v533
      %v550 = vld [vmem:[#allocation2] sm:$0xff]
      %v551 = vld [vmem:[#allocation2 + $0x8] sm:$0xff]
      %v552 = vld [vmem:[#allocation2 + $0x10] sm:$0xff]
      %v553 = vld [vmem:[#allocation2 + $0x18] sm:$0xff]
      %v554 = vld [vmem:[#allocation2 + $0x20] sm:$0xff]
      %v555 = vld [vmem:[#allocation2 + $0x28] sm:$0xff]
      %v556 = vld [vmem:[#allocation2 + $0x30] sm:$0xff]
      %v557 = vld [vmem:[#allocation2 + $0x38] sm:$0xff]
      %v558 = vld [vmem:[#allocation2 + $0x40] sm:$0xff]
      %v559 = vld [vmem:[#allocation2 + $0x48] sm:$0xff]
      %v560 = vld [vmem:[#allocation2 + $0x1] sm:$0xff]
      %v561 = vld [vmem:[#allocation2 + $0x9] sm:$0xff]
      %v562 = vld [vmem:[#allocation2 + $0x11] sm:$0xff]
      %v563 = vld [vmem:[#allocation2 + $0x19] sm:$0xff]
      %v564 = vld [vmem:[#allocation2 + $0x21] sm:$0xff]
      %v565 = vld [vmem:[#allocation2 + $0x29] sm:$0xff]
      %v566 = vld [vmem:[#allocation2 + $0x31] sm:$0xff]
      %v567 = vld [vmem:[#allocation2 + $0x39] sm:$0xff]
      %v568 = vld [vmem:[#allocation2 + $0x41] sm:$0xff]
      %v569 = vld [vmem:[#allocation2 + $0x49] sm:$0xff]
      %v570 = vld [vmem:[#allocation2 + $0x2] sm:$0xff]
      %v571 = vld [vmem:[#allocation2 + $0xa] sm:$0xff]
      %v572 = vld [vmem:[#allocation2 + $0x12] sm:$0xff]
      %v573 = vld [vmem:[#allocation2 + $0x1a] sm:$0xff]
      %v574 = vld [vmem:[#allocation2 + $0x22] sm:$0xff]
      %v575 = vld [vmem:[#allocation2 + $0x2a] sm:$0xff]
      %v576 = vld [vmem:[#allocation2 + $0x32] sm:$0xff]
      %v577 = vld [vmem:[#allocation2 + $0x3a] sm:$0xff]
      %v578 = vld [vmem:[#allocation2 + $0x42] sm:$0xff]
      %v579 = vld [vmem:[#allocation2 + $0x4a] sm:$0xff]
      %v580 = vld [vmem:[#allocation2 + $0x52] sm:$0xff]
      %v581 = vld [vmem:[#allocation2 + $0xb] sm:$0xff]
      %v582 = vld [vmem:[#allocation2 + $0x13] sm:$0xff]
      %v583 = vld [vmem:[#allocation2 + $0x1b] sm:$0xff]
      %v584 = vld [vmem:[#allocation2 + $0x23] sm:$0xff]
      %v585 = vld [vmem:[#allocation2 + $0x2b] sm:$0xff]
      %v586 = vld [vmem:[#allocation2 + $0x33] sm:$0xff]
      %v587 = vld [vmem:[#allocation2 + $0x3b] sm:$0xff]
      %v588 = vld [vmem:[#allocation2 + $0x43] sm:$0xff]
      %v589 = vld [vmem:[#allocation2 + $0x4b] sm:$0xff]
      %v590 = vld [vmem:[#allocation2 + $0x53] sm:$0xff]
      %v591 = vld [vmem:[#allocation2 + $0xc] sm:$0xff]
      %v592 = vld [vmem:[#allocation2 + $0x14] sm:$0xff]
      %v593 = vld [vmem:[#allocation2 + $0x1c] sm:$0xff]
      %v594 = vld [vmem:[#allocation2 + $0x24] sm:$0xff]
      %v595 = vld [vmem:[#allocation2 + $0x2c] sm:$0xff]
      %v596 = vld [vmem:[#allocation2 + $0x34] sm:$0xff]
      %v597 = vld [vmem:[#allocation2 + $0x3c] sm:$0xff]
      %v598 = vld [vmem:[#allocation2 + $0x44] sm:$0xff]
      %v599 = vld [vmem:[#allocation2 + $0x4c] sm:$0xff]
      %v600 = vld [vmem:[#allocation2 + $0x54] sm:$0xff]
      %v601 = vld [vmem:[#allocation2 + $0x5c] sm:$0xff]
      %v602 = vld [vmem:[#allocation2 + $0x15] sm:$0xff]
      %v603 = vld [vmem:[#allocation2 + $0x1d] sm:$0xff]
      %v604 = vld [vmem:[#allocation2 + $0x25] sm:$0xff]
      %v605 = vld [vmem:[#allocation2 + $0x2d] sm:$0xff]
      %v606 = vld [vmem:[#allocation2 + $0x35] sm:$0xff]
      %v607 = vld [vmem:[#allocation2 + $0x3d] sm:$0xff]
      %v608 = vld [vmem:[#allocation2 + $0x45] sm:$0xff]
      %v609 = vld [vmem:[#allocation2 + $0x4d] sm:$0xff]
      %v610 = vld [vmem:[#allocation2 + $0x55] sm:$0xff]
      %v611 = vld [vmem:[#allocation2 + $0x5d] sm:$0xff]
      %v612 = vld [vmem:[#allocation2 + $0x16] sm:$0xff]
      %v613 = vld [vmem:[#allocation2 + $0x1e] sm:$0xff]
      %v614 = vld [vmem:[#allocation2 + $0x26] sm:$0xff]
      %v615 = vld [vmem:[#allocation2 + $0x2e] sm:$0xff]
      %v616 = vld [vmem:[#allocation2 + $0x36] sm:$0xff]
      %v617 = vld [vmem:[#allocation2 + $0x3e] sm:$0xff]
      %v618 = vld [vmem:[#allocation2 + $0x46] sm:$0xff]
      %v619 = vld [vmem:[#allocation2 + $0x4e] sm:$0xff]
      %v620 = vld [vmem:[#allocation2 + $0x56] sm:$0xff]
      %v621 = vld [vmem:[#allocation2 + $0x5e] sm:$0xff]
      %632 = vrot.lane.b32.xlu0 %v560, 8
      %v633 = vpop.permute.xlu0 %632
      %634 = vrot.lane.b32.xlu0 %v561, 8
      %v635 = vpop.permute.xlu0 %634
      %636 = vrot.lane.b32.xlu0 %v562, 8
      %v637 = vpop.permute.xlu0 %636
      %638 = vrot.lane.b32.xlu0 %v563, 8
      %v639 = vpop.permute.xlu0 %638
      %640 = vrot.lane.b32.xlu0 %v564, 8
      %v641 = vpop.permute.xlu0 %640
      %642 = vrot.lane.b32.xlu0 %v565, 8
      %v643 = vpop.permute.xlu0 %642
      %644 = vrot.lane.b32.xlu0 %v566, 8
      %v645 = vpop.permute.xlu0 %644
      %646 = vrot.lane.b32.xlu0 %v567, 8
      %v647 = vpop.permute.xlu0 %646
      %648 = vrot.lane.b32.xlu0 %v568, 8
      %v649 = vpop.permute.xlu0 %648
      %650 = vrot.lane.b32.xlu0 %v569, 8
      %v651 = vpop.permute.xlu0 %650
      %672 = vrot.lane.b32.xlu0 %v570, 16
      %v673 = vpop.permute.xlu0 %672
      %674 = vrot.lane.b32.xlu0 %v571, 16
      %v675 = vpop.permute.xlu0 %674
      %676 = vrot.lane.b32.xlu0 %v572, 16
      %v677 = vpop.permute.xlu0 %676
      %678 = vrot.lane.b32.xlu0 %v573, 16
      %v679 = vpop.permute.xlu0 %678
      %680 = vrot.lane.b32.xlu0 %v574, 16
      %v681 = vpop.permute.xlu0 %680
      %682 = vrot.lane.b32.xlu0 %v575, 16
      %v683 = vpop.permute.xlu0 %682
      %684 = vrot.lane.b32.xlu0 %v576, 16
      %v685 = vpop.permute.xlu0 %684
      %686 = vrot.lane.b32.xlu0 %v577, 16
      %v687 = vpop.permute.xlu0 %686
      %688 = vrot.lane.b32.xlu0 %v578, 16
      %v689 = vpop.permute.xlu0 %688
      %690 = vrot.lane.b32.xlu0 %v579, 16
      %v691 = vpop.permute.xlu0 %690
      %703 = vrot.lane.b32.xlu0 %v571, 24
      %v704 = vpop.permute.xlu0 %703
      %705 = vrot.lane.b32.xlu0 %v572, 24
      %v706 = vpop.permute.xlu0 %705
      %707 = vrot.lane.b32.xlu0 %v573, 24
      %v708 = vpop.permute.xlu0 %707
      %709 = vrot.lane.b32.xlu0 %v574, 24
      %v710 = vpop.permute.xlu0 %709
      %711 = vrot.lane.b32.xlu0 %v575, 24
      %v712 = vpop.permute.xlu0 %711
      %713 = vrot.lane.b32.xlu0 %v576, 24
      %v714 = vpop.permute.xlu0 %713
      %715 = vrot.lane.b32.xlu0 %v577, 24
      %v716 = vpop.permute.xlu0 %715
      %717 = vrot.lane.b32.xlu0 %v578, 24
      %v718 = vpop.permute.xlu0 %717
      %719 = vrot.lane.b32.xlu0 %v579, 24
      %v720 = vpop.permute.xlu0 %719
      %721 = vrot.lane.b32.xlu0 %v580, 24
      %v722 = vpop.permute.xlu0 %721
      %743 = vrot.lane.b32.xlu0 %v581, 32
      %v744 = vpop.permute.xlu0 %743
      %745 = vrot.lane.b32.xlu0 %v582, 32
      %v746 = vpop.permute.xlu0 %745
      %747 = vrot.lane.b32.xlu0 %v583, 32
      %v748 = vpop.permute.xlu0 %747
      %749 = vrot.lane.b32.xlu0 %v584, 32
      %v750 = vpop.permute.xlu0 %749
      %751 = vrot.lane.b32.xlu0 %v585, 32
      %v752 = vpop.permute.xlu0 %751
      %753 = vrot.lane.b32.xlu0 %v586, 32
      %v754 = vpop.permute.xlu0 %753
      %755 = vrot.lane.b32.xlu0 %v587, 32
      %v756 = vpop.permute.xlu0 %755
      %757 = vrot.lane.b32.xlu0 %v588, 32
      %v758 = vpop.permute.xlu0 %757
      %759 = vrot.lane.b32.xlu0 %v589, 32
      %v760 = vpop.permute.xlu0 %759
      %761 = vrot.lane.b32.xlu0 %v590, 32
      %v762 = vpop.permute.xlu0 %761
      %783 = vrot.lane.b32.xlu0 %v591, 40
      %v784 = vpop.permute.xlu0 %783
      %785 = vrot.lane.b32.xlu0 %v592, 40
      %v786 = vpop.permute.xlu0 %785
      %787 = vrot.lane.b32.xlu0 %v593, 40
      %v788 = vpop.permute.xlu0 %787
      %789 = vrot.lane.b32.xlu0 %v594, 40
      %v790 = vpop.permute.xlu0 %789
      %791 = vrot.lane.b32.xlu0 %v595, 40
      %v792 = vpop.permute.xlu0 %791
      %793 = vrot.lane.b32.xlu0 %v596, 40
      %v794 = vpop.permute.xlu0 %793
      %795 = vrot.lane.b32.xlu0 %v597, 40
      %v796 = vpop.permute.xlu0 %795
      %797 = vrot.lane.b32.xlu0 %v598, 40
      %v798 = vpop.permute.xlu0 %797
      %799 = vrot.lane.b32.xlu0 %v599, 40
      %v800 = vpop.permute.xlu0 %799
      %801 = vrot.lane.b32.xlu0 %v600, 40
      %v802 = vpop.permute.xlu0 %801
      %814 = vrot.lane.b32.xlu0 %v592, 48
      %v815 = vpop.permute.xlu0 %814
      %816 = vrot.lane.b32.xlu0 %v593, 48
      %v817 = vpop.permute.xlu0 %816
      %818 = vrot.lane.b32.xlu0 %v594, 48
      %v819 = vpop.permute.xlu0 %818
      %820 = vrot.lane.b32.xlu0 %v595, 48
      %v821 = vpop.permute.xlu0 %820
      %822 = vrot.lane.b32.xlu0 %v596, 48
      %v823 = vpop.permute.xlu0 %822
      %824 = vrot.lane.b32.xlu0 %v597, 48
      %v825 = vpop.permute.xlu0 %824
      %826 = vrot.lane.b32.xlu0 %v598, 48
      %v827 = vpop.permute.xlu0 %826
      %828 = vrot.lane.b32.xlu0 %v599, 48
      %v829 = vpop.permute.xlu0 %828
      %830 = vrot.lane.b32.xlu0 %v600, 48
      %v831 = vpop.permute.xlu0 %830
      %832 = vrot.lane.b32.xlu0 %v601, 48
      %v833 = vpop.permute.xlu0 %832
      %854 = vrot.lane.b32.xlu0 %v602, 56
      %v855 = vpop.permute.xlu0 %854
      %856 = vrot.lane.b32.xlu0 %v603, 56
      %v857 = vpop.permute.xlu0 %856
      %858 = vrot.lane.b32.xlu0 %v604, 56
      %v859 = vpop.permute.xlu0 %858
      %860 = vrot.lane.b32.xlu0 %v605, 56
      %v861 = vpop.permute.xlu0 %860
      %862 = vrot.lane.b32.xlu0 %v606, 56
      %v863 = vpop.permute.xlu0 %862
      %864 = vrot.lane.b32.xlu0 %v607, 56
      %v865 = vpop.permute.xlu0 %864
      %866 = vrot.lane.b32.xlu0 %v608, 56
      %v867 = vpop.permute.xlu0 %866
      %868 = vrot.lane.b32.xlu0 %v609, 56
      %v869 = vpop.permute.xlu0 %868
      %870 = vrot.lane.b32.xlu0 %v610, 56
      %v871 = vpop.permute.xlu0 %870
      %872 = vrot.lane.b32.xlu0 %v611, 56
      %v873 = vpop.permute.xlu0 %872
      %894 = vrot.lane.b32.xlu0 %v612, 64
      %v895 = vpop.permute.xlu0 %894
      %896 = vrot.lane.b32.xlu0 %v613, 64
      %v897 = vpop.permute.xlu0 %896
      %898 = vrot.lane.b32.xlu0 %v614, 64
      %v899 = vpop.permute.xlu0 %898
      %900 = vrot.lane.b32.xlu0 %v615, 64
      %v901 = vpop.permute.xlu0 %900
      %902 = vrot.lane.b32.xlu0 %v616, 64
      %v903 = vpop.permute.xlu0 %902
      %904 = vrot.lane.b32.xlu0 %v617, 64
      %v905 = vpop.permute.xlu0 %904
      %906 = vrot.lane.b32.xlu0 %v618, 64
      %v907 = vpop.permute.xlu0 %906
      %908 = vrot.lane.b32.xlu0 %v619, 64
      %v909 = vpop.permute.xlu0 %908
      %910 = vrot.lane.b32.xlu0 %v620, 64
      %v911 = vpop.permute.xlu0 %910
      %912 = vrot.lane.b32.xlu0 %v621, 64
      %v913 = vpop.permute.xlu0 %912
      %v924 = vsel %vm534, %v550, %v633
      %v925 = vsel %vm534, %v551, %v635
      %v926 = vsel %vm534, %v552, %v637
      %v927 = vsel %vm534, %v553, %v639
      %v928 = vsel %vm534, %v554, %v641
      %v929 = vsel %vm534, %v555, %v643
      %v930 = vsel %vm534, %v556, %v645
      %v931 = vsel %vm534, %v557, %v647
      %v932 = vsel %vm534, %v558, %v649
      %v933 = vsel %vm534, %v559, %v651
      %vm934 = vcmask 130048
      %v935 = vsel %vm934, %v924, %v673
      %v936 = vsel %vm934, %v925, %v675
      %v937 = vsel %vm934, %v926, %v677
      %v938 = vsel %vm934, %v927, %v679
      %v939 = vsel %vm934, %v928, %v681
      %v940 = vsel %vm934, %v929, %v683
      %v941 = vsel %vm934, %v930, %v685
      %v942 = vsel %vm934, %v931, %v687
      %v943 = vsel %vm934, %v932, %v689
      %v944 = vsel %vm934, %v933, %v691
      %vm945 = vcmask 195584
      %v946 = vsel %vm945, %v935, %v704
      %v947 = vsel %vm945, %v936, %v706
      %v948 = vsel %vm945, %v937, %v708
      %v949 = vsel %vm945, %v938, %v710
      %v950 = vsel %vm945, %v939, %v712
      %v951 = vsel %vm945, %v940, %v714
      %v952 = vsel %vm945, %v941, %v716
      %v953 = vsel %vm945, %v942, %v718
      %v954 = vsel %vm945, %v943, %v720
      %v955 = vsel %vm945, %v944, %v722
      %vm956 = vcmask 261120
      %v957 = vsel %vm956, %v946, %v744
      %v958 = vsel %vm956, %v947, %v746
      %v959 = vsel %vm956, %v948, %v748
      %v960 = vsel %vm956, %v949, %v750
      %v961 = vsel %vm956, %v950, %v752
      %v962 = vsel %vm956, %v951, %v754
      %v963 = vsel %vm956, %v952, %v756
      %v964 = vsel %vm956, %v953, %v758
      %v965 = vsel %vm956, %v954, %v760
      %v966 = vsel %vm956, %v955, %v762
      %vm967 = vcmask 326656
      %v968 = vsel %vm967, %v957, %v784
      %v969 = vsel %vm967, %v958, %v786
      %v970 = vsel %vm967, %v959, %v788
      %v971 = vsel %vm967, %v960, %v790
      %v972 = vsel %vm967, %v961, %v792
      %v973 = vsel %vm967, %v962, %v794
      %v974 = vsel %vm967, %v963, %v796
      %v975 = vsel %vm967, %v964, %v798
      %v976 = vsel %vm967, %v965, %v800
      %v977 = vsel %vm967, %v966, %v802
      %vm978 = vcmask 392192
      %v979 = vsel %vm978, %v968, %v815
      %v980 = vsel %vm978, %v969, %v817
      %v981 = vsel %vm978, %v970, %v819
      %v982 = vsel %vm978, %v971, %v821
      %v983 = vsel %vm978, %v972, %v823
      %v984 = vsel %vm978, %v973, %v825
      %v985 = vsel %vm978, %v974, %v827
      %v986 = vsel %vm978, %v975, %v829
      %v987 = vsel %vm978, %v976, %v831
      %v988 = vsel %vm978, %v977, %v833
      %vm989 = vcmask 457728
      %v990 = vsel %vm989, %v979, %v855
      %v991 = vsel %vm989, %v980, %v857
      %v992 = vsel %vm989, %v981, %v859
      %v993 = vsel %vm989, %v982, %v861
      %v994 = vsel %vm989, %v983, %v863
      %v995 = vsel %vm989, %v984, %v865
      %v996 = vsel %vm989, %v985, %v867
      %v997 = vsel %vm989, %v986, %v869
      %v998 = vsel %vm989, %v987, %v871
      %v999 = vsel %vm989, %v988, %v873
      %vm1000 = vcmask 523264
      %v1001 = vsel %vm1000, %v990, %v895
      %v1002 = vsel %vm1000, %v991, %v897
      %v1003 = vsel %vm1000, %v992, %v899
      %v1004 = vsel %vm1000, %v993, %v901
      %v1005 = vsel %vm1000, %v994, %v903
      %v1006 = vsel %vm1000, %v995, %v905
      %v1007 = vsel %vm1000, %v996, %v907
      %v1008 = vsel %vm1000, %v997, %v909
      %v1009 = vsel %vm1000, %v998, %v911
      %v1010 = vsel %vm1000, %v999, %v913
      %v1011 = vld [vmem:[%s3] sm:$0xff]
      %v1012 = vld [vmem:[%s3 + $0x8] sm:$0xff]
      %v1013 = vld [vmem:[%s3 + $0x10] sm:$0xff]
      %v1014 = vld [vmem:[%s3 + $0x18] sm:$0xff]
      %v1015 = vld [vmem:[%s3 + $0x20] sm:$0xff]
      %v1016 = vld [vmem:[%s3 + $0x28] sm:$0xff]
      %v1017 = vld [vmem:[%s3 + $0x30] sm:$0xff]
      %v1018 = vld [vmem:[%s3 + $0x38] sm:$0xff]
      %v1019 = vld [vmem:[%s3 + $0x40] sm:$0xff]
      %vm1020 = vcmask 588800
      %v1022 = vsel %vm1020, %v1001, 0
      %v1025 = vsel %vm1020, %v1002, 0
      %v1028 = vsel %vm1020, %v1003, 0
      %v1031 = vsel %vm1020, %v1004, 0
      %v1034 = vsel %vm1020, %v1005, 0
      %v1037 = vsel %vm1020, %v1006, 0
      %v1040 = vsel %vm1020, %v1007, 0
      %v1043 = vsel %vm1020, %v1008, 0
      %v1046 = vsel %vm1020, %v1009, 0
      %v1049 = vsel %vm1020, %v1010, 0
      %1051 = vmatprep.subr.mxu0 0.0
      %1052 = vmatpush1.msra.mxu0 %v1011
      %1053 = vmatprep.subr.mxu0 0.0
      %1054 = vmatpush1.msra.mxu0 %v1012
      %1055 = vmatprep.subr.mxu0 0.0
      %1056 = vmatpush1.msra.mxu0 %v1013
      %1057 = vmatprep.subr.mxu0 0.0
      %1058 = vmatpush1.msra.mxu0 %v1014
      %1059 = vmatprep.subr.mxu0 0.0
      %1060 = vmatpush1.msra.mxu0 %v1015
      %1061 = vmatprep.subr.mxu0 0.0
      %1062 = vmatpush1.msra.mxu0 %v1016
      %1063 = vmatprep.subr.mxu0 0.0
      %1064 = vmatpush1.msra.mxu0 %v1017
      %1065 = vmatprep.subr.mxu0 0.0
      %1066 = vmatpush1.msra.mxu0 %v1018
      %1067 = vmatprep.subr.mxu0 0.0
      %1068 = vmatpush1.msra.mxu0 %v1019
      %1069 = vmatprep.subr.mxu0 0.0
      %1070 = vmatpush1.msra.mxu0 0.0
      %1071 = vmatprep.subr.mxu0 0.0
      %1072 = vmatpush1.msra.mxu0 0.0
      %1073 = vmatprep.subr.mxu0 0.0
      %1074 = vmatpush1.msra.mxu0 0.0
      %1075 = vmatprep.subr.mxu0 0.0
      %1076 = vmatpush1.msra.mxu0 0.0
      %1077 = vmatprep.subr.mxu0 0.0
      %1078 = vmatpush1.msra.mxu0 0.0
      %1079 = vmatprep.subr.mxu0 0.0
      %1080 = vmatpush1.msra.mxu0 0.0
      %1081 = vmatprep.subr.mxu0 0.0
      %1082 = vmatpush1.msra.mxu0 0.0
      %1083 = vmatprep.subr.mxu0 0.0
      %1084 = vmatpush1.msra.mxu0 0.0
      %1085 = vmatprep.subr.mxu0 0.0
      %1086 = vmatpush1.msra.mxu0 0.0
      %1087 = vmatprep.subr.mxu0 0.0
      %1088 = vmatpush1.msra.mxu0 0.0
      %1089 = vmatprep.subr.mxu0 0.0
      %1090 = vmatpush1.msra.mxu0 0.0
      %1091 = vmatprep.subr.mxu0 0.0
      %1092 = vmatpush1.msra.mxu0 0.0
      %1093 = vmatprep.subr.mxu0 0.0
      %1094 = vmatpush1.msra.mxu0 0.0
      %1095 = vmatprep.subr.mxu0 0.0
      %1096 = vmatpush1.msra.mxu0 0.0
      %1097 = vmatprep.subr.mxu0 0.0
      %1098 = vmatpush1.msra.mxu0 0.0
      %1099 = vmatprep.subr.mxu0 0.0
      %1100 = vmatpush1.msra.mxu0 0.0
      %1101 = vmatprep.subr.mxu0 0.0
      %1102 = vmatpush1.msra.mxu0 0.0
      %1103 = vmatprep.subr.mxu0 0.0
      %1104 = vmatpush1.msra.mxu0 0.0
      %1105 = vmatprep.subr.mxu0 0.0
      %1106 = vmatpush1.msra.mxu0 0.0
      %1107 = vmatprep.subr.mxu0 0.0
      %1108 = vmatpush1.msra.mxu0 0.0
      %1109 = vmatprep.subr.mxu0 0.0
      %1110 = vmatpush1.msra.mxu0 0.0
      %1111 = vmatprep.subr.mxu0 0.0
      %1112 = vmatpush1.msra.mxu0 0.0
      %1113 = vmatprep.subr.mxu0 0.0
      %1114 = vmatpush1.msra.mxu0 0.0
      %1115 = vmatprep.mubr.f32.mxu0 0.0
      %1116 = vmatmul.mubr.f32.gmra.mrb[0].mxu0 %v1022
      %v1117 = vpop.f32.mrb[0].mxu0
      %v1118 = vadd.f32 0.0, %v1117
      %v1119 = vpop.f32.mrb[0].mxu0
      %1120 = vmatprep.mubr.f32.mxu0 0.0
      %1121 = vmatmul.mubr.f32.gmra.mrb[0].mxu0 %v1025
      %v1122 = vpop.f32.mrb[0].mxu0
      %v1123 = vadd.f32 0.0, %v1122
      %v1124 = vpop.f32.mrb[0].mxu0
      %1125 = vmatprep.mubr.f32.mxu0 0.0
      %1126 = vmatmul.mubr.f32.gmra.mrb[0].mxu0 %v1028
      %v1127 = vpop.f32.mrb[0].mxu0
      %v1128 = vadd.f32 0.0, %v1127
      %v1129 = vpop.f32.mrb[0].mxu0
      %1130 = vmatprep.mubr.f32.mxu0 0.0
      %1131 = vmatmul.mubr.f32.gmra.mrb[0].mxu0 %v1031
      %v1132 = vpop.f32.mrb[0].mxu0
      %v1133 = vadd.f32 0.0, %v1132
      %v1134 = vpop.f32.mrb[0].mxu0
      %1135 = vmatprep.mubr.f32.mxu0 0.0
      %1136 = vmatmul.mubr.f32.gmra.mrb[0].mxu0 %v1034
      %v1137 = vpop.f32.mrb[0].mxu0
      %v1138 = vadd.f32 0.0, %v1137
      %v1139 = vpop.f32.mrb[0].mxu0
      %1140 = vmatprep.mubr.f32.mxu0 0.0
      %1141 = vmatmul.mubr.f32.gmra.mrb[0].mxu0 %v1037
      %v1142 = vpop.f32.mrb[0].mxu0
      %v1143 = vadd.f32 0.0, %v1142
      %v1144 = vpop.f32.mrb[0].mxu0
      %1145 = vmatprep.mubr.f32.mxu0 0.0
      %1146 = vmatmul.mubr.f32.gmra.mrb[0].mxu0 %v1040
      %v1147 = vpop.f32.mrb[0].mxu0
      %v1148 = vadd.f32 0.0, %v1147
      %v1149 = vpop.f32.mrb[0].mxu0
      %1150 = vmatprep.mubr.f32.mxu0 0.0
      %1151 = vmatmul.mubr.f32.gmra.mrb[0].mxu0 %v1043
      %v1152 = vpop.f32.mrb[0].mxu0
      %v1153 = vadd.f32 0.0, %v1152
      %v1154 = vpop.f32.mrb[0].mxu0
      %1155 = vmatprep.mubr.f32.mxu0 0.0
      %1156 = vmatmul.mubr.f32.gmra.mrb[0].mxu0 %v1046
      %v1157 = vpop.f32.mrb[0].mxu0
      %v1158 = vadd.f32 0.0, %v1157
      %v1159 = vpop.f32.mrb[0].mxu0
      %1160 = vmatprep.mubr.f32.mxu0 0.0
      %1161 = vmatmul.mubr.f32.gmra.mrb[0].mxu0 %v1049
      %v1162 = vpop.f32.mrb[0].mxu0
      %v1163 = vadd.f32 0.0, %v1162
      %v1164 = vpop.f32.mrb[0].mxu0
      %1165 = vdwg.mxu0
      %1166 = vst.msk [vmem:[%s262] sm:$0xff] %vm534, %v1118
      %1167 = vst.msk [vmem:[%s262 + $0x8] sm:$0xff] %vm534, %v1123
      %1168 = vst.msk [vmem:[%s262 + $0x10] sm:$0xff] %vm534, %v1128
      %1169 = vst.msk [vmem:[%s262 + $0x18] sm:$0xff] %vm534, %v1133
      %1170 = vst.msk [vmem:[%s262 + $0x20] sm:$0xff] %vm534, %v1138
      %1171 = vst.msk [vmem:[%s262 + $0x28] sm:$0xff] %vm534, %v1143
      %1172 = vst.msk [vmem:[%s262 + $0x30] sm:$0xff] %vm534, %v1148
      %1173 = vst.msk [vmem:[%s262 + $0x38] sm:$0xff] %vm534, %v1153
      %1174 = vst.msk [vmem:[%s262 + $0x40] sm:$0xff] %vm534, %v1158
      %1175 = vst.msk [vmem:[%s262 + $0x48] sm:$0xff] %vm534, %v1163
      %v1176 = vlaneseq
      %v1177 = vand.u32 %v1176, 127
      %vm1178 = vcmp.lt.s32.totalorder %v1177, 0
      %v1179 = vsub.s32 0, %v1177
      %v1180 = vsel %vm1178, %v1179, %v1177
      %v1181 = vmul.u32.u64.compose %v1180, 3435973837
      %v1182 = vextract.low.u32 %v1181
      %v1183 = vextract.high.u32 %v1181
      %v1184 = vshrl.u32 %v1183, 3
      %v1185 = vmul.u32 %v1184, 10
      %v1186 = vsub.s32 %v1180, %v1185
      %v1187 = vsub.s32 0, %v1186
      %v1188 = vsel %vm1178, %v1187, %v1186
      %vm1189 = vcmp.ne.s32.totalorder %v1188, 0
      %vm1190 = vcmp.lt.s32.totalorder %v1188, 0
      %vm1191 = vmand %vm1190, %vm1189
      %v1192 = vadd.s32 %v1188, 10
      %v1193 = vsel %vm1191, %v1192, %v1188
      %vm1194 = vcmp.lt.s32.totalorder %v1193, 8
      %v1195 = vsel %vm1194, 1, 0
      %v1196 = vcvt.s32.f32 %v1195
      %vm1197 = vcmask 654336
      %v1199 = vsel %vm1197, %v1196, 0
      %1201 = vmatprep.subr.mxu0 0.0
      %1202 = vmatpush1.msra.mxu0 %v1118
      %1203 = vmatprep.subr.mxu0 0.0
      %1204 = vmatpush1.msra.mxu0 %v1123
      %1205 = vmatprep.subr.mxu0 0.0
      %1206 = vmatpush1.msra.mxu0 %v1128
      %1207 = vmatprep.subr.mxu0 0.0
      %1208 = vmatpush1.msra.mxu0 %v1133
      %1209 = vmatprep.subr.mxu0 0.0
      %1210 = vmatpush1.msra.mxu0 %v1138
      %1211 = vmatprep.subr.mxu0 0.0
      %1212 = vmatpush1.msra.mxu0 %v1143
      %1213 = vmatprep.subr.mxu0 0.0
      %1214 = vmatpush1.msra.mxu0 %v1148
      %1215 = vmatprep.subr.mxu0 0.0
      %1216 = vmatpush1.msra.mxu0 %v1153
      %1217 = vmatprep.subr.mxu0 0.0
      %1218 = vmatpush1.msra.mxu0 %v1158
      %1219 = vmatprep.subr.mxu0 0.0
      %1220 = vmatpush1.msra.mxu0 %v1163
      %1221 = vmatprep.subr.mxu0 0.0
      %1222 = vmatpush1.msra.mxu0 0.0
      %1223 = vmatprep.subr.mxu0 0.0
      %1224 = vmatpush1.msra.mxu0 0.0
      %1225 = vmatprep.subr.mxu0 0.0
      %1226 = vmatpush1.msra.mxu0 0.0
      %1227 = vmatprep.subr.mxu0 0.0
      %1228 = vmatpush1.msra.mxu0 0.0
      %1229 = vmatprep.subr.mxu0 0.0
      %1230 = vmatpush1.msra.mxu0 0.0
      %1231 = vmatprep.subr.mxu0 0.0
      %1232 = vmatpush1.msra.mxu0 0.0
      %1233 = vmatprep.subr.mxu0 0.0
      %1234 = vmatpush1.msra.mxu0 0.0
      %1235 = vmatprep.subr.mxu0 0.0
      %1236 = vmatpush1.msra.mxu0 0.0
      %1237 = vmatprep.subr.mxu0 0.0
      %1238 = vmatpush1.msra.mxu0 0.0
      %1239 = vmatprep.subr.mxu0 0.0
      %1240 = vmatpush1.msra.mxu0 0.0
      %1241 = vmatprep.subr.mxu0 0.0
      %1242 = vmatpush1.msra.mxu0 0.0
      %1243 = vmatprep.subr.mxu0 0.0
      %1244 = vmatpush1.msra.mxu0 0.0
      %1245 = vmatprep.subr.mxu0 0.0
      %1246 = vmatpush1.msra.mxu0 0.0
      %1247 = vmatprep.subr.mxu0 0.0
      %1248 = vmatpush1.msra.mxu0 0.0
      %1249 = vmatprep.subr.mxu0 0.0
      %1250 = vmatpush1.msra.mxu0 0.0
      %1251 = vmatprep.subr.mxu0 0.0
      %1252 = vmatpush1.msra.mxu0 0.0
      %1253 = vmatprep.subr.mxu0 0.0
      %1254 = vmatpush1.msra.mxu0 0.0
      %1255 = vmatprep.subr.mxu0 0.0
      %1256 = vmatpush1.msra.mxu0 0.0
      %1257 = vmatprep.subr.mxu0 0.0
      %1258 = vmatpush1.msra.mxu0 0.0
      %1259 = vmatprep.subr.mxu0 0.0
      %1260 = vmatpush1.msra.mxu0 0.0
      %1261 = vmatprep.subr.mxu0 0.0
      %1262 = vmatpush1.msra.mxu0 0.0
      %1263 = vmatprep.subr.mxu0 0.0
      %1264 = vmatpush1.msra.mxu0 0.0
      %1265 = vmatprep.mubr.f32.mxu0 0.0
      %1266 = vmatmul.mubr.f32.gmra.mrb[0].mxu0 %v1199
      %v1267 = vpop.f32.mrb[0].mxu0
      %v1268 = vadd.f32 0.0, %v1267
      %v1269 = vpop.f32.mrb[0].mxu0
      %1270 = vdwg.mxu0
      %vm1271 = vcmask 57344
      %1272 = vst.msk [vmem:[%s265] sm:$0x1] %vm1271, %v1268
      %v1273 = vmul.f32 %v1118, %v1118
      %v1274 = vmul.f32 %v1123, %v1123
      %v1275 = vmul.f32 %v1128, %v1128
      %v1276 = vmul.f32 %v1133, %v1133
      %v1277 = vmul.f32 %v1138, %v1138
      %v1278 = vmul.f32 %v1143, %v1143
      %v1279 = vmul.f32 %v1148, %v1148
      %v1280 = vmul.f32 %v1153, %v1153
      %v1281 = vmul.f32 %v1158, %v1158
      %v1282 = vmul.f32 %v1163, %v1163
      %1283 = vmatprep.subr.mxu0 0.0
      %1284 = vmatpush1.msra.mxu0 %v1273
      %1285 = vmatprep.subr.mxu0 0.0
      %1286 = vmatpush1.msra.mxu0 %v1274
      %1287 = vmatprep.subr.mxu0 0.0
      %1288 = vmatpush1.msra.mxu0 %v1275
      %1289 = vmatprep.subr.mxu0 0.0
      %1290 = vmatpush1.msra.mxu0 %v1276
      %1291 = vmatprep.subr.mxu0 0.0
      %1292 = vmatpush1.msra.mxu0 %v1277
      %1293 = vmatprep.subr.mxu0 0.0
      %1294 = vmatpush1.msra.mxu0 %v1278
      %1295 = vmatprep.subr.mxu0 0.0
      %1296 = vmatpush1.msra.mxu0 %v1279
      %1297 = vmatprep.subr.mxu0 0.0
      %1298 = vmatpush1.msra.mxu0 %v1280
      %1299 = vmatprep.subr.mxu0 0.0
      %1300 = vmatpush1.msra.mxu0 %v1281
      %1301 = vmatprep.subr.mxu0 0.0
      %1302 = vmatpush1.msra.mxu0 %v1282
      %1303 = vmatprep.subr.mxu0 0.0
      %1304 = vmatpush1.msra.mxu0 0.0
      %1305 = vmatprep.subr.mxu0 0.0
      %1306 = vmatpush1.msra.mxu0 0.0
      %1307 = vmatprep.subr.mxu0 0.0
      %1308 = vmatpush1.msra.mxu0 0.0
      %1309 = vmatprep.subr.mxu0 0.0
      %1310 = vmatpush1.msra.mxu0 0.0
      %1311 = vmatprep.subr.mxu0 0.0
      %1312 = vmatpush1.msra.mxu0 0.0
      %1313 = vmatprep.subr.mxu0 0.0
      %1314 = vmatpush1.msra.mxu0 0.0
      %1315 = vmatprep.subr.mxu0 0.0
      %1316 = vmatpush1.msra.mxu0 0.0
      %1317 = vmatprep.subr.mxu0 0.0
      %1318 = vmatpush1.msra.mxu0 0.0
      %1319 = vmatprep.subr.mxu0 0.0
      %1320 = vmatpush1.msra.mxu0 0.0
      %1321 = vmatprep.subr.mxu0 0.0
      %1322 = vmatpush1.msra.mxu0 0.0
      %1323 = vmatprep.subr.mxu0 0.0
      %1324 = vmatpush1.msra.mxu0 0.0
      %1325 = vmatprep.subr.mxu0 0.0
      %1326 = vmatpush1.msra.mxu0 0.0
      %1327 = vmatprep.subr.mxu0 0.0
      %1328 = vmatpush1.msra.mxu0 0.0
      %1329 = vmatprep.subr.mxu0 0.0
      %1330 = vmatpush1.msra.mxu0 0.0
      %1331 = vmatprep.subr.mxu0 0.0
      %1332 = vmatpush1.msra.mxu0 0.0
      %1333 = vmatprep.subr.mxu0 0.0
      %1334 = vmatpush1.msra.mxu0 0.0
      %1335 = vmatprep.subr.mxu0 0.0
      %1336 = vmatpush1.msra.mxu0 0.0
      %1337 = vmatprep.subr.mxu0 0.0
      %1338 = vmatpush1.msra.mxu0 0.0
      %1339 = vmatprep.subr.mxu0 0.0
      %1340 = vmatpush1.msra.mxu0 0.0
      %1341 = vmatprep.subr.mxu0 0.0
      %1342 = vmatpush1.msra.mxu0 0.0
      %1343 = vmatprep.subr.mxu0 0.0
      %1344 = vmatpush1.msra.mxu0 0.0
      %1345 = vmatprep.subr.mxu0 0.0
      %1346 = vmatpush1.msra.mxu0 0.0
      %1347 = vmatprep.mubr.f32.mxu0 0.0
      %1348 = vmatmul.mubr.f32.gmra.mrb[0].mxu0 %v1199
      %v1349 = vpop.f32.mrb[0].mxu0
      %v1350 = vadd.f32 0.0, %v1349
      %v1351 = vpop.f32.mrb[0].mxu0
      %1352 = vdwg.mxu0
      %1353 = vst.msk [vmem:[%s268] sm:$0x1] %vm1271, %v1350
      %p1354 = scmp.lt.s32.totalorder %s18, 1
      %s1355 = scalar_select %p1354, %s18, 1
      %s1356 = smul.addr %s1355, 10
      %s1357 = smul.addr %s1356, 8
      %s1358 = scalar_lea.vmem %s4, %s1357
      %p1359 = scmp.lt.s32.totalorder %s18, 1
      %s1360 = scalar_select %p1359, %s18, 1
      %s1361 = scalar_lea.vmem %s5, %s1360
      %p1362 = scmp.lt.s32.totalorder %s18, 1
      %s1363 = scalar_select %p1362, %s18, 1
      %s1364 = scalar_lea.vmem %s6, %s1363
      // Predicated region
      $region37: #{down_forward.4} parent=35 // pred_check
        %p1365 = pneg %p125
      $region38: #{down_forward.4} parent=35 // pred_check_branch
        %1367 = sbr.rel (%p1365) target = $region40
      $region39: #{down_forward.4} parent=35 // pred_region
        _
      $region40: #{down_forward.4} parent=35 // pred_fallthru
        _
      // Predicated region
      $region41: #{down_forward.4} parent=35 // pred_check
        %p1368 = pneg %p151
      $region42: #{down_forward.4} parent=35 // pred_check_branch
        %1370 = sbr.rel (%p1368) target = $region44
      $region43: #{down_forward.4} parent=35 // pred_region
        _
      $region44: #{down_forward.4} parent=35 // pred_fallthru
        _
      // Predicated region
      $region45: #{down_forward.4} parent=35 // pred_check
        %p1371 = pneg %p177
      $region46: #{down_forward.4} parent=35 // pred_check_branch
        %1373 = sbr.rel (%p1371) target = $region48
      $region47: #{down_forward.4} parent=35 // pred_region
        _
      $region48: #{down_forward.4} parent=35 // pred_fallthru
        _
    $region36: #{down_forward.4} parent=5 // pred_fallthru
      _
    %p1374 = scmp.le.s32.totalorder 2, %s13
    // Predicated region
    $region49: #{down_forward.4} parent=5 // pred_check
      %p1375 = pneg %p1374
    $region50: #{down_forward.4} parent=5 // pred_check_branch
      %1377 = sbr.rel (%p1375) target = $region52
    $region51: #{down_forward.4} parent=5 // pred_region
      %s1378 = ssub.s32 %s13, 2
      // Predicated region
      $region53: #{down_forward.4} parent=51 // pred_check
        %p1379 = pneg %p131
      $region54: #{down_forward.4} parent=51 // pred_check_branch
        %1381 = sbr.rel (%p1379) target = $region56
      $region55: #{down_forward.4} parent=51 // pred_region
        %p1382 = scmp.lt.s32.totalorder %s19, 1
        %s1383 = scalar_select %p1382, %s19, 1
        %s1384 = smul.addr %s1383, 10
        %s1385 = smul.addr %s1384, 8
        %s1386 = scalar_lea.vmem %s4, %s1385
      $region56: #{down_forward.4} parent=51 // pred_fallthru
        _
      // Predicated region
      $region57: #{down_forward.4} parent=51 // pred_check
        %p1387 = pneg %p157
      $region58: #{down_forward.4} parent=51 // pred_check_branch
        %1389 = sbr.rel (%p1387) target = $region60
      $region59: #{down_forward.4} parent=51 // pred_region
        %p1390 = scmp.lt.s32.totalorder %s19, 1
        %s1391 = scalar_select %p1390, %s19, 1
        %s1392 = scalar_lea.vmem %s5, %s1391
      $region60: #{down_forward.4} parent=51 // pred_fallthru
        _
      // Predicated region
      $region61: #{down_forward.4} parent=51 // pred_check
        %p1393 = pneg %p183
      $region62: #{down_forward.4} parent=51 // pred_check_branch
        %1395 = sbr.rel (%p1393) target = $region64
      $region63: #{down_forward.4} parent=51 // pred_region
        %p1396 = scmp.lt.s32.totalorder %s19, 1
        %s1397 = scalar_select %p1396, %s19, 1
        %s1398 = scalar_lea.vmem %s6, %s1397
      $region64: #{down_forward.4} parent=51 // pred_fallthru
        _
    $region52: #{down_forward.4} parent=5 // pred_fallthru
      _
  $region6: #{down_forward.4} parent=0 // loop_footer
    %s17 = sadd.s32 1, %s13
  $region7: #{down_forward.4} parent=0 // loop_footer_branch
    %12 = sbr.rel target = $region3
  $region8: #{down_forward.4} parent=0 // loop_exit
    _

// kernel: down_forward.3
$region0: #{down_forward.3}
  #allocation0 [shape = 'u32[]', space=smem, size = 0x4, offset = 0x4, fixed_abs, tag = 'smem constant byte address 0x4 - core index']
  #allocation1 [shape = 'u32[144,128]{1,0:T(1,128)}', space=vmem, size = 0x12000, scoped, tag = 'internal scratch']
  #allocation2 [shape = 'f32[102,4]{1,0:T(8,128)}', space=vmem, size = 0xd000, scoped, tag = 'scratch operand']
  %s0 = inlined_call_operand.vmem [shape: f32[2,80,16], index: 0, kind: input, shape index: {}]
  %s1 = inlined_call_operand.vmem [shape: f32[36,8], index: 1, kind: input, shape index: {}]
  %s2 = inlined_call_operand.vmem [shape: f32[2,80,8], index: 2, kind: output, shape index: {0}]
  %s3 = inlined_call_operand.vmem [shape: f32[2,1,8], index: 3, kind: output, shape index: {1}]
  %s4 = inlined_call_operand.vmem [shape: f32[2,1,8], index: 4, kind: output, shape index: {2}]
  %5 = xla_tuple %s2, %s3, %s4
  %s6 = sld [smem:[#allocation0]]
  $region57: #{down_forward.3} parent=0
    _
  %s8 = ssub.s32 1, %s6
  %s9 = scalar_select 0, %s8, %s6
  loop: start=0, step=1, limit=4
  $region2: #{down_forward.3} parent=0 // loop_pre_header
    _
  $region3: #{down_forward.3} parent=0 // loop_header
    %s11 = sphi 0, %s15
    %p12 = scmp.ge.s32.totalorder %s11, 4
    %s21 = sphi 0, %s23
    %s24 = sphi 0, %s21
    %s25 = sphi 0, %s24
    %s41 = sphi 0, %s25
    %s45 = sphi 0, %s45
    %s47 = sphi 0, %s45
    %s48 = sphi 0, %s47
    %s62 = sphi 0, %s48
    %s68 = sphi 0, %s70
    %s71 = sphi 0, %s68
    %s72 = sphi 0, %s71
    %s88 = sphi 0, %s72
    %s94 = sphi 0, %s96
    %s97 = sphi 0, %s94
    %s98 = sphi 0, %s97
    %s114 = sphi 0, %s98
    %s120 = sphi 0, %s122
    %s123 = sphi 0, %s120
    %s124 = sphi 0, %s123
    %s140 = sphi 0, %s124
  $region4: #{down_forward.3} parent=0 // loop_header_branch
    %14 = sbr.rel (%p12) target = $region8
  $region5: #{down_forward.3} parent=0 // loop_body
    %s16 = ssub.s32 %s11, 1
    %s17 = ssub.s32 %s11, 2
    %s18 = sadd.s32 %s11, 1
    %s19 = ssub.s32 %s11, %s18
    %p20 = scmp.eq.s32.totalorder %s19, 0
    %s22 = sadd.s32 %s21, 1
    %s23 = scalar_select %p20, %s21, %s22
    %p26 = pneg %p20
    %p27 = scmp.eq.s32.totalorder %s11, 1
    %p28 = por %p26, %p27
    %p29 = scmp.ne.s32.totalorder %s21, %s24
    %p30 = scmp.eq.s32.totalorder %s11, 0
    %p31 = por %p29, %p30
    %p32 = scmp.ne.s32.totalorder %s21, %s24
    %p33 = scmp.eq.s32.totalorder %s16, 1
    %p34 = por %p32, %p33
    %p35 = scmp.ne.s32.totalorder %s24, %s25
    %p36 = scmp.eq.s32.totalorder %s16, 0
    %p37 = por %p35, %p36
    %p38 = scmp.ne.s32.totalorder %s24, %s25
    %p39 = scmp.eq.s32.totalorder %s17, 1
    %p40 = por %p38, %p39
    %p42 = scmp.ne.s32.totalorder %s25, %s41
    %p43 = scmp.eq.s32.totalorder %s17, 0
    %p44 = por %p42, %p43
    %s46 = sadd.s32 %s45, 1
    %p49 = scmp.eq.s32.totalorder %s11, 1
    %p50 = scmp.ne.s32.totalorder %s45, %s47
    %p51 = scmp.eq.s32.totalorder %s11, 0
    %p52 = por %p50, %p51
    %p53 = scmp.ne.s32.totalorder %s45, %s47
    %p54 = scmp.eq.s32.totalorder %s16, 1
    %p55 = por %p53, %p54
    %p56 = scmp.ne.s32.totalorder %s47, %s48
    %p57 = scmp.eq.s32.totalorder %s16, 0
    %p58 = por %p56, %p57
    %p59 = scmp.ne.s32.totalorder %s47, %s48
    %p60 = scmp.eq.s32.totalorder %s17, 1
    %p61 = por %p59, %p60
    %p63 = scmp.ne.s32.totalorder %s48, %s62
    %p64 = scmp.eq.s32.totalorder %s17, 0
    %p65 = por %p63, %p64
    %s66 = ssub.s32 %s11, %s18
    %p67 = scmp.eq.s32.totalorder %s66, 0
    %s69 = sadd.s32 %s68, 1
    %s70 = scalar_select %p67, %s68, %s69
    %p73 = pneg %p67
    %p74 = scmp.eq.s32.totalorder %s11, 1
    %p75 = por %p73, %p74
    %p76 = scmp.ne.s32.totalorder %s68, %s71
    %p77 = scmp.eq.s32.totalorder %s11, 0
    %p78 = por %p76, %p77
    %p79 = scmp.ne.s32.totalorder %s68, %s71
    %p80 = scmp.eq.s32.totalorder %s16, 1
    %p81 = por %p79, %p80
    %p82 = scmp.ne.s32.totalorder %s71, %s72
    %p83 = scmp.eq.s32.totalorder %s16, 0
    %p84 = por %p82, %p83
    %p85 = scmp.ne.s32.totalorder %s71, %s72
    %p86 = scmp.eq.s32.totalorder %s17, 1
    %p87 = por %p85, %p86
    %p89 = scmp.ne.s32.totalorder %s72, %s88
    %p90 = scmp.eq.s32.totalorder %s17, 0
    %p91 = por %p89, %p90
    %s92 = ssub.s32 %s11, %s18
    %p93 = scmp.eq.s32.totalorder %s92, 0
    %s95 = sadd.s32 %s94, 1
    %s96 = scalar_select %p93, %s94, %s95
    %p99 = pneg %p93
    %p100 = scmp.eq.s32.totalorder %s11, 1
    %p101 = por %p99, %p100
    %p102 = scmp.ne.s32.totalorder %s94, %s97
    %p103 = scmp.eq.s32.totalorder %s11, 0
    %p104 = por %p102, %p103
    %p105 = scmp.ne.s32.totalorder %s94, %s97
    %p106 = scmp.eq.s32.totalorder %s16, 1
    %p107 = por %p105, %p106
    %p108 = scmp.ne.s32.totalorder %s97, %s98
    %p109 = scmp.eq.s32.totalorder %s16, 0
    %p110 = por %p108, %p109
    %p111 = scmp.ne.s32.totalorder %s97, %s98
    %p112 = scmp.eq.s32.totalorder %s17, 1
    %p113 = por %p111, %p112
    %p115 = scmp.ne.s32.totalorder %s98, %s114
    %p116 = scmp.eq.s32.totalorder %s17, 0
    %p117 = por %p115, %p116
    %s118 = ssub.s32 %s11, %s18
    %p119 = scmp.eq.s32.totalorder %s118, 0
    %s121 = sadd.s32 %s120, 1
    %s122 = scalar_select %p119, %s120, %s121
    %p125 = pneg %p119
    %p126 = scmp.eq.s32.totalorder %s11, 1
    %p127 = por %p125, %p126
    %p128 = scmp.ne.s32.totalorder %s120, %s123
    %p129 = scmp.eq.s32.totalorder %s11, 0
    %p130 = por %p128, %p129
    %p131 = scmp.ne.s32.totalorder %s120, %s123
    %p132 = scmp.eq.s32.totalorder %s16, 1
    %p133 = por %p131, %p132
    %p134 = scmp.ne.s32.totalorder %s123, %s124
    %p135 = scmp.eq.s32.totalorder %s16, 0
    %p136 = por %p134, %p135
    %p137 = scmp.ne.s32.totalorder %s123, %s124
    %p138 = scmp.eq.s32.totalorder %s17, 1
    %p139 = por %p137, %p138
    %p141 = scmp.ne.s32.totalorder %s124, %s140
    %p142 = scmp.eq.s32.totalorder %s17, 0
    %p143 = por %p141, %p142
    %p144 = scmp.le.s32.totalorder 1, %s11
    %p145 = scmp.lt.s32.totalorder %s11, 3
    %p146 = pnand %p144, %p145
    %p147 = pneg %p146
    // Predicated region
    $region9: #{down_forward.3} parent=5 // pred_check
      _
    $region10: #{down_forward.3} parent=5 // pred_check_branch
      %149 = sbr.rel (%p146) target = $region12
    $region11: #{down_forward.3} parent=5 // pred_region
      %s150 = ssub.s32 %s11, 1
      // Predicated region
      $region13: #{down_forward.3} parent=11 // pred_check
        %p151 = pneg %p58
      $region14: #{down_forward.3} parent=11 // pred_check_branch
        %153 = sbr.rel (%p151) target = $region16
      $region15: #{down_forward.3} parent=11 // pred_region
        _
      $region16: #{down_forward.3} parent=11 // pred_fallthru
        _
    $region12: #{down_forward.3} parent=5 // pred_fallthru
      _
    %p154 = scmp.lt.s32.totalorder %s11, 2
    // Predicated region
    $region17: #{down_forward.3} parent=5 // pred_check
      %p155 = pneg %p154
    $region18: #{down_forward.3} parent=5 // pred_check_branch
      %157 = sbr.rel (%p155) target = $region20
    $region19: #{down_forward.3} parent=5 // pred_region
      // Predicated region
      $region21: #{down_forward.3} parent=19 // pred_check
        %p158 = pneg %p31
      $region22: #{down_forward.3} parent=19 // pred_check_branch
        %160 = sbr.rel (%p158) target = $region24
      $region23: #{down_forward.3} parent=19 // pred_region
        %p161 = scmp.lt.s32.totalorder %s11, 1
        %s162 = scalar_select %p161, %s11, 1
        %s163 = smul.addr %s162, 10
        %s164 = smul.addr %s163, 8
        %s165 = scalar_lea.vmem %s0, %s164
      $region24: #{down_forward.3} parent=19 // pred_fallthru
        _
    $region20: #{down_forward.3} parent=5 // pred_fallthru
      _
    %p166 = scmp.le.s32.totalorder 1, %s11
    %p167 = scmp.lt.s32.totalorder %s11, 3
    %p168 = pnand %p166, %p167
    %p169 = pneg %p168
    // Predicated region
    $region25: #{down_forward.3} parent=5 // pred_check
      _
    $region26: #{down_forward.3} parent=5 // pred_check_branch
      %171 = sbr.rel (%p168) target = $region28
    $region27: #{down_forward.3} parent=5 // pred_region
      %s172 = ssub.s32 %s11, 1
      %p173 = scmp.lt.s32.totalorder %s16, 1
      %s174 = scalar_select %p173, %s16, 1
      %s175 = smul.addr %s174, 10
      %s176 = smul.addr %s175, 8
      %s177 = scalar_lea.vmem %s0, %s176
      %p178 = pneg %p37
      %p179 = pneg %p34
      %p180 = pneg %p58
      %p181 = pneg %p55
      %p182 = pneg %p84
      %p183 = pneg %p81
      %p184 = scmp.lt.s32.totalorder %s16, 1
      %s185 = scalar_select %p184, %s16, 1
      %s186 = smul.addr %s185, 10
      %s187 = smul.addr %s186, 8
      %s188 = scalar_lea.vmem %s2, %s187
      %p189 = pneg %p110
      %p190 = pneg %p107
      %p191 = scmp.lt.s32.totalorder %s16, 1
      %s192 = scalar_select %p191, %s16, 1
      %s193 = scalar_lea.vmem %s3, %s192
      %p194 = pneg %p136
      %p195 = pneg %p133
      %p196 = scmp.lt.s32.totalorder %s16, 1
      %s197 = scalar_select %p196, %s16, 1
      %s198 = scalar_lea.vmem %s4, %s197
      %p199 = scmp.lt.s32.totalorder %s16, 1
      %s200 = scalar_select %p199, %s16, 1
      %s201 = smul.addr %s200, 10
      %s202 = smul.addr %s201, 8
      %s203 = scalar_lea.vmem %s0, %s202
      %p204 = scmp.lt.s32.totalorder %s16, 1
      %s205 = scalar_select %p204, %s16, 1
      %s206 = smul.addr %s205, 10
      %s207 = smul.addr %s206, 8
      %s208 = scalar_lea.vmem %s2, %s207
      %p209 = scmp.lt.s32.totalorder %s16, 1
      %s210 = scalar_select %p209, %s16, 1
      %s211 = scalar_lea.vmem %s3, %s210
      %p212 = scmp.lt.s32.totalorder %s16, 1
      %s213 = scalar_select %p212, %s16, 1
      %s214 = scalar_lea.vmem %s4, %s213
      %v215 = vld [vmem:[%s203] sm:$0xff]
      %v216 = vld [vmem:[%s203 + $0x8] sm:$0xff]
      %v217 = vld [vmem:[%s203 + $0x10] sm:$0xff]
      %v218 = vld [vmem:[%s203 + $0x18] sm:$0xff]
      %v219 = vld [vmem:[%s203 + $0x20] sm:$0xff]
      %v220 = vld [vmem:[%s203 + $0x28] sm:$0xff]
      %v221 = vld [vmem:[%s203 + $0x30] sm:$0xff]
      %v222 = vld [vmem:[%s203 + $0x38] sm:$0xff]
      %v223 = vld [vmem:[%s203 + $0x40] sm:$0xff]
      %v224 = vld [vmem:[%s203 + $0x48] sm:$0xff]
      %235 = vrot.lane.b32.xlu0 %v215, 124
      %v236 = vpop.permute.xlu0 %235
      %237 = vrot.lane.b32.xlu0 %v216, 124
      %v238 = vpop.permute.xlu0 %237
      %239 = vrot.lane.b32.xlu0 %v217, 124
      %v240 = vpop.permute.xlu0 %239
      %241 = vrot.lane.b32.xlu0 %v218, 124
      %v242 = vpop.permute.xlu0 %241
      %243 = vrot.lane.b32.xlu0 %v219, 124
      %v244 = vpop.permute.xlu0 %243
      %245 = vrot.lane.b32.xlu0 %v220, 124
      %v246 = vpop.permute.xlu0 %245
      %247 = vrot.lane.b32.xlu0 %v221, 124
      %v248 = vpop.permute.xlu0 %247
      %249 = vrot.lane.b32.xlu0 %v222, 124
      %v250 = vpop.permute.xlu0 %249
      %251 = vrot.lane.b32.xlu0 %v223, 124
      %v252 = vpop.permute.xlu0 %251
      %253 = vrot.lane.b32.xlu0 %v224, 124
      %v254 = vpop.permute.xlu0 %253
      %v265 = vmax.f32 %v215, %v236
      %v266 = vmax.f32 %v216, %v238
      %v267 = vmax.f32 %v217, %v240
      %v268 = vmax.f32 %v218, %v242
      %v269 = vmax.f32 %v219, %v244
      %v270 = vmax.f32 %v220, %v246
      %v271 = vmax.f32 %v221, %v248
      %v272 = vmax.f32 %v222, %v250
      %v273 = vmax.f32 %v223, %v252
      %v274 = vmax.f32 %v224, %v254
      %285 = vrot.lane.b32.xlu0 %v265, 120
      %v286 = vpop.permute.xlu0 %285
      %287 = vrot.lane.b32.xlu0 %v266, 120
      %v288 = vpop.permute.xlu0 %287
      %289 = vrot.lane.b32.xlu0 %v267, 120
      %v290 = vpop.permute.xlu0 %289
      %291 = vrot.lane.b32.xlu0 %v268, 120
      %v292 = vpop.permute.xlu0 %291
      %293 = vrot.lane.b32.xlu0 %v269, 120
      %v294 = vpop.permute.xlu0 %293
      %295 = vrot.lane.b32.xlu0 %v270, 120
      %v296 = vpop.permute.xlu0 %295
      %297 = vrot.lane.b32.xlu0 %v271, 120
      %v298 = vpop.permute.xlu0 %297
      %299 = vrot.lane.b32.xlu0 %v272, 120
      %v300 = vpop.permute.xlu0 %299
      %301 = vrot.lane.b32.xlu0 %v273, 120
      %v302 = vpop.permute.xlu0 %301
      %303 = vrot.lane.b32.xlu0 %v274, 120
      %v304 = vpop.permute.xlu0 %303
      %v315 = vmax.f32 %v265, %v286
      %v316 = vmax.f32 %v266, %v288
      %v317 = vmax.f32 %v267, %v290
      %v318 = vmax.f32 %v268, %v292
      %v319 = vmax.f32 %v269, %v294
      %v320 = vmax.f32 %v270, %v296
      %v321 = vmax.f32 %v271, %v298
      %v322 = vmax.f32 %v272, %v300
      %v323 = vmax.f32 %v273, %v302
      %v324 = vmax.f32 %v274, %v304
      %vm325 = vcmask 31744
      %326 = vst.msk [vmem:[#allocation2] sm:$0xff] %vm325, 0.0
      %vm327 = vcmask 26624
      %328 = vst.msk [vmem:[#allocation2 + $0x8] sm:$0x7] %vm327, 0.0
      %329 = vst.msk [vmem:[#allocation2 + $0x5b] sm:$0xff] %vm325, 0.0
      %330 = vst.msk [vmem:[#allocation2 + $0x63] sm:$0x7] %vm327, 0.0
      %331 = vst.msk [vmem:[#allocation2 + $0xb] sm:$0xff] %vm325, %v315
      %332 = vst.msk [vmem:[#allocation2 + $0x13] sm:$0xff] %vm325, %v316
      %333 = vst.msk [vmem:[#allocation2 + $0x1b] sm:$0xff] %vm325, %v317
      %334 = vst.msk [vmem:[#allocation2 + $0x23] sm:$0xff] %vm325, %v318
      %335 = vst.msk [vmem:[#allocation2 + $0x2b] sm:$0xff] %vm325, %v319
      %336 = vst.msk [vmem:[#allocation2 + $0x33] sm:$0xff] %vm325, %v320
      %337 = vst.msk [vmem:[#allocation2 + $0x3b] sm:$0xff] %vm325, %v321
      %338 = vst.msk [vmem:[#allocation2 + $0x43] sm:$0xff] %vm325, %v322
      %339 = vst.msk [vmem:[#allocation2 + $0x4b] sm:$0xff] %vm325, %v323
      %340 = vst.msk [vmem:[#allocation2 + $0x53] sm:$0xff] %vm325, %v324
      %v341 = vld [vmem:[#allocation2] sm:$0xff]
      %v342 = vld [vmem:[#allocation2 + $0x8] sm:$0xff]
      %v343 = vld [vmem:[#allocation2 + $0x10] sm:$0xff]
      %v344 = vld [vmem:[#allocation2 + $0x18] sm:$0xff]
      %v345 = vld [vmem:[#allocation2 + $0x20] sm:$0xff]
      %v346 = vld [vmem:[#allocation2 + $0x28] sm:$0xff]
      %v347 = vld [vmem:[#allocation2 + $0x30] sm:$0xff]
      %v348 = vld [vmem:[#allocation2 + $0x38] sm:$0xff]
      %v349 = vld [vmem:[#allocation2 + $0x40] sm:$0xff]
      %v350 = vld [vmem:[#allocation2 + $0x48] sm:$0xff]
      %v351 = vld [vmem:[#allocation2 + $0x1] sm:$0xff]
      %v352 = vld [vmem:[#allocation2 + $0x9] sm:$0xff]
      %v353 = vld [vmem:[#allocation2 + $0x11] sm:$0xff]
      %v354 = vld [vmem:[#allocation2 + $0x19] sm:$0xff]
      %v355 = vld [vmem:[#allocation2 + $0x21] sm:$0xff]
      %v356 = vld [vmem:[#allocation2 + $0x29] sm:$0xff]
      %v357 = vld [vmem:[#allocation2 + $0x31] sm:$0xff]
      %v358 = vld [vmem:[#allocation2 + $0x39] sm:$0xff]
      %v359 = vld [vmem:[#allocation2 + $0x41] sm:$0xff]
      %v360 = vld [vmem:[#allocation2 + $0x49] sm:$0xff]
      %v361 = vld [vmem:[#allocation2 + $0x2] sm:$0xff]
      %v362 = vld [vmem:[#allocation2 + $0xa] sm:$0xff]
      %v363 = vld [vmem:[#allocation2 + $0x12] sm:$0xff]
      %v364 = vld [vmem:[#allocation2 + $0x1a] sm:$0xff]
      %v365 = vld [vmem:[#allocation2 + $0x22] sm:$0xff]
      %v366 = vld [vmem:[#allocation2 + $0x2a] sm:$0xff]
      %v367 = vld [vmem:[#allocation2 + $0x32] sm:$0xff]
      %v368 = vld [vmem:[#allocation2 + $0x3a] sm:$0xff]
      %v369 = vld [vmem:[#allocation2 + $0x42] sm:$0xff]
      %v370 = vld [vmem:[#allocation2 + $0x4a] sm:$0xff]
      %v371 = vld [vmem:[#allocation2 + $0x52] sm:$0xff]
      %v372 = vld [vmem:[#allocation2 + $0xb] sm:$0xff]
      %v373 = vld [vmem:[#allocation2 + $0x13] sm:$0xff]
      %v374 = vld [vmem:[#allocation2 + $0x1b] sm:$0xff]
      %v375 = vld [vmem:[#allocation2 + $0x23] sm:$0xff]
      %v376 = vld [vmem:[#allocation2 + $0x2b] sm:$0xff]
      %v377 = vld [vmem:[#allocation2 + $0x33] sm:$0xff]
      %v378 = vld [vmem:[#allocation2 + $0x3b] sm:$0xff]
      %v379 = vld [vmem:[#allocation2 + $0x43] sm:$0xff]
      %v380 = vld [vmem:[#allocation2 + $0x4b] sm:$0xff]
      %v381 = vld [vmem:[#allocation2 + $0x53] sm:$0xff]
      %v382 = vld [vmem:[#allocation2 + $0xc] sm:$0xff]
      %v383 = vld [vmem:[#allocation2 + $0x14] sm:$0xff]
      %v384 = vld [vmem:[#allocation2 + $0x1c] sm:$0xff]
      %v385 = vld [vmem:[#allocation2 + $0x24] sm:$0xff]
      %v386 = vld [vmem:[#allocation2 + $0x2c] sm:$0xff]
      %v387 = vld [vmem:[#allocation2 + $0x34] sm:$0xff]
      %v388 = vld [vmem:[#allocation2 + $0x3c] sm:$0xff]
      %v389 = vld [vmem:[#allocation2 + $0x44] sm:$0xff]
      %v390 = vld [vmem:[#allocation2 + $0x4c] sm:$0xff]
      %v391 = vld [vmem:[#allocation2 + $0x54] sm:$0xff]
      %v392 = vld [vmem:[#allocation2 + $0x5c] sm:$0xff]
      %v393 = vld [vmem:[#allocation2 + $0x15] sm:$0xff]
      %v394 = vld [vmem:[#allocation2 + $0x1d] sm:$0xff]
      %v395 = vld [vmem:[#allocation2 + $0x25] sm:$0xff]
      %v396 = vld [vmem:[#allocation2 + $0x2d] sm:$0xff]
      %v397 = vld [vmem:[#allocation2 + $0x35] sm:$0xff]
      %v398 = vld [vmem:[#allocation2 + $0x3d] sm:$0xff]
      %v399 = vld [vmem:[#allocation2 + $0x45] sm:$0xff]
      %v400 = vld [vmem:[#allocation2 + $0x4d] sm:$0xff]
      %v401 = vld [vmem:[#allocation2 + $0x55] sm:$0xff]
      %v402 = vld [vmem:[#allocation2 + $0x5d] sm:$0xff]
      %v403 = vld [vmem:[#allocation2 + $0x16] sm:$0xff]
      %v404 = vld [vmem:[#allocation2 + $0x1e] sm:$0xff]
      %v405 = vld [vmem:[#allocation2 + $0x26] sm:$0xff]
      %v406 = vld [vmem:[#allocation2 + $0x2e] sm:$0xff]
      %v407 = vld [vmem:[#allocation2 + $0x36] sm:$0xff]
      %v408 = vld [vmem:[#allocation2 + $0x3e] sm:$0xff]
      %v409 = vld [vmem:[#allocation2 + $0x46] sm:$0xff]
      %v410 = vld [vmem:[#allocation2 + $0x4e] sm:$0xff]
      %v411 = vld [vmem:[#allocation2 + $0x56] sm:$0xff]
      %v412 = vld [vmem:[#allocation2 + $0x5e] sm:$0xff]
      %423 = vrot.lane.b32.xlu0 %v351, 4
      %v424 = vpop.permute.xlu0 %423
      %425 = vrot.lane.b32.xlu0 %v352, 4
      %v426 = vpop.permute.xlu0 %425
      %427 = vrot.lane.b32.xlu0 %v353, 4
      %v428 = vpop.permute.xlu0 %427
      %429 = vrot.lane.b32.xlu0 %v354, 4
      %v430 = vpop.permute.xlu0 %429
      %431 = vrot.lane.b32.xlu0 %v355, 4
      %v432 = vpop.permute.xlu0 %431
      %433 = vrot.lane.b32.xlu0 %v356, 4
      %v434 = vpop.permute.xlu0 %433
      %435 = vrot.lane.b32.xlu0 %v357, 4
      %v436 = vpop.permute.xlu0 %435
      %437 = vrot.lane.b32.xlu0 %v358, 4
      %v438 = vpop.permute.xlu0 %437
      %439 = vrot.lane.b32.xlu0 %v359, 4
      %v440 = vpop.permute.xlu0 %439
      %441 = vrot.lane.b32.xlu0 %v360, 4
      %v442 = vpop.permute.xlu0 %441
      %463 = vrot.lane.b32.xlu0 %v361, 8
      %v464 = vpop.permute.xlu0 %463
      %465 = vrot.lane.b32.xlu0 %v362, 8
      %v466 = vpop.permute.xlu0 %465
      %467 = vrot.lane.b32.xlu0 %v363, 8
      %v468 = vpop.permute.xlu0 %467
      %469 = vrot.lane.b32.xlu0 %v364, 8
      %v470 = vpop.permute.xlu0 %469
      %471 = vrot.lane.b32.xlu0 %v365, 8
      %v472 = vpop.permute.xlu0 %471
      %473 = vrot.lane.b32.xlu0 %v366, 8
      %v474 = vpop.permute.xlu0 %473
      %475 = vrot.lane.b32.xlu0 %v367, 8
      %v476 = vpop.permute.xlu0 %475
      %477 = vrot.lane.b32.xlu0 %v368, 8
      %v478 = vpop.permute.xlu0 %477
      %479 = vrot.lane.b32.xlu0 %v369, 8
      %v480 = vpop.permute.xlu0 %479
      %481 = vrot.lane.b32.xlu0 %v370, 8
      %v482 = vpop.permute.xlu0 %481
      %494 = vrot.lane.b32.xlu0 %v362, 12
      %v495 = vpop.permute.xlu0 %494
      %496 = vrot.lane.b32.xlu0 %v363, 12
      %v497 = vpop.permute.xlu0 %496
      %498 = vrot.lane.b32.xlu0 %v364, 12
      %v499 = vpop.permute.xlu0 %498
      %500 = vrot.lane.b32.xlu0 %v365, 12
      %v501 = vpop.permute.xlu0 %500
      %502 = vrot.lane.b32.xlu0 %v366, 12
      %v503 = vpop.permute.xlu0 %502
      %504 = vrot.lane.b32.xlu0 %v367, 12
      %v505 = vpop.permute.xlu0 %504
      %506 = vrot.lane.b32.xlu0 %v368, 12
      %v507 = vpop.permute.xlu0 %506
      %508 = vrot.lane.b32.xlu0 %v369, 12
      %v509 = vpop.permute.xlu0 %508
      %510 = vrot.lane.b32.xlu0 %v370, 12
      %v511 = vpop.permute.xlu0 %510
      %512 = vrot.lane.b32.xlu0 %v371, 12
      %v513 = vpop.permute.xlu0 %512
      %534 = vrot.lane.b32.xlu0 %v372, 16
      %v535 = vpop.permute.xlu0 %534
      %536 = vrot.lane.b32.xlu0 %v373, 16
      %v537 = vpop.permute.xlu0 %536
      %538 = vrot.lane.b32.xlu0 %v374, 16
      %v539 = vpop.permute.xlu0 %538
      %540 = vrot.lane.b32.xlu0 %v375, 16
      %v541 = vpop.permute.xlu0 %540
      %542 = vrot.lane.b32.xlu0 %v376, 16
      %v543 = vpop.permute.xlu0 %542
      %544 = vrot.lane.b32.xlu0 %v377, 16
      %v545 = vpop.permute.xlu0 %544
      %546 = vrot.lane.b32.xlu0 %v378, 16
      %v547 = vpop.permute.xlu0 %546
      %548 = vrot.lane.b32.xlu0 %v379, 16
      %v549 = vpop.permute.xlu0 %548
      %550 = vrot.lane.b32.xlu0 %v380, 16
      %v551 = vpop.permute.xlu0 %550
      %552 = vrot.lane.b32.xlu0 %v381, 16
      %v553 = vpop.permute.xlu0 %552
      %574 = vrot.lane.b32.xlu0 %v382, 20
      %v575 = vpop.permute.xlu0 %574
      %576 = vrot.lane.b32.xlu0 %v383, 20
      %v577 = vpop.permute.xlu0 %576
      %578 = vrot.lane.b32.xlu0 %v384, 20
      %v579 = vpop.permute.xlu0 %578
      %580 = vrot.lane.b32.xlu0 %v385, 20
      %v581 = vpop.permute.xlu0 %580
      %582 = vrot.lane.b32.xlu0 %v386, 20
      %v583 = vpop.permute.xlu0 %582
      %584 = vrot.lane.b32.xlu0 %v387, 20
      %v585 = vpop.permute.xlu0 %584
      %586 = vrot.lane.b32.xlu0 %v388, 20
      %v587 = vpop.permute.xlu0 %586
      %588 = vrot.lane.b32.xlu0 %v389, 20
      %v589 = vpop.permute.xlu0 %588
      %590 = vrot.lane.b32.xlu0 %v390, 20
      %v591 = vpop.permute.xlu0 %590
      %592 = vrot.lane.b32.xlu0 %v391, 20
      %v593 = vpop.permute.xlu0 %592
      %605 = vrot.lane.b32.xlu0 %v383, 24
      %v606 = vpop.permute.xlu0 %605
      %607 = vrot.lane.b32.xlu0 %v384, 24
      %v608 = vpop.permute.xlu0 %607
      %609 = vrot.lane.b32.xlu0 %v385, 24
      %v610 = vpop.permute.xlu0 %609
      %611 = vrot.lane.b32.xlu0 %v386, 24
      %v612 = vpop.permute.xlu0 %611
      %613 = vrot.lane.b32.xlu0 %v387, 24
      %v614 = vpop.permute.xlu0 %613
      %615 = vrot.lane.b32.xlu0 %v388, 24
      %v616 = vpop.permute.xlu0 %615
      %617 = vrot.lane.b32.xlu0 %v389, 24
      %v618 = vpop.permute.xlu0 %617
      %619 = vrot.lane.b32.xlu0 %v390, 24
      %v620 = vpop.permute.xlu0 %619
      %621 = vrot.lane.b32.xlu0 %v391, 24
      %v622 = vpop.permute.xlu0 %621
      %623 = vrot.lane.b32.xlu0 %v392, 24
      %v624 = vpop.permute.xlu0 %623
      %645 = vrot.lane.b32.xlu0 %v393, 28
      %v646 = vpop.permute.xlu0 %645
      %647 = vrot.lane.b32.xlu0 %v394, 28
      %v648 = vpop.permute.xlu0 %647
      %649 = vrot.lane.b32.xlu0 %v395, 28
      %v650 = vpop.permute.xlu0 %649
      %651 = vrot.lane.b32.xlu0 %v396, 28
      %v652 = vpop.permute.xlu0 %651
      %653 = vrot.lane.b32.xlu0 %v397, 28
      %v654 = vpop.permute.xlu0 %653
      %655 = vrot.lane.b32.xlu0 %v398, 28
      %v656 = vpop.permute.xlu0 %655
      %657 = vrot.lane.b32.xlu0 %v399, 28
      %v658 = vpop.permute.xlu0 %657
      %659 = vrot.lane.b32.xlu0 %v400, 28
      %v660 = vpop.permute.xlu0 %659
      %661 = vrot.lane.b32.xlu0 %v401, 28
      %v662 = vpop.permute.xlu0 %661
      %663 = vrot.lane.b32.xlu0 %v402, 28
      %v664 = vpop.permute.xlu0 %663
      %685 = vrot.lane.b32.xlu0 %v403, 32
      %v686 = vpop.permute.xlu0 %685
      %687 = vrot.lane.b32.xlu0 %v404, 32
      %v688 = vpop.permute.xlu0 %687
      %689 = vrot.lane.b32.xlu0 %v405, 32
      %v690 = vpop.permute.xlu0 %689
      %691 = vrot.lane.b32.xlu0 %v406, 32
      %v692 = vpop.permute.xlu0 %691
      %693 = vrot.lane.b32.xlu0 %v407, 32
      %v694 = vpop.permute.xlu0 %693
      %695 = vrot.lane.b32.xlu0 %v408, 32
      %v696 = vpop.permute.xlu0 %695
      %697 = vrot.lane.b32.xlu0 %v409, 32
      %v698 = vpop.permute.xlu0 %697
      %699 = vrot.lane.b32.xlu0 %v410, 32
      %v700 = vpop.permute.xlu0 %699
      %701 = vrot.lane.b32.xlu0 %v411, 32
      %v702 = vpop.permute.xlu0 %701
      %703 = vrot.lane.b32.xlu0 %v412, 32
      %v704 = vpop.permute.xlu0 %703
      %v715 = vsel %vm325, %v341, %v424
      %v716 = vsel %vm325, %v342, %v426
      %v717 = vsel %vm325, %v343, %v428
      %v718 = vsel %vm325, %v344, %v430
      %v719 = vsel %vm325, %v345, %v432
      %v720 = vsel %vm325, %v346, %v434
      %v721 = vsel %vm325, %v347, %v436
      %v722 = vsel %vm325, %v348, %v438
      %v723 = vsel %vm325, %v349, %v440
      %v724 = vsel %vm325, %v350, %v442
      %vm725 = vcmask 64512
      %v726 = vsel %vm725, %v715, %v464
      %v727 = vsel %vm725, %v716, %v466
      %v728 = vsel %vm725, %v717, %v468
      %v729 = vsel %vm725, %v718, %v470
      %v730 = vsel %vm725, %v719, %v472
      %v731 = vsel %vm725, %v720, %v474
      %v732 = vsel %vm725, %v721, %v476
      %v733 = vsel %vm725, %v722, %v478
      %v734 = vsel %vm725, %v723, %v480
      %v735 = vsel %vm725, %v724, %v482
      %vm736 = vcmask 97280
      %v737 = vsel %vm736, %v726, %v495
      %v738 = vsel %vm736, %v727, %v497
      %v739 = vsel %vm736, %v728, %v499
      %v740 = vsel %vm736, %v729, %v501
      %v741 = vsel %vm736, %v730, %v503
      %v742 = vsel %vm736, %v731, %v505
      %v743 = vsel %vm736, %v732, %v507
      %v744 = vsel %vm736, %v733, %v509
      %v745 = vsel %vm736, %v734, %v511
      %v746 = vsel %vm736, %v735, %v513
      %vm747 = vcmask 130048
      %v748 = vsel %vm747, %v737, %v535
      %v749 = vsel %vm747, %v738, %v537
      %v750 = vsel %vm747, %v739, %v539
      %v751 = vsel %vm747, %v740, %v541
      %v752 = vsel %vm747, %v741, %v543
      %v753 = vsel %vm747, %v742, %v545
      %v754 = vsel %vm747, %v743, %v547
      %v755 = vsel %vm747, %v744, %v549
      %v756 = vsel %vm747, %v745, %v551
      %v757 = vsel %vm747, %v746, %v553
      %vm758 = vcmask 162816
      %v759 = vsel %vm758, %v748, %v575
      %v760 = vsel %vm758, %v749, %v577
      %v761 = vsel %vm758, %v750, %v579
      %v762 = vsel %vm758, %v751, %v581
      %v763 = vsel %vm758, %v752, %v583
      %v764 = vsel %vm758, %v753, %v585
      %v765 = vsel %vm758, %v754, %v587
      %v766 = vsel %vm758, %v755, %v589
      %v767 = vsel %vm758, %v756, %v591
      %v768 = vsel %vm758, %v757, %v593
      %vm769 = vcmask 195584
      %v770 = vsel %vm769, %v759, %v606
      %v771 = vsel %vm769, %v760, %v608
      %v772 = vsel %vm769, %v761, %v610
      %v773 = vsel %vm769, %v762, %v612
      %v774 = vsel %vm769, %v763, %v614
      %v775 = vsel %vm769, %v764, %v616
      %v776 = vsel %vm769, %v765, %v618
      %v777 = vsel %vm769, %v766, %v620
      %v778 = vsel %vm769, %v767, %v622
      %v779 = vsel %vm769, %v768, %v624
      %vm780 = vcmask 228352
      %v781 = vsel %vm780, %v770, %v646
      %v782 = vsel %vm780, %v771, %v648
      %v783 = vsel %vm780, %v772, %v650
      %v784 = vsel %vm780, %v773, %v652
      %v785 = vsel %vm780, %v774, %v654
      %v786 = vsel %vm780, %v775, %v656
      %v787 = vsel %vm780, %v776, %v658
      %v788 = vsel %vm780, %v777, %v660
      %v789 = vsel %vm780, %v778, %v662
      %v790 = vsel %vm780, %v779, %v664
      %vm791 = vcmask 261120
      %v792 = vsel %vm791, %v781, %v686
      %v793 = vsel %vm791, %v782, %v688
      %v794 = vsel %vm791, %v783, %v690
      %v795 = vsel %vm791, %v784, %v692
      %v796 = vsel %vm791, %v785, %v694
      %v797 = vsel %vm791, %v786, %v696
      %v798 = vsel %vm791, %v787, %v698
      %v799 = vsel %vm791, %v788, %v700
      %v800 = vsel %vm791, %v789, %v702
      %v801 = vsel %vm791, %v790, %v704
      %v802 = vld [vmem:[%s1] sm:$0xff]
      %v803 = vld [vmem:[%s1 + $0x8] sm:$0xff]
      %v804 = vld [vmem:[%s1 + $0x10] sm:$0xff]
      %v805 = vld [vmem:[%s1 + $0x18] sm:$0xff]
      %v806 = vld [vmem:[%s1 + $0x20] sm:$0xf]
      %vm807 = vcmask 293888
      %v809 = vsel %vm807, %v792, 0
      %v812 = vsel %vm807, %v793, 0
      %v815 = vsel %vm807, %v794, 0
      %v818 = vsel %vm807, %v795, 0
      %v821 = vsel %vm807, %v796, 0
      %v824 = vsel %vm807, %v797, 0
      %v827 = vsel %vm807, %v798, 0
      %v830 = vsel %vm807, %v799, 0
      %v833 = vsel %vm807, %v800, 0
      %v836 = vsel %vm807, %v801, 0
      %vm838 = vcmask 1043456
      %v840 = vsel %vm838, %v806, 0
      %842 = vmatprep.subr.mxu0 0.0
      %843 = vmatpush1.msra.mxu0 %v802
      %844 = vmatprep.subr.mxu0 0.0
      %845 = vmatpush1.msra.mxu0 %v803
      %846 = vmatprep.subr.mxu0 0.0
      %847 = vmatpush1.msra.mxu0 %v804
      %848 = vmatprep.subr.mxu0 0.0
      %849 = vmatpush1.msra.mxu0 %v805
      %850 = vmatprep.subr.mxu0 0.0
      %851 = vmatpush1.msra.mxu0 %v840
      %852 = vmatprep.subr.mxu0 0.0
      %853 = vmatpush1.msra.mxu0 0.0
      %854 = vmatprep.subr.mxu0 0.0
      %855 = vmatpush1.msra.mxu0 0.0
      %856 = vmatprep.subr.mxu0 0.0
      %857 = vmatpush1.msra.mxu0 0.0
      %858 = vmatprep.subr.mxu0 0.0
      %859 = vmatpush1.msra.mxu0 0.0
      %860 = vmatprep.subr.mxu0 0.0
      %861 = vmatpush1.msra.mxu0 0.0
      %862 = vmatprep.subr.mxu0 0.0
      %863 = vmatpush1.msra.mxu0 0.0
      %864 = vmatprep.subr.mxu0 0.0
      %865 = vmatpush1.msra.mxu0 0.0
      %866 = vmatprep.subr.mxu0 0.0
      %867 = vmatpush1.msra.mxu0 0.0
      %868 = vmatprep.subr.mxu0 0.0
      %869 = vmatpush1.msra.mxu0 0.0
      %870 = vmatprep.subr.mxu0 0.0
      %871 = vmatpush1.msra.mxu0 0.0
      %872 = vmatprep.subr.mxu0 0.0
      %873 = vmatpush1.msra.mxu0 0.0
      %874 = vmatprep.subr.mxu0 0.0
      %875 = vmatpush1.msra.mxu0 0.0
      %876 = vmatprep.subr.mxu0 0.0
      %877 = vmatpush1.msra.mxu0 0.0
      %878 = vmatprep.subr.mxu0 0.0
      %879 = vmatpush1.msra.mxu0 0.0
      %880 = vmatprep.subr.mxu0 0.0
      %881 = vmatpush1.msra.mxu0 0.0
      %882 = vmatprep.subr.mxu0 0.0
      %883 = vmatpush1.msra.mxu0 0.0
      %884 = vmatprep.subr.mxu0 0.0
      %885 = vmatpush1.msra.mxu0 0.0
      %886 = vmatprep.subr.mxu0 0.0
      %887 = vmatpush1.msra.mxu0 0.0
      %888 = vmatprep.subr.mxu0 0.0
      %889 = vmatpush1.msra.mxu0 0.0
      %890 = vmatprep.subr.mxu0 0.0
      %891 = vmatpush1.msra.mxu0 0.0
      %892 = vmatprep.subr.mxu0 0.0
      %893 = vmatpush1.msra.mxu0 0.0
      %894 = vmatprep.subr.mxu0 0.0
      %895 = vmatpush1.msra.mxu0 0.0
      %896 = vmatprep.subr.mxu0 0.0
      %897 = vmatpush1.msra.mxu0 0.0
      %898 = vmatprep.subr.mxu0 0.0
      %899 = vmatpush1.msra.mxu0 0.0
      %900 = vmatprep.subr.mxu0 0.0
      %901 = vmatpush1.msra.mxu0 0.0
      %902 = vmatprep.subr.mxu0 0.0
      %903 = vmatpush1.msra.mxu0 0.0
      %904 = vmatprep.subr.mxu0 0.0
      %905 = vmatpush1.msra.mxu0 0.0
      %906 = vmatprep.mubr.f32.mxu0 0.0
      %907 = vmatmul.mubr.f32.gmra.mrb[0].mxu0 %v809
      %v908 = vpop.f32.mrb[0].mxu0
      %v909 = vadd.f32 0.0, %v908
      %v910 = vpop.f32.mrb[0].mxu0
      %911 = vmatprep.mubr.f32.mxu0 0.0
      %912 = vmatmul.mubr.f32.gmra.mrb[0].mxu0 %v812
      %v913 = vpop.f32.mrb[0].mxu0
      %v914 = vadd.f32 0.0, %v913
      %v915 = vpop.f32.mrb[0].mxu0
      %916 = vmatprep.mubr.f32.mxu0 0.0
      %917 = vmatmul.mubr.f32.gmra.mrb[0].mxu0 %v815
      %v918 = vpop.f32.mrb[0].mxu0
      %v919 = vadd.f32 0.0, %v918
      %v920 = vpop.f32.mrb[0].mxu0
      %921 = vmatprep.mubr.f32.mxu0 0.0
      %922 = vmatmul.mubr.f32.gmra.mrb[0].mxu0 %v818
      %v923 = vpop.f32.mrb[0].mxu0
      %v924 = vadd.f32 0.0, %v923
      %v925 = vpop.f32.mrb[0].mxu0
      %926 = vmatprep.mubr.f32.mxu0 0.0
      %927 = vmatmul.mubr.f32.gmra.mrb[0].mxu0 %v821
      %v928 = vpop.f32.mrb[0].mxu0
      %v929 = vadd.f32 0.0, %v928
      %v930 = vpop.f32.mrb[0].mxu0
      %931 = vmatprep.mubr.f32.mxu0 0.0
      %932 = vmatmul.mubr.f32.gmra.mrb[0].mxu0 %v824
      %v933 = vpop.f32.mrb[0].mxu0
      %v934 = vadd.f32 0.0, %v933
      %v935 = vpop.f32.mrb[0].mxu0
      %936 = vmatprep.mubr.f32.mxu0 0.0
      %937 = vmatmul.mubr.f32.gmra.mrb[0].mxu0 %v827
      %v938 = vpop.f32.mrb[0].mxu0
      %v939 = vadd.f32 0.0, %v938
      %v940 = vpop.f32.mrb[0].mxu0
      %941 = vmatprep.mubr.f32.mxu0 0.0
      %942 = vmatmul.mubr.f32.gmra.mrb[0].mxu0 %v830
      %v943 = vpop.f32.mrb[0].mxu0
      %v944 = vadd.f32 0.0, %v943
      %v945 = vpop.f32.mrb[0].mxu0
      %946 = vmatprep.mubr.f32.mxu0 0.0
      %947 = vmatmul.mubr.f32.gmra.mrb[0].mxu0 %v833
      %v948 = vpop.f32.mrb[0].mxu0
      %v949 = vadd.f32 0.0, %v948
      %v950 = vpop.f32.mrb[0].mxu0
      %951 = vmatprep.mubr.f32.mxu0 0.0
      %952 = vmatmul.mubr.f32.gmra.mrb[0].mxu0 %v836
      %v953 = vpop.f32.mrb[0].mxu0
      %v954 = vadd.f32 0.0, %v953
      %v955 = vpop.f32.mrb[0].mxu0
      %956 = vdwg.mxu0
      %957 = vst.msk [vmem:[%s208] sm:$0xff] %vm725, %v909
      %958 = vst.msk [vmem:[%s208 + $0x8] sm:$0xff] %vm725, %v914
      %959 = vst.msk [vmem:[%s208 + $0x10] sm:$0xff] %vm725, %v919
      %960 = vst.msk [vmem:[%s208 + $0x18] sm:$0xff] %vm725, %v924
      %961 = vst.msk [vmem:[%s208 + $0x20] sm:$0xff] %vm725, %v929
      %962 = vst.msk [vmem:[%s208 + $0x28] sm:$0xff] %vm725, %v934
      %963 = vst.msk [vmem:[%s208 + $0x30] sm:$0xff] %vm725, %v939
      %964 = vst.msk [vmem:[%s208 + $0x38] sm:$0xff] %vm725, %v944
      %965 = vst.msk [vmem:[%s208 + $0x40] sm:$0xff] %vm725, %v949
      %966 = vst.msk [vmem:[%s208 + $0x48] sm:$0xff] %vm725, %v954
      %v967 = vlaneseq
      %v968 = vand.u32 %v967, 127
      %vm969 = vcmp.lt.s32.totalorder %v968, 0
      %v970 = vsub.s32 0, %v968
      %v971 = vsel %vm969, %v970, %v968
      %v972 = vmul.u32.u64.compose %v971, 3435973837
      %v973 = vextract.low.u32 %v972
      %v974 = vextract.high.u32 %v972
      %v975 = vshrl.u32 %v974, 3
      %v976 = vmul.u32 %v975, 10
      %v977 = vsub.s32 %v971, %v976
      %v978 = vsub.s32 0, %v977
      %v979 = vsel %vm969, %v978, %v977
      %vm980 = vcmp.ne.s32.totalorder %v979, 0
      %vm981 = vcmp.lt.s32.totalorder %v979, 0
      %vm982 = vmand %vm981, %vm980
      %v983 = vadd.s32 %v979, 10
      %v984 = vsel %vm982, %v983, %v979
      %vm985 = vcmp.lt.s32.totalorder %v984, 8
      %v986 = vsel %vm985, 1, 0
      %v987 = vcvt.s32.f32 %v986
      %vm988 = vcmask 654336
      %v990 = vsel %vm988, %v987, 0
      %992 = vmatprep.subr.mxu0 0.0
      %993 = vmatpush1.msra.mxu0 %v909
      %994 = vmatprep.subr.mxu0 0.0
      %995 = vmatpush1.msra.mxu0 %v914
      %996 = vmatprep.subr.mxu0 0.0
      %997 = vmatpush1.msra.mxu0 %v919
      %998 = vmatprep.subr.mxu0 0.0
      %999 = vmatpush1.msra.mxu0 %v924
      %1000 = vmatprep.subr.mxu0 0.0
      %1001 = vmatpush1.msra.mxu0 %v929
      %1002 = vmatprep.subr.mxu0 0.0
      %1003 = vmatpush1.msra.mxu0 %v934
      %1004 = vmatprep.subr.mxu0 0.0
      %1005 = vmatpush1.msra.mxu0 %v939
      %1006 = vmatprep.subr.mxu0 0.0
      %1007 = vmatpush1.msra.mxu0 %v944
      %1008 = vmatprep.subr.mxu0 0.0
      %1009 = vmatpush1.msra.mxu0 %v949
      %1010 = vmatprep.subr.mxu0 0.0
      %1011 = vmatpush1.msra.mxu0 %v954
      %1012 = vmatprep.subr.mxu0 0.0
      %1013 = vmatpush1.msra.mxu0 0.0
      %1014 = vmatprep.subr.mxu0 0.0
      %1015 = vmatpush1.msra.mxu0 0.0
      %1016 = vmatprep.subr.mxu0 0.0
      %1017 = vmatpush1.msra.mxu0 0.0
      %1018 = vmatprep.subr.mxu0 0.0
      %1019 = vmatpush1.msra.mxu0 0.0
      %1020 = vmatprep.subr.mxu0 0.0
      %1021 = vmatpush1.msra.mxu0 0.0
      %1022 = vmatprep.subr.mxu0 0.0
      %1023 = vmatpush1.msra.mxu0 0.0
      %1024 = vmatprep.subr.mxu0 0.0
      %1025 = vmatpush1.msra.mxu0 0.0
      %1026 = vmatprep.subr.mxu0 0.0
      %1027 = vmatpush1.msra.mxu0 0.0
      %1028 = vmatprep.subr.mxu0 0.0
      %1029 = vmatpush1.msra.mxu0 0.0
      %1030 = vmatprep.subr.mxu0 0.0
      %1031 = vmatpush1.msra.mxu0 0.0
      %1032 = vmatprep.subr.mxu0 0.0
      %1033 = vmatpush1.msra.mxu0 0.0
      %1034 = vmatprep.subr.mxu0 0.0
      %1035 = vmatpush1.msra.mxu0 0.0
      %1036 = vmatprep.subr.mxu0 0.0
      %1037 = vmatpush1.msra.mxu0 0.0
      %1038 = vmatprep.subr.mxu0 0.0
      %1039 = vmatpush1.msra.mxu0 0.0
      %1040 = vmatprep.subr.mxu0 0.0
      %1041 = vmatpush1.msra.mxu0 0.0
      %1042 = vmatprep.subr.mxu0 0.0
      %1043 = vmatpush1.msra.mxu0 0.0
      %1044 = vmatprep.subr.mxu0 0.0
      %1045 = vmatpush1.msra.mxu0 0.0
      %1046 = vmatprep.subr.mxu0 0.0
      %1047 = vmatpush1.msra.mxu0 0.0
      %1048 = vmatprep.subr.mxu0 0.0
      %1049 = vmatpush1.msra.mxu0 0.0
      %1050 = vmatprep.subr.mxu0 0.0
      %1051 = vmatpush1.msra.mxu0 0.0
      %1052 = vmatprep.subr.mxu0 0.0
      %1053 = vmatpush1.msra.mxu0 0.0
      %1054 = vmatprep.subr.mxu0 0.0
      %1055 = vmatpush1.msra.mxu0 0.0
      %1056 = vmatprep.mubr.f32.mxu0 0.0
      %1057 = vmatmul.mubr.f32.gmra.mrb[0].mxu0 %v990
      %v1058 = vpop.f32.mrb[0].mxu0
      %v1059 = vadd.f32 0.0, %v1058
      %v1060 = vpop.f32.mrb[0].mxu0
      %1061 = vdwg.mxu0
      %vm1062 = vcmask 57344
      %1063 = vst.msk [vmem:[%s211] sm:$0x1] %vm1062, %v1059
      %v1064 = vmul.f32 %v909, %v909
      %v1065 = vmul.f32 %v914, %v914
      %v1066 = vmul.f32 %v919, %v919
      %v1067 = vmul.f32 %v924, %v924
      %v1068 = vmul.f32 %v929, %v929
      %v1069 = vmul.f32 %v934, %v934
      %v1070 = vmul.f32 %v939, %v939
      %v1071 = vmul.f32 %v944, %v944
      %v1072 = vmul.f32 %v949, %v949
      %v1073 = vmul.f32 %v954, %v954
      %1074 = vmatprep.subr.mxu0 0.0
      %1075 = vmatpush1.msra.mxu0 %v1064
      %1076 = vmatprep.subr.mxu0 0.0
      %1077 = vmatpush1.msra.mxu0 %v1065
      %1078 = vmatprep.subr.mxu0 0.0
      %1079 = vmatpush1.msra.mxu0 %v1066
      %1080 = vmatprep.subr.mxu0 0.0
      %1081 = vmatpush1.msra.mxu0 %v1067
      %1082 = vmatprep.subr.mxu0 0.0
      %1083 = vmatpush1.msra.mxu0 %v1068
      %1084 = vmatprep.subr.mxu0 0.0
      %1085 = vmatpush1.msra.mxu0 %v1069
      %1086 = vmatprep.subr.mxu0 0.0
      %1087 = vmatpush1.msra.mxu0 %v1070
      %1088 = vmatprep.subr.mxu0 0.0
      %1089 = vmatpush1.msra.mxu0 %v1071
      %1090 = vmatprep.subr.mxu0 0.0
      %1091 = vmatpush1.msra.mxu0 %v1072
      %1092 = vmatprep.subr.mxu0 0.0
      %1093 = vmatpush1.msra.mxu0 %v1073
      %1094 = vmatprep.subr.mxu0 0.0
      %1095 = vmatpush1.msra.mxu0 0.0
      %1096 = vmatprep.subr.mxu0 0.0
      %1097 = vmatpush1.msra.mxu0 0.0
      %1098 = vmatprep.subr.mxu0 0.0
      %1099 = vmatpush1.msra.mxu0 0.0
      %1100 = vmatprep.subr.mxu0 0.0
      %1101 = vmatpush1.msra.mxu0 0.0
      %1102 = vmatprep.subr.mxu0 0.0
      %1103 = vmatpush1.msra.mxu0 0.0
      %1104 = vmatprep.subr.mxu0 0.0
      %1105 = vmatpush1.msra.mxu0 0.0
      %1106 = vmatprep.subr.mxu0 0.0
      %1107 = vmatpush1.msra.mxu0 0.0
      %1108 = vmatprep.subr.mxu0 0.0
      %1109 = vmatpush1.msra.mxu0 0.0
      %1110 = vmatprep.subr.mxu0 0.0
      %1111 = vmatpush1.msra.mxu0 0.0
      %1112 = vmatprep.subr.mxu0 0.0
      %1113 = vmatpush1.msra.mxu0 0.0
      %1114 = vmatprep.subr.mxu0 0.0
      %1115 = vmatpush1.msra.mxu0 0.0
      %1116 = vmatprep.subr.mxu0 0.0
      %1117 = vmatpush1.msra.mxu0 0.0
      %1118 = vmatprep.subr.mxu0 0.0
      %1119 = vmatpush1.msra.mxu0 0.0
      %1120 = vmatprep.subr.mxu0 0.0
      %1121 = vmatpush1.msra.mxu0 0.0
      %1122 = vmatprep.subr.mxu0 0.0
      %1123 = vmatpush1.msra.mxu0 0.0
      %1124 = vmatprep.subr.mxu0 0.0
      %1125 = vmatpush1.msra.mxu0 0.0
      %1126 = vmatprep.subr.mxu0 0.0
      %1127 = vmatpush1.msra.mxu0 0.0
      %1128 = vmatprep.subr.mxu0 0.0
      %1129 = vmatpush1.msra.mxu0 0.0
      %1130 = vmatprep.subr.mxu0 0.0
      %1131 = vmatpush1.msra.mxu0 0.0
      %1132 = vmatprep.subr.mxu0 0.0
      %1133 = vmatpush1.msra.mxu0 0.0
      %1134 = vmatprep.subr.mxu0 0.0
      %1135 = vmatpush1.msra.mxu0 0.0
      %1136 = vmatprep.subr.mxu0 0.0
      %1137 = vmatpush1.msra.mxu0 0.0
      %1138 = vmatprep.mubr.f32.mxu0 0.0
      %1139 = vmatmul.mubr.f32.gmra.mrb[0].mxu0 %v990
      %v1140 = vpop.f32.mrb[0].mxu0
      %v1141 = vadd.f32 0.0, %v1140
      %v1142 = vpop.f32.mrb[0].mxu0
      %1143 = vdwg.mxu0
      %1144 = vst.msk [vmem:[%s214] sm:$0x1] %vm1062, %v1141
      %p1145 = scmp.lt.s32.totalorder %s16, 1
      %s1146 = scalar_select %p1145, %s16, 1
      %s1147 = smul.addr %s1146, 10
      %s1148 = smul.addr %s1147, 8
      %s1149 = scalar_lea.vmem %s2, %s1148
      %p1150 = scmp.lt.s32.totalorder %s16, 1
      %s1151 = scalar_select %p1150, %s16, 1
      %s1152 = scalar_lea.vmem %s3, %s1151
      %p1153 = scmp.lt.s32.totalorder %s16, 1
      %s1154 = scalar_select %p1153, %s16, 1
      %s1155 = scalar_lea.vmem %s4, %s1154
      // Predicated region
      $region29: #{down_forward.3} parent=27 // pred_check
        %p1156 = pneg %p81
      $region30: #{down_forward.3} parent=27 // pred_check_branch
        %1158 = sbr.rel (%p1156) target = $region32
      $region31: #{down_forward.3} parent=27 // pred_region
        _
      $region32: #{down_forward.3} parent=27 // pred_fallthru
        _
      // Predicated region
      $region33: #{down_forward.3} parent=27 // pred_check
        %p1159 = pneg %p107
      $region34: #{down_forward.3} parent=27 // pred_check_branch
        %1161 = sbr.rel (%p1159) target = $region36
      $region35: #{down_forward.3} parent=27 // pred_region
        _
      $region36: #{down_forward.3} parent=27 // pred_fallthru
        _
      // Predicated region
      $region37: #{down_forward.3} parent=27 // pred_check
        %p1162 = pneg %p133
      $region38: #{down_forward.3} parent=27 // pred_check_branch
        %1164 = sbr.rel (%p1162) target = $region40
      $region39: #{down_forward.3} parent=27 // pred_region
        _
      $region40: #{down_forward.3} parent=27 // pred_fallthru
        _
    $region28: #{down_forward.3} parent=5 // pred_fallthru
      _
    %p1165 = scmp.le.s32.totalorder 2, %s11
    // Predicated region
    $region41: #{down_forward.3} parent=5 // pred_check
      %p1166 = pneg %p1165
    $region42: #{down_forward.3} parent=5 // pred_check_branch
      %1168 = sbr.rel (%p1166) target = $region44
    $region43: #{down_forward.3} parent=5 // pred_region
      %s1169 = ssub.s32 %s11, 2
      // Predicated region
      $region45: #{down_forward.3} parent=43 // pred_check
        %p1170 = pneg %p87
      $region46: #{down_forward.3} parent=43 // pred_check_branch
        %1172 = sbr.rel (%p1170) target = $region48
      $region47: #{down_forward.3} parent=43 // pred_region
        %p1173 = scmp.lt.s32.totalorder %s17, 1
        %s1174 = scalar_select %p1173, %s17, 1
        %s1175 = smul.addr %s1174, 10
        %s1176 = smul.addr %s1175, 8
        %s1177 = scalar_lea.vmem %s2, %s1176
      $region48: #{down_forward.3} parent=43 // pred_fallthru
        _
      // Predicated region
      $region49: #{down_forward.3} parent=43 // pred_check
        %p1178 = pneg %p113
      $region50: #{down_forward.3} parent=43 // pred_check_branch
        %1180 = sbr.rel (%p1178) target = $region52
      $region51: #{down_forward.3} parent=43 // pred_region
        %p1181 = scmp.lt.s32.totalorder %s17, 1
        %s1182 = scalar_select %p1181, %s17, 1
        %s1183 = scalar_lea.vmem %s3, %s1182
      $region52: #{down_forward.3} parent=43 // pred_fallthru
        _
      // Predicated region
      $region53: #{down_forward.3} parent=43 // pred_check
        %p1184 = pneg %p139
      $region54: #{down_forward.3} parent=43 // pred_check_branch
        %1186 = sbr.rel (%p1184) target = $region56
      $region55: #{down_forward.3} parent=43 // pred_region
        %p1187 = scmp.lt.s32.totalorder %s17, 1
        %s1188 = scalar_select %p1187, %s17, 1
        %s1189 = scalar_lea.vmem %s4, %s1188
      $region56: #{down_forward.3} parent=43 // pred_fallthru
        _
    $region44: #{down_forward.3} parent=5 // pred_fallthru
      _
  $region6: #{down_forward.3} parent=0 // loop_footer
    %s15 = sadd.s32 1, %s11
  $region7: #{down_forward.3} parent=0 // loop_footer_branch
    %10 = sbr.rel target = $region3
  $region8: #{down_forward.3} parent=0 // loop_exit
    _

</llo_original>
